<compile_context>
chip_gen: v7x
topology: tpu7x:2x2x1
jax: 0.10.0
libtpu: 0.0.40
codegen_flags: <defaults>
</compile_context>

<pallas_src>
import numpy as np

import jax
import jax.numpy as jnp
from jax import lax
from jax.experimental import pallas as pl
from jax.experimental.pallas import tpu as pltpu


# ----------------------------------------------------------------------------
# Fused forward kernel (one image per grid step)
# ----------------------------------------------------------------------------
def _fused_forward_kernel(x_ref, band1_ref, b1t_ref, band2_ref, b2t_ref,
                          w1e_ref, fb1_ref, w2_ref, fb2_ref, w3_ref, fb3_ref,
                          w4_ref, fb4_ref, o_ref):
    f32, bf16 = jnp.float32, jnp.bfloat16

    # One image: rows = height (32), lanes = width*3 + channel (96).
    x = x_ref[0].astype(bf16)                                      # (32, 96)

    # ---- conv1 (5x5, 3->6) + bias + ReLU:  a1[oh, ow*6+co] -----------------
    pre1 = jnp.dot(x, band1_ref[0], preferred_element_type=f32)[0:28, :]
    for i in range(1, 5):
        yi = jnp.dot(x, band1_ref[i], preferred_element_type=f32)  # (32, 168)
        pre1 = pre1 + yi[i:i + 28, :]
    a1 = jnp.maximum(pre1 + b1t_ref[...], 0.0)                     # (28, 168)

    # ---- maxpool1 2x2: valid results at even rows / lanes 12*pw + ci -------
    r1 = jnp.maximum(a1[0:27, :], a1[1:28, :])                     # (27, 168)
    p1 = jnp.maximum(r1[:, 0:162], r1[:, 6:168])                   # (27, 162)

    # ---- conv2 (5x5, 6->16) + bias + ReLU (valid rows = even rows) ---------
    pre2 = jnp.dot(p1[0:19, :].astype(bf16), band2_ref[0],
                   preferred_element_type=f32)                     # (19, 160)
    for i in range(1, 5):
        pre2 = pre2 + jnp.dot(p1[2 * i:2 * i + 19, :].astype(bf16),
                              band2_ref[i], preferred_element_type=f32)
    a2 = jnp.maximum(pre2 + b2t_ref[...], 0.0)                     # (19, 160)

    # ---- maxpool2 2x2: valid results at rows 4*ph / lanes 32*pw + c --------
    r2 = jnp.maximum(a2[0:17, :], a2[2:19, :])                     # (17, 160)
    q = jnp.maximum(r2[:, 0:144], r2[:, 16:160])                   # (17, 144)

    # ---- FC head: relu(fc1) -> relu(fc2) -> relu(fc3) -> fc4 -> log_softmax
    h = jnp.dot(q[0:1, :].astype(bf16), w1e_ref[0],
                preferred_element_type=f32)
    for r in range(1, 5):
        h = h + jnp.dot(q[4 * r:4 * r + 1, :].astype(bf16), w1e_ref[r],
                        preferred_element_type=f32)
    h = jnp.maximum(h + fb1_ref[...], 0.0)                         # (1, 120)
    h = jnp.maximum(jnp.dot(h.astype(bf16), w2_ref[...],
                            preferred_element_type=f32) + fb2_ref[...], 0.0)
    h = jnp.maximum(jnp.dot(h.astype(bf16), w3_ref[...],
                            preferred_element_type=f32) + fb3_ref[...], 0.0)
    logits = (jnp.dot(h.astype(bf16), w4_ref[...],
                      preferred_element_type=f32) + fb4_ref[...])  # (1, 10)

    m = jnp.max(logits, axis=-1, keepdims=True)
    s = logits - m
    lse = jnp.log(jnp.sum(jnp.exp(s), axis=-1, keepdims=True))
    o_ref[0] = s - lse


# ----------------------------------------------------------------------------
# Host-side weight preprocessing (torch layouts -> band / expanded matrices)
# ----------------------------------------------------------------------------
def _conv_band_weights(w, in_pos, out_pos, stride_in, in_lanes):
    """Banded matmul weights for a VALID 1-D (width) conv at each height tap.

    w: (KH, KW, Cin, Cout).  Input lanes are pos*stride_in + ci (ci < Cin);
    output lanes are opos*Cout + co.  Returns (KH, in_lanes, out_pos*Cout).
    """
    KH, KW, Cin, Cout = w.shape
    j = np.arange(in_pos)[:, None] - np.arange(out_pos)[None, :]    # (P, Q)
    mask = jnp.asarray((j >= 0) & (j < KW), w.dtype)
    t = w[:, np.clip(j, 0, KW - 1)] * mask[None, :, :, None, None]  # (KH,P,Q,Cin,Cout)
    t = jnp.transpose(t, (0, 1, 3, 2, 4)).reshape(KH, in_pos, Cin, out_pos * Cout)
    band = jnp.zeros((KH, in_pos, stride_in, out_pos * Cout), w.dtype)
    band = band.at[:, :, :Cin, :].set(t)
    return band.reshape(KH, in_pos * stride_in, out_pos * Cout)[:, :in_lanes, :]


def _fc1_expanded(fc1_w):
    """fc1 (torch (120,400), flatten order c*25+h*5+w) -> per-row (5,144,120)
    weights reading pool2's uncompacted lane layout 32*pw + c."""
    wt = fc1_w.T.reshape(16, 5, 5, 120)                # [c, h, w, f]
    wt = jnp.transpose(wt, (1, 2, 0, 3))               # (5, 5, 16, 120)
    e = jnp.zeros((5, 5, 32, 120), wt.dtype)
    e = e.at[:, :, :16, :].set(wt)
    return e.reshape(5, 160, 120)[:, :144, :]


def _prepare_kernel_params(p):
    bf16, f32 = jnp.bfloat16, jnp.float32
    w1 = jnp.transpose(p["conv1_w"], (2, 3, 1, 0)).astype(f32)   # (5,5,3,6)
    w2 = jnp.transpose(p["conv2_w"], (2, 3, 1, 0)).astype(f32)   # (5,5,6,16)
    k = {}
    k["band1"] = _conv_band_weights(w1, 32, 28, 3, 96).astype(bf16)    # (5,96,168)
    k["b1t"] = jnp.tile(p["conv1_b"], 28).reshape(1, 168).astype(f32)
    k["band2"] = _conv_band_weights(w2, 14, 10, 12, 162).astype(bf16)  # (5,162,160)
    k["b2t"] = jnp.tile(p["conv2_b"], 10).reshape(1, 160).astype(f32)
    k["w1e"] = _fc1_expanded(p["fc1_w"].astype(f32)).astype(bf16)      # (5,144,120)
    k["fb1"] = p["fc1_b"].reshape(1, 120).astype(f32)
    k["w2"] = p["fc2_w"].T.astype(bf16)
    k["fb2"] = p["fc2_b"].reshape(1, 84).astype(f32)
    k["w3"] = p["fc3_w"].T.astype(bf16)
    k["fb3"] = p["fc3_b"].reshape(1, 20).astype(f32)
    k["w4"] = p["fc4_w"].T.astype(bf16)
    k["fb4"] = p["fc4_b"].reshape(1, 10).astype(f32)
    return k


# ----------------------------------------------------------------------------
# Forward wrapper
# ----------------------------------------------------------------------------
def cifar10_forward(x_nchw, params):
    N, C, H, W = x_nchw.shape
    assert (C, H, W) == (3, 32, 32)
    # NCHW -> rows = height, lanes = width*3 + channel.
    x = jnp.transpose(x_nchw, (0, 2, 3, 1)).reshape(N, 32, 96).astype(jnp.float32)
    k = _prepare_kernel_params(params)

    operands = [x, k["band1"], k["b1t"], k["band2"], k["b2t"],
                k["w1e"], k["fb1"], k["w2"], k["fb2"], k["w3"], k["fb3"],
                k["w4"], k["fb4"]]

    def rep(shape):                       # whole-array block, same for every step
        zeros = (0,) * len(shape)
        return pl.BlockSpec(shape, lambda n: zeros)

    in_specs = [pl.BlockSpec((1, 32, 96), lambda n: (n, 0, 0))]
    in_specs += [rep(op.shape) for op in operands[1:]]

    out = pl.pallas_call(
        _fused_forward_kernel,
        out_shape=jax.ShapeDtypeStruct((N, 1, 10), jnp.float32),
        grid_spec=pltpu.PrefetchScalarGridSpec(
            num_scalar_prefetch=0,
            grid=(N,),
            in_specs=in_specs,
            out_specs=pl.BlockSpec((1, 1, 10), lambda n: (n, 0, 0)),
        ),
        compiler_params=pltpu.CompilerParams(
            dimension_semantics=("parallel",)),
    )(*operands)
    return out.reshape(N, 10)


# ----------------------------------------------------------------------------
# Pure-JAX f32 reference (torch semantics) for validation
# ----------------------------------------------------------------------------
def cifar10_reference(x, p):
    dn = ("NCHW", "OIHW", "NCHW")

    def pool(y):
        return jnp.maximum(jnp.maximum(y[:, :, 0::2, 0::2], y[:, :, 0::2, 1::2]),
                           jnp.maximum(y[:, :, 1::2, 0::2], y[:, :, 1::2, 1::2]))

    y = lax.conv_general_dilated(x, p["conv1_w"], (1, 1), "VALID",
                                 dimension_numbers=dn)
    y = pool(jnp.maximum(y + p["conv1_b"][None, :, None, None], 0.0))
    y = lax.conv_general_dilated(y, p["conv2_w"], (1, 1), "VALID",
                                 dimension_numbers=dn)
    y = pool(jnp.maximum(y + p["conv2_b"][None, :, None, None], 0.0))
    f = y.reshape(y.shape[0], 400)                       # torch view(-1, 400)
    h = jnp.maximum(f @ p["fc1_w"].T + p["fc1_b"], 0.0)
    h = jnp.maximum(h @ p["fc2_w"].T + p["fc2_b"], 0.0)
    h = jnp.maximum(h @ p["fc3_w"].T + p["fc3_b"], 0.0)
    logits = h @ p["fc4_w"].T + p["fc4_b"]
    return jax.nn.log_softmax(logits, axis=-1)


# ----------------------------------------------------------------------------
# Deterministic synthetic parameters (torch layouts, torch-like uniform bounds)
# ----------------------------------------------------------------------------
def _uniform(key, shape, fan_in):
    bound = 1.0 / (fan_in ** 0.5)
    return jax.random.uniform(key, shape, jnp.float32, -bound, bound)


def init_params(key):
    ks = jax.random.split(key, 12)
    p = {}
    # torch layouts: conv (Cout, Cin, KH, KW); linear (out, in).
    p["conv1_w"] = _uniform(ks[0], (6, 3, 5, 5), 75)
    p["conv1_b"] = _uniform(ks[1], (6,), 75)
    p["conv2_w"] = _uniform(ks[2], (16, 6, 5, 5), 150)
    p["conv2_b"] = _uniform(ks[3], (16,), 150)
    p["fc1_w"] = _uniform(ks[4], (120, 400), 400)
    p["fc1_b"] = _uniform(ks[5], (120,), 400)
    p["fc2_w"] = _uniform(ks[6], (84, 120), 120)
    p["fc2_b"] = _uniform(ks[7], (84,), 120)
    p["fc3_w"] = _uniform(ks[8], (20, 84), 84)
    p["fc3_b"] = _uniform(ks[9], (20,), 84)
    p["fc4_w"] = _uniform(ks[10], (10, 20), 20)
    p["fc4_b"] = _uniform(ks[11], (10,), 20)
    return p


if __name__ == "__main__":
    key = jax.random.PRNGKey(0)
    k_x, k_p = jax.random.split(key)
    params = init_params(k_p)
    x = jax.random.normal(k_x, (2, 3, 32, 32), jnp.float32)

    out = jax.jit(cifar10_forward)(x, params)
    out = jax.block_until_ready(out)

    assert out.shape == (2, 10), out.shape
    # log_softmax rows must exponentiate-sum to 1.
    assert bool(jnp.allclose(jnp.sum(jnp.exp(out), axis=1), 1.0, atol=1e-3))
    # cross-check against the pure-JAX f32 reference (loose tol: bf16 MXU inputs).
    ref = cifar10_reference(x, params)
    assert bool(jnp.allclose(out, ref, atol=0.1)), float(jnp.max(jnp.abs(out - ref)))
    print("KERNEL_OK")
</pallas_src>

<mosaic_0001>
module attributes {stable_mosaic.version = 11 : i64} {
  func.func @_fused_forward_kernel(%arg0: i32, %arg1: memref<1x32x96xf32, #tpu.memory_space<vmem>>, %arg2: memref<5x96x168xbf16, #tpu.memory_space<vmem>>, %arg3: memref<1x168xf32, #tpu.memory_space<vmem>>, %arg4: memref<5x162x160xbf16, #tpu.memory_space<vmem>>, %arg5: memref<1x160xf32, #tpu.memory_space<vmem>>, %arg6: memref<5x144x120xbf16, #tpu.memory_space<vmem>>, %arg7: memref<1x120xf32, #tpu.memory_space<vmem>>, %arg8: memref<120x84xbf16, #tpu.memory_space<vmem>>, %arg9: memref<1x84xf32, #tpu.memory_space<vmem>>, %arg10: memref<84x20xbf16, #tpu.memory_space<vmem>>, %arg11: memref<1x20xf32, #tpu.memory_space<vmem>>, %arg12: memref<20x10xbf16, #tpu.memory_space<vmem>>, %arg13: memref<1x10xf32, #tpu.memory_space<vmem>>, %arg14: memref<1x1x10xf32, #tpu.memory_space<vmem>>) attributes {dimension_semantics = [#tpu.dimension_semantics<parallel>], iteration_bounds = array<i64: 2>, scalar_prefetch = 0 : i64, scratch_operands = 0 : i64, tpu.core_type = #tpu.core_type<tc>, window_params = [{transform_indices = @transform_0, window_bounds = array<i64: 1, 32, 96>}, {pipeline_mode = #tpu.pipeline_mode<synchronous>, transform_indices = @transform_1, window_bounds = array<i64: 5, 96, 168>}, {pipeline_mode = #tpu.pipeline_mode<synchronous>, transform_indices = @transform_2, window_bounds = array<i64: 1, 168>}, {pipeline_mode = #tpu.pipeline_mode<synchronous>, transform_indices = @transform_3, window_bounds = array<i64: 5, 162, 160>}, {pipeline_mode = #tpu.pipeline_mode<synchronous>, transform_indices = @transform_4, window_bounds = array<i64: 1, 160>}, {pipeline_mode = #tpu.pipeline_mode<synchronous>, transform_indices = @transform_5, window_bounds = array<i64: 5, 144, 120>}, {pipeline_mode = #tpu.pipeline_mode<synchronous>, transform_indices = @transform_6, window_bounds = array<i64: 1, 120>}, {pipeline_mode = #tpu.pipeline_mode<synchronous>, transform_indices = @transform_7, window_bounds = array<i64: 120, 84>}, {pipeline_mode = #tpu.pipeline_mode<synchronous>, transform_indices = @transform_8, window_bounds = array<i64: 1, 84>}, {pipeline_mode = #tpu.pipeline_mode<synchronous>, transform_indices = @transform_9, window_bounds = array<i64: 84, 20>}, {pipeline_mode = #tpu.pipeline_mode<synchronous>, transform_indices = @transform_10, window_bounds = array<i64: 1, 20>}, {pipeline_mode = #tpu.pipeline_mode<synchronous>, transform_indices = @transform_11, window_bounds = array<i64: 20, 10>}, {pipeline_mode = #tpu.pipeline_mode<synchronous>, transform_indices = @transform_12, window_bounds = array<i64: 1, 10>}, {transform_indices = @transform_13, window_bounds = array<i64: 1, 1, 10>}]} {
    %c0 = arith.constant 0 : index
    %c0_0 = arith.constant 0 : index
    %c0_1 = arith.constant 0 : index
    %0 = vector.load %arg1[%c0, %c0_0, %c0_1] : memref<1x32x96xf32, #tpu.memory_space<vmem>>, vector<1x32x96xf32>
    %1 = vector.shape_cast %0 : vector<1x32x96xf32> to vector<32x96xf32>
    %2 = arith.truncf %1 : vector<32x96xf32> to vector<32x96xbf16>
    %c0_2 = arith.constant 0 : index
    %c0_3 = arith.constant 0 : index
    %c0_4 = arith.constant 0 : index
    %3 = vector.load %arg2[%c0_2, %c0_3, %c0_4] : memref<5x96x168xbf16, #tpu.memory_space<vmem>>, vector<1x96x168xbf16>
    %4 = vector.shape_cast %3 : vector<1x96x168xbf16> to vector<96x168xbf16>
    %cst = arith.constant dense<0.000000e+00> : vector<32x168xf32>
    %5 = tpu.matmul %2, %4, %cst {dimension_numbers = #tpu.dot_dimension_numbers<[1], [0], [0], [1], [0, 0, 1, 1], [], []>} : vector<32x96xbf16>, vector<96x168xbf16>, vector<32x168xf32> -> vector<32x168xf32>
    %6 = vector.extract_strided_slice %5 {offsets = [0, 0], sizes = [28, 168], strides = [1, 1]} : vector<32x168xf32> to vector<28x168xf32>
    %c1 = arith.constant 1 : index
    %c0_5 = arith.constant 0 : index
    %c0_6 = arith.constant 0 : index
    %7 = vector.load %arg2[%c1, %c0_5, %c0_6] : memref<5x96x168xbf16, #tpu.memory_space<vmem>>, vector<1x96x168xbf16>
    %8 = vector.shape_cast %7 : vector<1x96x168xbf16> to vector<96x168xbf16>
    %cst_7 = arith.constant dense<0.000000e+00> : vector<32x168xf32>
    %9 = tpu.matmul %2, %8, %cst_7 {dimension_numbers = #tpu.dot_dimension_numbers<[1], [0], [0], [1], [0, 0, 1, 1], [], []>} : vector<32x96xbf16>, vector<96x168xbf16>, vector<32x168xf32> -> vector<32x168xf32>
    %10 = vector.extract_strided_slice %9 {offsets = [1, 0], sizes = [28, 168], strides = [1, 1]} : vector<32x168xf32> to vector<28x168xf32>
    %11 = arith.addf %6, %10 : vector<28x168xf32>
    %c2 = arith.constant 2 : index
    %c0_8 = arith.constant 0 : index
    %c0_9 = arith.constant 0 : index
    %12 = vector.load %arg2[%c2, %c0_8, %c0_9] : memref<5x96x168xbf16, #tpu.memory_space<vmem>>, vector<1x96x168xbf16>
    %13 = vector.shape_cast %12 : vector<1x96x168xbf16> to vector<96x168xbf16>
    %cst_10 = arith.constant dense<0.000000e+00> : vector<32x168xf32>
    %14 = tpu.matmul %2, %13, %cst_10 {dimension_numbers = #tpu.dot_dimension_numbers<[1], [0], [0], [1], [0, 0, 1, 1], [], []>} : vector<32x96xbf16>, vector<96x168xbf16>, vector<32x168xf32> -> vector<32x168xf32>
    %15 = vector.extract_strided_slice %14 {offsets = [2, 0], sizes = [28, 168], strides = [1, 1]} : vector<32x168xf32> to vector<28x168xf32>
    %16 = arith.addf %11, %15 : vector<28x168xf32>
    %c3 = arith.constant 3 : index
    %c0_11 = arith.constant 0 : index
    %c0_12 = arith.constant 0 : index
    %17 = vector.load %arg2[%c3, %c0_11, %c0_12] : memref<5x96x168xbf16, #tpu.memory_space<vmem>>, vector<1x96x168xbf16>
    %18 = vector.shape_cast %17 : vector<1x96x168xbf16> to vector<96x168xbf16>
    %cst_13 = arith.constant dense<0.000000e+00> : vector<32x168xf32>
    %19 = tpu.matmul %2, %18, %cst_13 {dimension_numbers = #tpu.dot_dimension_numbers<[1], [0], [0], [1], [0, 0, 1, 1], [], []>} : vector<32x96xbf16>, vector<96x168xbf16>, vector<32x168xf32> -> vector<32x168xf32>
    %20 = vector.extract_strided_slice %19 {offsets = [3, 0], sizes = [28, 168], strides = [1, 1]} : vector<32x168xf32> to vector<28x168xf32>
    %21 = arith.addf %16, %20 : vector<28x168xf32>
    %c4 = arith.constant 4 : index
    %c0_14 = arith.constant 0 : index
    %c0_15 = arith.constant 0 : index
    %22 = vector.load %arg2[%c4, %c0_14, %c0_15] : memref<5x96x168xbf16, #tpu.memory_space<vmem>>, vector<1x96x168xbf16>
    %23 = vector.shape_cast %22 : vector<1x96x168xbf16> to vector<96x168xbf16>
    %cst_16 = arith.constant dense<0.000000e+00> : vector<32x168xf32>
    %24 = tpu.matmul %2, %23, %cst_16 {dimension_numbers = #tpu.dot_dimension_numbers<[1], [0], [0], [1], [0, 0, 1, 1], [], []>} : vector<32x96xbf16>, vector<96x168xbf16>, vector<32x168xf32> -> vector<32x168xf32>
    %25 = vector.extract_strided_slice %24 {offsets = [4, 0], sizes = [28, 168], strides = [1, 1]} : vector<32x168xf32> to vector<28x168xf32>
    %26 = arith.addf %21, %25 : vector<28x168xf32>
    %c0_17 = arith.constant 0 : index
    %c0_18 = arith.constant 0 : index
    %27 = vector.load %arg3[%c0_17, %c0_18] : memref<1x168xf32, #tpu.memory_space<vmem>>, vector<1x168xf32>
    %28 = vector.broadcast %27 : vector<1x168xf32> to vector<28x168xf32>
    %29 = arith.addf %26, %28 : vector<28x168xf32>
    %cst_19 = arith.constant 0.000000e+00 : f32
    %30 = vector.broadcast %cst_19 : f32 to vector<28x168xf32>
    %31 = arith.maximumf %29, %30 : vector<28x168xf32>
    %32 = vector.extract_strided_slice %31 {offsets = [0, 0], sizes = [27, 168], strides = [1, 1]} : vector<28x168xf32> to vector<27x168xf32>
    %33 = vector.extract_strided_slice %31 {offsets = [1, 0], sizes = [27, 168], strides = [1, 1]} : vector<28x168xf32> to vector<27x168xf32>
    %34 = arith.maximumf %32, %33 : vector<27x168xf32>
    %35 = vector.extract_strided_slice %34 {offsets = [0, 0], sizes = [27, 162], strides = [1, 1]} : vector<27x168xf32> to vector<27x162xf32>
    %36 = vector.extract_strided_slice %34 {offsets = [0, 6], sizes = [27, 162], strides = [1, 1]} : vector<27x168xf32> to vector<27x162xf32>
    %37 = arith.maximumf %35, %36 : vector<27x162xf32>
    %38 = vector.extract_strided_slice %37 {offsets = [0, 0], sizes = [19, 162], strides = [1, 1]} : vector<27x162xf32> to vector<19x162xf32>
    %39 = arith.truncf %38 : vector<19x162xf32> to vector<19x162xbf16>
    %c0_20 = arith.constant 0 : index
    %c0_21 = arith.constant 0 : index
    %c0_22 = arith.constant 0 : index
    %40 = vector.load %arg4[%c0_20, %c0_21, %c0_22] : memref<5x162x160xbf16, #tpu.memory_space<vmem>>, vector<1x162x160xbf16>
    %41 = vector.shape_cast %40 : vector<1x162x160xbf16> to vector<162x160xbf16>
    %cst_23 = arith.constant dense<0.000000e+00> : vector<19x160xf32>
    %42 = tpu.matmul %39, %41, %cst_23 {dimension_numbers = #tpu.dot_dimension_numbers<[1], [0], [0], [1], [0, 0, 1, 1], [], []>} : vector<19x162xbf16>, vector<162x160xbf16>, vector<19x160xf32> -> vector<19x160xf32>
    %43 = vector.extract_strided_slice %37 {offsets = [2, 0], sizes = [19, 162], strides = [1, 1]} : vector<27x162xf32> to vector<19x162xf32>
    %44 = arith.truncf %43 : vector<19x162xf32> to vector<19x162xbf16>
    %c1_24 = arith.constant 1 : index
    %c0_25 = arith.constant 0 : index
    %c0_26 = arith.constant 0 : index
    %45 = vector.load %arg4[%c1_24, %c0_25, %c0_26] : memref<5x162x160xbf16, #tpu.memory_space<vmem>>, vector<1x162x160xbf16>
    %46 = vector.shape_cast %45 : vector<1x162x160xbf16> to vector<162x160xbf16>
    %cst_27 = arith.constant dense<0.000000e+00> : vector<19x160xf32>
    %47 = tpu.matmul %44, %46, %cst_27 {dimension_numbers = #tpu.dot_dimension_numbers<[1], [0], [0], [1], [0, 0, 1, 1], [], []>} : vector<19x162xbf16>, vector<162x160xbf16>, vector<19x160xf32> -> vector<19x160xf32>
    %48 = arith.addf %42, %47 : vector<19x160xf32>
    %49 = vector.extract_strided_slice %37 {offsets = [4, 0], sizes = [19, 162], strides = [1, 1]} : vector<27x162xf32> to vector<19x162xf32>
    %50 = arith.truncf %49 : vector<19x162xf32> to vector<19x162xbf16>
    %c2_28 = arith.constant 2 : index
    %c0_29 = arith.constant 0 : index
    %c0_30 = arith.constant 0 : index
    %51 = vector.load %arg4[%c2_28, %c0_29, %c0_30] : memref<5x162x160xbf16, #tpu.memory_space<vmem>>, vector<1x162x160xbf16>
    %52 = vector.shape_cast %51 : vector<1x162x160xbf16> to vector<162x160xbf16>
    %cst_31 = arith.constant dense<0.000000e+00> : vector<19x160xf32>
    %53 = tpu.matmul %50, %52, %cst_31 {dimension_numbers = #tpu.dot_dimension_numbers<[1], [0], [0], [1], [0, 0, 1, 1], [], []>} : vector<19x162xbf16>, vector<162x160xbf16>, vector<19x160xf32> -> vector<19x160xf32>
    %54 = arith.addf %48, %53 : vector<19x160xf32>
    %55 = vector.extract_strided_slice %37 {offsets = [6, 0], sizes = [19, 162], strides = [1, 1]} : vector<27x162xf32> to vector<19x162xf32>
    %56 = arith.truncf %55 : vector<19x162xf32> to vector<19x162xbf16>
    %c3_32 = arith.constant 3 : index
    %c0_33 = arith.constant 0 : index
    %c0_34 = arith.constant 0 : index
    %57 = vector.load %arg4[%c3_32, %c0_33, %c0_34] : memref<5x162x160xbf16, #tpu.memory_space<vmem>>, vector<1x162x160xbf16>
    %58 = vector.shape_cast %57 : vector<1x162x160xbf16> to vector<162x160xbf16>
    %cst_35 = arith.constant dense<0.000000e+00> : vector<19x160xf32>
    %59 = tpu.matmul %56, %58, %cst_35 {dimension_numbers = #tpu.dot_dimension_numbers<[1], [0], [0], [1], [0, 0, 1, 1], [], []>} : vector<19x162xbf16>, vector<162x160xbf16>, vector<19x160xf32> -> vector<19x160xf32>
    %60 = arith.addf %54, %59 : vector<19x160xf32>
    %61 = vector.extract_strided_slice %37 {offsets = [8, 0], sizes = [19, 162], strides = [1, 1]} : vector<27x162xf32> to vector<19x162xf32>
    %62 = arith.truncf %61 : vector<19x162xf32> to vector<19x162xbf16>
    %c4_36 = arith.constant 4 : index
    %c0_37 = arith.constant 0 : index
    %c0_38 = arith.constant 0 : index
    %63 = vector.load %arg4[%c4_36, %c0_37, %c0_38] : memref<5x162x160xbf16, #tpu.memory_space<vmem>>, vector<1x162x160xbf16>
    %64 = vector.shape_cast %63 : vector<1x162x160xbf16> to vector<162x160xbf16>
    %cst_39 = arith.constant dense<0.000000e+00> : vector<19x160xf32>
    %65 = tpu.matmul %62, %64, %cst_39 {dimension_numbers = #tpu.dot_dimension_numbers<[1], [0], [0], [1], [0, 0, 1, 1], [], []>} : vector<19x162xbf16>, vector<162x160xbf16>, vector<19x160xf32> -> vector<19x160xf32>
    %66 = arith.addf %60, %65 : vector<19x160xf32>
    %c0_40 = arith.constant 0 : index
    %c0_41 = arith.constant 0 : index
    %67 = vector.load %arg5[%c0_40, %c0_41] : memref<1x160xf32, #tpu.memory_space<vmem>>, vector<1x160xf32>
    %68 = vector.broadcast %67 : vector<1x160xf32> to vector<19x160xf32>
    %69 = arith.addf %66, %68 : vector<19x160xf32>
    %cst_42 = arith.constant 0.000000e+00 : f32
    %70 = vector.broadcast %cst_42 : f32 to vector<19x160xf32>
    %71 = arith.maximumf %69, %70 : vector<19x160xf32>
    %72 = vector.extract_strided_slice %71 {offsets = [0, 0], sizes = [17, 160], strides = [1, 1]} : vector<19x160xf32> to vector<17x160xf32>
    %73 = vector.extract_strided_slice %71 {offsets = [2, 0], sizes = [17, 160], strides = [1, 1]} : vector<19x160xf32> to vector<17x160xf32>
    %74 = arith.maximumf %72, %73 : vector<17x160xf32>
    %75 = vector.extract_strided_slice %74 {offsets = [0, 0], sizes = [17, 144], strides = [1, 1]} : vector<17x160xf32> to vector<17x144xf32>
    %76 = vector.extract_strided_slice %74 {offsets = [0, 16], sizes = [17, 144], strides = [1, 1]} : vector<17x160xf32> to vector<17x144xf32>
    %77 = arith.maximumf %75, %76 : vector<17x144xf32>
    %78 = vector.extract_strided_slice %77 {offsets = [0, 0], sizes = [1, 144], strides = [1, 1]} : vector<17x144xf32> to vector<1x144xf32>
    %79 = arith.truncf %78 : vector<1x144xf32> to vector<1x144xbf16>
    %c0_43 = arith.constant 0 : index
    %c0_44 = arith.constant 0 : index
    %c0_45 = arith.constant 0 : index
    %80 = vector.load %arg6[%c0_43, %c0_44, %c0_45] : memref<5x144x120xbf16, #tpu.memory_space<vmem>>, vector<1x144x120xbf16>
    %81 = vector.shape_cast %80 : vector<1x144x120xbf16> to vector<144x120xbf16>
    %cst_46 = arith.constant dense<0.000000e+00> : vector<1x120xf32>
    %82 = tpu.matmul %79, %81, %cst_46 {dimension_numbers = #tpu.dot_dimension_numbers<[1], [0], [0], [1], [0, 0, 1, 1], [], []>} : vector<1x144xbf16>, vector<144x120xbf16>, vector<1x120xf32> -> vector<1x120xf32>
    %83 = vector.extract_strided_slice %77 {offsets = [4, 0], sizes = [1, 144], strides = [1, 1]} : vector<17x144xf32> to vector<1x144xf32>
    %84 = arith.truncf %83 : vector<1x144xf32> to vector<1x144xbf16>
    %c1_47 = arith.constant 1 : index
    %c0_48 = arith.constant 0 : index
    %c0_49 = arith.constant 0 : index
    %85 = vector.load %arg6[%c1_47, %c0_48, %c0_49] : memref<5x144x120xbf16, #tpu.memory_space<vmem>>, vector<1x144x120xbf16>
    %86 = vector.shape_cast %85 : vector<1x144x120xbf16> to vector<144x120xbf16>
    %cst_50 = arith.constant dense<0.000000e+00> : vector<1x120xf32>
    %87 = tpu.matmul %84, %86, %cst_50 {dimension_numbers = #tpu.dot_dimension_numbers<[1], [0], [0], [1], [0, 0, 1, 1], [], []>} : vector<1x144xbf16>, vector<144x120xbf16>, vector<1x120xf32> -> vector<1x120xf32>
    %88 = arith.addf %82, %87 : vector<1x120xf32>
    %89 = vector.extract_strided_slice %77 {offsets = [8, 0], sizes = [1, 144], strides = [1, 1]} : vector<17x144xf32> to vector<1x144xf32>
    %90 = arith.truncf %89 : vector<1x144xf32> to vector<1x144xbf16>
    %c2_51 = arith.constant 2 : index
    %c0_52 = arith.constant 0 : index
    %c0_53 = arith.constant 0 : index
    %91 = vector.load %arg6[%c2_51, %c0_52, %c0_53] : memref<5x144x120xbf16, #tpu.memory_space<vmem>>, vector<1x144x120xbf16>
    %92 = vector.shape_cast %91 : vector<1x144x120xbf16> to vector<144x120xbf16>
    %cst_54 = arith.constant dense<0.000000e+00> : vector<1x120xf32>
    %93 = tpu.matmul %90, %92, %cst_54 {dimension_numbers = #tpu.dot_dimension_numbers<[1], [0], [0], [1], [0, 0, 1, 1], [], []>} : vector<1x144xbf16>, vector<144x120xbf16>, vector<1x120xf32> -> vector<1x120xf32>
    %94 = arith.addf %88, %93 : vector<1x120xf32>
    %95 = vector.extract_strided_slice %77 {offsets = [12, 0], sizes = [1, 144], strides = [1, 1]} : vector<17x144xf32> to vector<1x144xf32>
    %96 = arith.truncf %95 : vector<1x144xf32> to vector<1x144xbf16>
    %c3_55 = arith.constant 3 : index
    %c0_56 = arith.constant 0 : index
    %c0_57 = arith.constant 0 : index
    %97 = vector.load %arg6[%c3_55, %c0_56, %c0_57] : memref<5x144x120xbf16, #tpu.memory_space<vmem>>, vector<1x144x120xbf16>
    %98 = vector.shape_cast %97 : vector<1x144x120xbf16> to vector<144x120xbf16>
    %cst_58 = arith.constant dense<0.000000e+00> : vector<1x120xf32>
    %99 = tpu.matmul %96, %98, %cst_58 {dimension_numbers = #tpu.dot_dimension_numbers<[1], [0], [0], [1], [0, 0, 1, 1], [], []>} : vector<1x144xbf16>, vector<144x120xbf16>, vector<1x120xf32> -> vector<1x120xf32>
    %100 = arith.addf %94, %99 : vector<1x120xf32>
    %101 = vector.extract_strided_slice %77 {offsets = [16, 0], sizes = [1, 144], strides = [1, 1]} : vector<17x144xf32> to vector<1x144xf32>
    %102 = arith.truncf %101 : vector<1x144xf32> to vector<1x144xbf16>
    %c4_59 = arith.constant 4 : index
    %c0_60 = arith.constant 0 : index
    %c0_61 = arith.constant 0 : index
    %103 = vector.load %arg6[%c4_59, %c0_60, %c0_61] : memref<5x144x120xbf16, #tpu.memory_space<vmem>>, vector<1x144x120xbf16>
    %104 = vector.shape_cast %103 : vector<1x144x120xbf16> to vector<144x120xbf16>
    %cst_62 = arith.constant dense<0.000000e+00> : vector<1x120xf32>
    %105 = tpu.matmul %102, %104, %cst_62 {dimension_numbers = #tpu.dot_dimension_numbers<[1], [0], [0], [1], [0, 0, 1, 1], [], []>} : vector<1x144xbf16>, vector<144x120xbf16>, vector<1x120xf32> -> vector<1x120xf32>
    %106 = arith.addf %100, %105 : vector<1x120xf32>
    %c0_63 = arith.constant 0 : index
    %c0_64 = arith.constant 0 : index
    %107 = vector.load %arg7[%c0_63, %c0_64] : memref<1x120xf32, #tpu.memory_space<vmem>>, vector<1x120xf32>
    %108 = arith.addf %106, %107 : vector<1x120xf32>
    %cst_65 = arith.constant 0.000000e+00 : f32
    %109 = vector.broadcast %cst_65 : f32 to vector<1x120xf32>
    %110 = arith.maximumf %108, %109 : vector<1x120xf32>
    %111 = arith.truncf %110 : vector<1x120xf32> to vector<1x120xbf16>
    %c0_66 = arith.constant 0 : index
    %c0_67 = arith.constant 0 : index
    %112 = vector.load %arg8[%c0_66, %c0_67] : memref<120x84xbf16, #tpu.memory_space<vmem>>, vector<120x84xbf16>
    %cst_68 = arith.constant dense<0.000000e+00> : vector<1x84xf32>
    %113 = tpu.matmul %111, %112, %cst_68 {dimension_numbers = #tpu.dot_dimension_numbers<[1], [0], [0], [1], [0, 0, 1, 1], [], []>} : vector<1x120xbf16>, vector<120x84xbf16>, vector<1x84xf32> -> vector<1x84xf32>
    %c0_69 = arith.constant 0 : index
    %c0_70 = arith.constant 0 : index
    %114 = vector.load %arg9[%c0_69, %c0_70] : memref<1x84xf32, #tpu.memory_space<vmem>>, vector<1x84xf32>
    %115 = arith.addf %113, %114 : vector<1x84xf32>
    %cst_71 = arith.constant 0.000000e+00 : f32
    %116 = vector.broadcast %cst_71 : f32 to vector<1x84xf32>
    %117 = arith.maximumf %115, %116 : vector<1x84xf32>
    %118 = arith.truncf %117 : vector<1x84xf32> to vector<1x84xbf16>
    %c0_72 = arith.constant 0 : index
    %c0_73 = arith.constant 0 : index
    %119 = vector.load %arg10[%c0_72, %c0_73] : memref<84x20xbf16, #tpu.memory_space<vmem>>, vector<84x20xbf16>
    %cst_74 = arith.constant dense<0.000000e+00> : vector<1x20xf32>
    %120 = tpu.matmul %118, %119, %cst_74 {dimension_numbers = #tpu.dot_dimension_numbers<[1], [0], [0], [1], [0, 0, 1, 1], [], []>} : vector<1x84xbf16>, vector<84x20xbf16>, vector<1x20xf32> -> vector<1x20xf32>
    %c0_75 = arith.constant 0 : index
    %c0_76 = arith.constant 0 : index
    %121 = vector.load %arg11[%c0_75, %c0_76] : memref<1x20xf32, #tpu.memory_space<vmem>>, vector<1x20xf32>
    %122 = arith.addf %120, %121 : vector<1x20xf32>
    %cst_77 = arith.constant 0.000000e+00 : f32
    %123 = vector.broadcast %cst_77 : f32 to vector<1x20xf32>
    %124 = arith.maximumf %122, %123 : vector<1x20xf32>
    %125 = arith.truncf %124 : vector<1x20xf32> to vector<1x20xbf16>
    %c0_78 = arith.constant 0 : index
    %c0_79 = arith.constant 0 : index
    %126 = vector.load %arg12[%c0_78, %c0_79] : memref<20x10xbf16, #tpu.memory_space<vmem>>, vector<20x10xbf16>
    %cst_80 = arith.constant dense<0.000000e+00> : vector<1x10xf32>
    %127 = tpu.matmul %125, %126, %cst_80 {dimension_numbers = #tpu.dot_dimension_numbers<[1], [0], [0], [1], [0, 0, 1, 1], [], []>} : vector<1x20xbf16>, vector<20x10xbf16>, vector<1x10xf32> -> vector<1x10xf32>
    %c0_81 = arith.constant 0 : index
    %c0_82 = arith.constant 0 : index
    %128 = vector.load %arg13[%c0_81, %c0_82] : memref<1x10xf32, #tpu.memory_space<vmem>>, vector<1x10xf32>
    %129 = arith.addf %127, %128 : vector<1x10xf32>
    %cst_83 = arith.constant dense<0xFF800000> : vector<1xf32>
    %130 = vector.multi_reduction <maximumf>, %129, %cst_83 [1] : vector<1x10xf32> to vector<1xf32>
    %131 = vector.shape_cast %130 : vector<1xf32> to vector<1x1xf32>
    %132 = vector.broadcast %131 : vector<1x1xf32> to vector<1x10xf32>
    %133 = arith.subf %129, %132 : vector<1x10xf32>
    %134 = math.exp %133 : vector<1x10xf32>
    %cst_84 = arith.constant dense<0.000000e+00> : vector<1xf32>
    %135 = vector.multi_reduction <add>, %134, %cst_84 [1] : vector<1x10xf32> to vector<1xf32>
    %136 = vector.shape_cast %135 : vector<1xf32> to vector<1x1xf32>
    %137 = math.log %136 : vector<1x1xf32>
    %138 = vector.broadcast %137 : vector<1x1xf32> to vector<1x10xf32>
    %139 = arith.subf %133, %138 : vector<1x10xf32>
    %c0_85 = arith.constant 0 : index
    %c0_86 = arith.constant 0 : index
    %c0_87 = arith.constant 0 : index
    %140 = vector.load %arg14[%c0_85, %c0_86, %c0_87] : memref<1x1x10xf32, #tpu.memory_space<vmem>>, vector<1x1x10xf32>
    %141 = vector.shape_cast %140 : vector<1x1x10xf32> to vector<1x10xf32>
    %142 = vector.shape_cast %139 : vector<1x10xf32> to vector<1x1x10xf32>
    tpu.vector_store %arg14[%c0_85, %c0_86, %c0_87], %142 {strides = array<i32>} : memref<1x1x10xf32, #tpu.memory_space<vmem>>, vector<1x1x10xf32>,
    return
  }
  func.func @transform_0(%arg0: i32) -> (i32, i32, i32) {
    %c0_i32 = arith.constant 0 : i32
    %c0_i32_0 = arith.constant 0 : i32
    %c0_i32_1 = arith.constant 0 : i32
    return %arg0, %c0_i32, %c0_i32_0 : i32, i32, i32
  }
  func.func @transform_1(%arg0: i32) -> (i32, i32, i32) {
    %c0_i32 = arith.constant 0 : i32
    %c0_i32_0 = arith.constant 0 : i32
    %c0_i32_1 = arith.constant 0 : i32
    %c0_i32_2 = arith.constant 0 : i32
    return %c0_i32, %c0_i32_0, %c0_i32_1 : i32, i32, i32
  }
  func.func @transform_2(%arg0: i32) -> (i32, i32) {
    %c0_i32 = arith.constant 0 : i32
    %c0_i32_0 = arith.constant 0 : i32
    %c0_i32_1 = arith.constant 0 : i32
    return %c0_i32, %c0_i32_0 : i32, i32
  }
  func.func @transform_3(%arg0: i32) -> (i32, i32, i32) {
    %c0_i32 = arith.constant 0 : i32
    %c0_i32_0 = arith.constant 0 : i32
    %c0_i32_1 = arith.constant 0 : i32
    %c0_i32_2 = arith.constant 0 : i32
    return %c0_i32, %c0_i32_0, %c0_i32_1 : i32, i32, i32
  }
  func.func @transform_4(%arg0: i32) -> (i32, i32) {
    %c0_i32 = arith.constant 0 : i32
    %c0_i32_0 = arith.constant 0 : i32
    %c0_i32_1 = arith.constant 0 : i32
    return %c0_i32, %c0_i32_0 : i32, i32
  }
  func.func @transform_5(%arg0: i32) -> (i32, i32, i32) {
    %c0_i32 = arith.constant 0 : i32
    %c0_i32_0 = arith.constant 0 : i32
    %c0_i32_1 = arith.constant 0 : i32
    %c0_i32_2 = arith.constant 0 : i32
    return %c0_i32, %c0_i32_0, %c0_i32_1 : i32, i32, i32
  }
  func.func @transform_6(%arg0: i32) -> (i32, i32) {
    %c0_i32 = arith.constant 0 : i32
    %c0_i32_0 = arith.constant 0 : i32
    %c0_i32_1 = arith.constant 0 : i32
    return %c0_i32, %c0_i32_0 : i32, i32
  }
  func.func @transform_7(%arg0: i32) -> (i32, i32) {
    %c0_i32 = arith.constant 0 : i32
    %c0_i32_0 = arith.constant 0 : i32
    %c0_i32_1 = arith.constant 0 : i32
    return %c0_i32, %c0_i32_0 : i32, i32
  }
  func.func @transform_8(%arg0: i32) -> (i32, i32) {
    %c0_i32 = arith.constant 0 : i32
    %c0_i32_0 = arith.constant 0 : i32
    %c0_i32_1 = arith.constant 0 : i32
    return %c0_i32, %c0_i32_0 : i32, i32
  }
  func.func @transform_9(%arg0: i32) -> (i32, i32) {
    %c0_i32 = arith.constant 0 : i32
    %c0_i32_0 = arith.constant 0 : i32
    %c0_i32_1 = arith.constant 0 : i32
    return %c0_i32, %c0_i32_0 : i32, i32
  }
  func.func @transform_10(%arg0: i32) -> (i32, i32) {
    %c0_i32 = arith.constant 0 : i32
    %c0_i32_0 = arith.constant 0 : i32
    %c0_i32_1 = arith.constant 0 : i32
    return %c0_i32, %c0_i32_0 : i32, i32
  }
  func.func @transform_11(%arg0: i32) -> (i32, i32) {
    %c0_i32 = arith.constant 0 : i32
    %c0_i32_0 = arith.constant 0 : i32
    %c0_i32_1 = arith.constant 0 : i32
    return %c0_i32, %c0_i32_0 : i32, i32
  }
  func.func @transform_12(%arg0: i32) -> (i32, i32) {
    %c0_i32 = arith.constant 0 : i32
    %c0_i32_0 = arith.constant 0 : i32
    %c0_i32_1 = arith.constant 0 : i32
    return %c0_i32, %c0_i32_0 : i32, i32
  }
  func.func @transform_13(%arg0: i32) -> (i32, i32, i32) {
    %c0_i32 = arith.constant 0 : i32
    %c0_i32_0 = arith.constant 0 : i32
    %c0_i32_1 = arith.constant 0 : i32
    return %arg0, %c0_i32, %c0_i32_0 : i32, i32, i32
  }
}

</mosaic_0001>

<llo_original>
// kernel: tile.13
$region0: #{tile.13}
  #allocation0 [shape = 's32[1]{0}', space=sflag, size = 0x4, scoped, tag = 'scoped memory for tile.13']
  %s0 = inlined_call_operand.vmem [shape: f32[6], index: 0, kind: input, shape index: {}]
  %s1 = inlined_call_operand.vmem [shape: f32[28,6], index: 1, kind: output, shape index: {}]
  // Predicated region
  $region2: #{tile.13} parent=0 // pred_check
    _
  $region3: #{tile.13} parent=0 // pred_check_branch
    %3 = sbr.rel (0) target = $region5
  $region4: #{tile.13} parent=0 // pred_region
    _
  $region5: #{tile.13} parent=0 // pred_fallthru
    _
  %v4 = vld [vmem:[%s0] ss:$0 sm:$0xff]
  %5 = vst [vmem:[%s1] sm:$0xff] %v4
  %s6 = scalar_lea.vmem %s1, 8
  %7 = vst [vmem:[%s6] sm:$0xff] %v4
  %s8 = scalar_lea.vmem %s1, 16
  %9 = vst [vmem:[%s8] sm:$0xff] %v4
  %s10 = scalar_lea.vmem %s1, 24
  %11 = vst [vmem:[%s10] sm:$0xff] %v4

// kernel: tile.14
$region0: #{tile.14}
  %s0 = inlined_call_operand.vmem [shape: f32[28,6], index: 0, kind: input, shape index: {}]
  %s1 = inlined_call_operand.vmem [shape: f32[1,168], index: 1, kind: output, shape index: {}]
  $region1: #{tile.14} parent=0
    #allocation0 [shape = 'u8[8192]{0}', space=vmem, size = 0x2000, scoped, tag = 'scoped mem for output reshape']
    %v2 = vld [vmem:[%s0] sm:$0x1]
    %vm3 = vcmask 48128
    %4 = vst.msk [vmem:[#allocation0] sm:$0x1] %vm3, %v2
    %s5 = scalar_lea.vmem %s0, 21
    %v6 = vld [vmem:[%s5] sm:$0x1]
    %s7 = scalar_lea.vmem %s0, 21
    %v8 = vld [vmem:[%s7] sm:$0x1]
    %vm9 = vcmask 15360
    %v10 = vsel %vm9, %v8, %v6
    %11 = vrot.lane.b32.xlu0 %v10, 126
    %v12 = vpop.permute.xlu0 %11
    %vm13 = vcmask 31744
    %s14 = scalar_lea.vmem [#allocation0], 8
    %15 = vst.msk [vmem:[%s14] sm:$0x1] %vm13, %v12
    %vm16 = vcmask 1048560
    %17 = vst.msk [vmem:[#allocation0] sm:$0x1] %vm16, %v12
    %s18 = scalar_lea.vmem %s0, 20
    %v19 = vld [vmem:[%s18] sm:$0x1]
    %20 = vrot.lane.b32.xlu0 %v19, 120
    %v21 = vpop.permute.xlu0 %20
    %vm22 = vcmask 1032128
    %23 = vst.msk [vmem:[#allocation0] sm:$0x1] %vm22, %v21
    %s24 = scalar_lea.vmem %s0, 19
    %v25 = vld [vmem:[%s24] sm:$0x1]
    %26 = vrot.lane.b32.xlu0 %v25, 114
    %v27 = vpop.permute.xlu0 %26
    %vm28 = vcmask 982928
    %29 = vst.msk [vmem:[#allocation0] sm:$0x1] %vm28, %v27
    %s30 = scalar_lea.vmem %s0, 18
    %v31 = vld [vmem:[%s30] sm:$0x1]
    %32 = vrot.lane.b32.xlu0 %v31, 108
    %v33 = vpop.permute.xlu0 %32
    %vm34 = vcmask 933728
    %35 = vst.msk [vmem:[#allocation0] sm:$0x1] %vm34, %v33
    %s36 = scalar_lea.vmem %s0, 17
    %v37 = vld [vmem:[%s36] sm:$0x1]
    %38 = vrot.lane.b32.xlu0 %v37, 102
    %v39 = vpop.permute.xlu0 %38
    %vm40 = vcmask 884528
    %41 = vst.msk [vmem:[#allocation0] sm:$0x1] %vm40, %v39
    %s42 = scalar_lea.vmem %s0, 16
    %v43 = vld [vmem:[%s42] sm:$0x1]
    %44 = vrot.lane.b32.xlu0 %v43, 96
    %v45 = vpop.permute.xlu0 %44
    %vm46 = vcmask 835328
    %47 = vst.msk [vmem:[#allocation0] sm:$0x1] %vm46, %v45
    %s48 = scalar_lea.vmem %s0, 15
    %v49 = vld [vmem:[%s48] sm:$0x1]
    %50 = vrot.lane.b32.xlu0 %v49, 90
    %v51 = vpop.permute.xlu0 %50
    %vm52 = vcmask 786128
    %53 = vst.msk [vmem:[#allocation0] sm:$0x1] %vm52, %v51
    %s54 = scalar_lea.vmem %s0, 14
    %v55 = vld [vmem:[%s54] sm:$0x1]
    %56 = vrot.lane.b32.xlu0 %v55, 84
    %v57 = vpop.permute.xlu0 %56
    %vm58 = vcmask 736928
    %59 = vst.msk [vmem:[#allocation0] sm:$0x1] %vm58, %v57
    %s60 = scalar_lea.vmem %s0, 13
    %v61 = vld [vmem:[%s60] sm:$0x1]
    %62 = vrot.lane.b32.xlu0 %v61, 78
    %v63 = vpop.permute.xlu0 %62
    %vm64 = vcmask 687728
    %65 = vst.msk [vmem:[#allocation0] sm:$0x1] %vm64, %v63
    %s66 = scalar_lea.vmem %s0, 12
    %v67 = vld [vmem:[%s66] sm:$0x1]
    %68 = vrot.lane.b32.xlu0 %v67, 72
    %v69 = vpop.permute.xlu0 %68
    %vm70 = vcmask 638528
    %71 = vst.msk [vmem:[#allocation0] sm:$0x1] %vm70, %v69
    %s72 = scalar_lea.vmem %s0, 11
    %v73 = vld [vmem:[%s72] sm:$0x1]
    %74 = vrot.lane.b32.xlu0 %v73, 66
    %v75 = vpop.permute.xlu0 %74
    %vm76 = vcmask 589328
    %77 = vst.msk [vmem:[#allocation0] sm:$0x1] %vm76, %v75
    %s78 = scalar_lea.vmem %s0, 10
    %v79 = vld [vmem:[%s78] sm:$0x1]
    %80 = vrot.lane.b32.xlu0 %v79, 60
    %v81 = vpop.permute.xlu0 %80
    %vm82 = vcmask 540128
    %83 = vst.msk [vmem:[#allocation0] sm:$0x1] %vm82, %v81
    %s84 = scalar_lea.vmem %s0, 9
    %v85 = vld [vmem:[%s84] sm:$0x1]
    %86 = vrot.lane.b32.xlu0 %v85, 54
    %v87 = vpop.permute.xlu0 %86
    %vm88 = vcmask 490928
    %89 = vst.msk [vmem:[#allocation0] sm:$0x1] %vm88, %v87
    %s90 = scalar_lea.vmem %s0, 8
    %v91 = vld [vmem:[%s90] sm:$0x1]
    %92 = vrot.lane.b32.xlu0 %v91, 48
    %v93 = vpop.permute.xlu0 %92
    %vm94 = vcmask 441728
    %95 = vst.msk [vmem:[#allocation0] sm:$0x1] %vm94, %v93
    %s96 = scalar_lea.vmem %s0, 7
    %v97 = vld [vmem:[%s96] sm:$0x1]
    %98 = vrot.lane.b32.xlu0 %v97, 42
    %v99 = vpop.permute.xlu0 %98
    %vm100 = vcmask 392528
    %101 = vst.msk [vmem:[#allocation0] sm:$0x1] %vm100, %v99
    %s102 = scalar_lea.vmem %s0, 6
    %v103 = vld [vmem:[%s102] sm:$0x1]
    %104 = vrot.lane.b32.xlu0 %v103, 36
    %v105 = vpop.permute.xlu0 %104
    %vm106 = vcmask 343328
    %107 = vst.msk [vmem:[#allocation0] sm:$0x1] %vm106, %v105
    %s108 = scalar_lea.vmem %s0, 27
    %v109 = vld [vmem:[%s108] sm:$0x1]
    %110 = vrot.lane.b32.xlu0 %v109, 34
    %v111 = vpop.permute.xlu0 %110
    %vm112 = vcmask 326928
    %s113 = scalar_lea.vmem [#allocation0], 8
    %114 = vst.msk [vmem:[%s113] sm:$0x1] %vm112, %v111
    %s115 = scalar_lea.vmem %s0, 5
    %v116 = vld [vmem:[%s115] sm:$0x1]
    %117 = vrot.lane.b32.xlu0 %v116, 30
    %v118 = vpop.permute.xlu0 %117
    %vm119 = vcmask 294128
    %120 = vst.msk [vmem:[#allocation0] sm:$0x1] %vm119, %v118
    %s121 = scalar_lea.vmem %s0, 26
    %v122 = vld [vmem:[%s121] sm:$0x1]
    %123 = vrot.lane.b32.xlu0 %v122, 28
    %v124 = vpop.permute.xlu0 %123
    %vm125 = vcmask 277728
    %s126 = scalar_lea.vmem [#allocation0], 8
    %127 = vst.msk [vmem:[%s126] sm:$0x1] %vm125, %v124
    %s128 = scalar_lea.vmem %s0, 4
    %v129 = vld [vmem:[%s128] sm:$0x1]
    %130 = vrot.lane.b32.xlu0 %v129, 24
    %v131 = vpop.permute.xlu0 %130
    %vm132 = vcmask 244928
    %133 = vst.msk [vmem:[#allocation0] sm:$0x1] %vm132, %v131
    %s134 = scalar_lea.vmem %s0, 25
    %v135 = vld [vmem:[%s134] sm:$0x1]
    %136 = vrot.lane.b32.xlu0 %v135, 22
    %v137 = vpop.permute.xlu0 %136
    %vm138 = vcmask 228528
    %s139 = scalar_lea.vmem [#allocation0], 8
    %140 = vst.msk [vmem:[%s139] sm:$0x1] %vm138, %v137
    %s141 = scalar_lea.vmem %s0, 3
    %v142 = vld [vmem:[%s141] sm:$0x1]
    %143 = vrot.lane.b32.xlu0 %v142, 18
    %v144 = vpop.permute.xlu0 %143
    %vm145 = vcmask 195728
    %146 = vst.msk [vmem:[#allocation0] sm:$0x1] %vm145, %v144
    %s147 = scalar_lea.vmem %s0, 24
    %v148 = vld [vmem:[%s147] sm:$0x1]
    %149 = vrot.lane.b32.xlu0 %v148, 16
    %v150 = vpop.permute.xlu0 %149
    %vm151 = vcmask 179328
    %s152 = scalar_lea.vmem [#allocation0], 8
    %153 = vst.msk [vmem:[%s152] sm:$0x1] %vm151, %v150
    %s154 = scalar_lea.vmem %s0, 2
    %v155 = vld [vmem:[%s154] sm:$0x1]
    %156 = vrot.lane.b32.xlu0 %v155, 12
    %v157 = vpop.permute.xlu0 %156
    %vm158 = vcmask 146528
    %159 = vst.msk [vmem:[#allocation0] sm:$0x1] %vm158, %v157
    %s160 = scalar_lea.vmem %s0, 23
    %v161 = vld [vmem:[%s160] sm:$0x1]
    %162 = vrot.lane.b32.xlu0 %v161, 10
    %v163 = vpop.permute.xlu0 %162
    %vm164 = vcmask 130128
    %s165 = scalar_lea.vmem [#allocation0], 8
    %166 = vst.msk [vmem:[%s165] sm:$0x1] %vm164, %v163
    %s167 = scalar_lea.vmem %s0, 1
    %v168 = vld [vmem:[%s167] sm:$0x1]
    %169 = vrot.lane.b32.xlu0 %v168, 6
    %v170 = vpop.permute.xlu0 %169
    %vm171 = vcmask 97328
    %172 = vst.msk [vmem:[#allocation0] sm:$0x1] %vm171, %v170
    %s173 = scalar_lea.vmem %s0, 22
    %v174 = vld [vmem:[%s173] sm:$0x1]
    %175 = vrot.lane.b32.xlu0 %v174, 4
    %v176 = vpop.permute.xlu0 %175
    %vm177 = vcmask 80928
    %s178 = scalar_lea.vmem [#allocation0], 8
    %179 = vst.msk [vmem:[%s178] sm:$0x1] %vm177, %v176
    %s181 = sshllo.u32 0, 1
    %v183 = vld [vmem:[#allocation0] sm:%s181]
    %s184 = sshllo.u32 0, 1
    %185 = vst [vmem:[%s1] sm:%s184] %v183
    %s186 = scalar_lea.vmem [#allocation0], 8
    %v187 = vld [vmem:[%s186] sm:%s181]
    %s188 = sshllo.u32 0, 1
    %s189 = scalar_lea.vmem %s1, 1
    %190 = vst [vmem:[%s189] sm:%s188] %v187

// kernel: tile.18
$region0: #{tile.18}
  #allocation0 [shape = 's32[1]{0}', space=sflag, size = 0x4, scoped, tag = 'scoped memory for tile.18']
  %s0 = inlined_call_operand.vmem [shape: f32[16], index: 0, kind: input, shape index: {}]
  %s1 = inlined_call_operand.vmem [shape: f32[10,16], index: 1, kind: output, shape index: {}]
  // Predicated region
  $region2: #{tile.18} parent=0 // pred_check
    _
  $region3: #{tile.18} parent=0 // pred_check_branch
    %3 = sbr.rel (0) target = $region5
  $region4: #{tile.18} parent=0 // pred_region
    _
  $region5: #{tile.18} parent=0 // pred_fallthru
    _
  %v4 = vld [vmem:[%s0] ss:$0 sm:$0xff]
  %5 = vst [vmem:[%s1] sm:$0xff] %v4
  %s6 = scalar_lea.vmem %s1, 8
  %7 = vst [vmem:[%s6] sm:$0xff] %v4

// kernel: tile.19
$region0: #{tile.19}
  %s0 = inlined_call_operand.vmem [shape: f32[10,16], index: 0, kind: input, shape index: {}]
  %s1 = inlined_call_operand.vmem [shape: f32[1,160], index: 1, kind: output, shape index: {}]
  $region1: #{tile.19} parent=0
    #allocation0 [shape = 'u8[8192]{0}', space=vmem, size = 0x2000, scoped, tag = 'scoped mem for output reshape']
    %s2 = smov 3
    %v3 = vld [vmem:[%s0] ss:$8 sm:%s2]
    %vm4 = vcmask 130048
    %5 = vst.msk [vmem:[#allocation0] ss:$8 sm:$0x3] %vm4, %v3
    %s6 = scalar_lea.vmem %s0, 7
    %v7 = vld [vmem:[%s6] sm:$0x1]
    %8 = vrot.lane.b32.xlu0 %v7, 112
    %v9 = vpop.permute.xlu0 %8
    %vm10 = vcmask 1048448
    %11 = vst.msk [vmem:[#allocation0] sm:$0x1] %vm10, %v9
    %s12 = scalar_lea.vmem %s0, 6
    %v13 = vld [vmem:[%s12] sm:$0x1]
    %14 = vrot.lane.b32.xlu0 %v13, 96
    %v15 = vpop.permute.xlu0 %14
    %vm16 = vcmask 917248
    %17 = vst.msk [vmem:[#allocation0] sm:$0x1] %vm16, %v15
    %s18 = scalar_lea.vmem %s0, 5
    %v19 = vld [vmem:[%s18] sm:$0x1]
    %20 = vrot.lane.b32.xlu0 %v19, 80
    %v21 = vpop.permute.xlu0 %20
    %vm22 = vcmask 786048
    %23 = vst.msk [vmem:[#allocation0] sm:$0x1] %vm22, %v21
    %s24 = scalar_lea.vmem %s0, 4
    %v25 = vld [vmem:[%s24] sm:$0x1]
    %26 = vrot.lane.b32.xlu0 %v25, 64
    %v27 = vpop.permute.xlu0 %26
    %vm28 = vcmask 654848
    %29 = vst.msk [vmem:[#allocation0] sm:$0x1] %vm28, %v27
    %s30 = scalar_lea.vmem %s0, 3
    %v31 = vld [vmem:[%s30] sm:$0x1]
    %32 = vrot.lane.b32.xlu0 %v31, 48
    %v33 = vpop.permute.xlu0 %32
    %vm34 = vcmask 523648
    %35 = vst.msk [vmem:[#allocation0] sm:$0x1] %vm34, %v33
    %s36 = scalar_lea.vmem %s0, 2
    %v37 = vld [vmem:[%s36] sm:$0x1]
    %38 = vrot.lane.b32.xlu0 %v37, 32
    %v39 = vpop.permute.xlu0 %38
    %vm40 = vcmask 392448
    %41 = vst.msk [vmem:[#allocation0] sm:$0x1] %vm40, %v39
    %s42 = scalar_lea.vmem %s0, 1
    %s43 = smov 3
    %v44 = vld [vmem:[%s42] ss:$8 sm:%s43]
    %45 = vrot.lane.b32.xlu0 %v44, 16
    %v46 = vpop.permute.xlu0 %45
    %vm47 = vcmask 261248
    %48 = vst.msk [vmem:[#allocation0] ss:$8 sm:$0x3] %vm47, %v46
    %s50 = sshllo.u32 0, 1
    %v52 = vld [vmem:[#allocation0] sm:%s50]
    %s53 = sshllo.u32 0, 1
    %54 = vst [vmem:[%s1] sm:%s53] %v52
    %s55 = scalar_lea.vmem [#allocation0], 8
    %v56 = vld [vmem:[%s55] sm:%s50]
    %s57 = sshllo.u32 0, 1
    %s58 = scalar_lea.vmem %s1, 1
    %59 = vst [vmem:[%s58] sm:%s57] %v56

// kernel: cifar10_forward.1
$region0: #{cifar10_forward.1}
  #allocation0 [shape = 'u32[]', space=smem, size = 0x4, offset = 0x4, fixed_abs, tag = 'smem constant byte address 0x4 - core index']
  #allocation1 [shape = 'u32[144,128]{1,0:T(1,128)}', space=vmem, size = 0x12000, scoped, tag = 'internal scratch']
  %s0 = inlined_call_operand.vmem [shape: f32[2,32,96], index: 0, kind: input, shape index: {}]
  %s1 = inlined_call_operand.vmem [shape: bf16[5,96,168], index: 1, kind: input, shape index: {}]
  %s2 = inlined_call_operand.vmem [shape: f32[1,168], index: 2, kind: input, shape index: {}]
  %s3 = inlined_call_operand.vmem [shape: bf16[5,162,160], index: 3, kind: input, shape index: {}]
  %s4 = inlined_call_operand.vmem [shape: f32[1,160], index: 4, kind: input, shape index: {}]
  %s5 = inlined_call_operand.vmem [shape: bf16[5,144,120], index: 5, kind: input, shape index: {}]
  %s6 = inlined_call_operand.vmem [shape: f32[1,120], index: 6, kind: input, shape index: {}]
  %s7 = inlined_call_operand.vmem [shape: bf16[120,84], index: 7, kind: input, shape index: {}]
  %s8 = inlined_call_operand.vmem [shape: f32[1,84], index: 8, kind: input, shape index: {}]
  %s9 = inlined_call_operand.vmem [shape: bf16[84,20], index: 9, kind: input, shape index: {}]
  %s10 = inlined_call_operand.vmem [shape: f32[1,20], index: 10, kind: input, shape index: {}]
  %s11 = inlined_call_operand.vmem [shape: bf16[20,10], index: 11, kind: input, shape index: {}]
  %s12 = inlined_call_operand.vmem [shape: f32[1,10], index: 12, kind: input, shape index: {}]
  %s13 = inlined_call_operand.hbm [shape: f32[2,1,10], index: 13, kind: output, shape index: {}]
  %s14 = sld [smem:[#allocation0]]
  $region85: #{cifar10_forward.1} parent=0
    _
  %s16 = ssub.s32 1, %s14
  %s17 = scalar_select 0, %s16, %s14
  $region1: #{cifar10_forward.1} parent=0
    #allocation2 [shape = 'u8[1024]{0}', space=vmem, size = 0x400, scoped, tag = 'output window, operand 0']
    #allocation3 [shape = 's32[2]{0}', space=sflag, size = 0x8, scoped, tag = 'scoped memory for cifar10_forward.1']
    %18 = vsyncpa [#allocation3], 0
    %s19 = scalar_lea.sflag [#allocation3], 1
    %20 = vsyncpa %s19, 0
    loop: start=0, step=1, limit=4
    $region2: #{cifar10_forward.1} parent=1 // loop_pre_header
      _
    $region3: #{cifar10_forward.1} parent=1 // loop_header
      %s22 = sphi 0, %s26
      %p23 = scmp.ge.s32.totalorder %s22, 4
      %s32 = sphi 0, %s34
      %s35 = sphi 0, %s32
      %s36 = sphi 0, %s35
      %s52 = sphi 0, %s36
      %s56 = sphi 0, %s56
      %s58 = sphi 0, %s56
      %s59 = sphi 0, %s58
      %s73 = sphi 0, %s59
      %s77 = sphi 0, %s77
      %s79 = sphi 0, %s77
      %s80 = sphi 0, %s79
      %s94 = sphi 0, %s80
      %s98 = sphi 0, %s98
      %s100 = sphi 0, %s98
      %s101 = sphi 0, %s100
      %s115 = sphi 0, %s101
      %s119 = sphi 0, %s119
      %s121 = sphi 0, %s119
      %s122 = sphi 0, %s121
      %s136 = sphi 0, %s122
      %s140 = sphi 0, %s140
      %s142 = sphi 0, %s140
      %s143 = sphi 0, %s142
      %s157 = sphi 0, %s143
      %s161 = sphi 0, %s161
      %s163 = sphi 0, %s161
      %s164 = sphi 0, %s163
      %s178 = sphi 0, %s164
      %s182 = sphi 0, %s182
      %s184 = sphi 0, %s182
      %s185 = sphi 0, %s184
      %s199 = sphi 0, %s185
      %s203 = sphi 0, %s203
      %s205 = sphi 0, %s203
      %s206 = sphi 0, %s205
      %s220 = sphi 0, %s206
      %s224 = sphi 0, %s224
      %s226 = sphi 0, %s224
      %s227 = sphi 0, %s226
      %s241 = sphi 0, %s227
      %s245 = sphi 0, %s245
      %s247 = sphi 0, %s245
      %s248 = sphi 0, %s247
      %s262 = sphi 0, %s248
      %s266 = sphi 0, %s266
      %s268 = sphi 0, %s266
      %s269 = sphi 0, %s268
      %s283 = sphi 0, %s269
      %s287 = sphi 0, %s287
      %s289 = sphi 0, %s287
      %s290 = sphi 0, %s289
      %s304 = sphi 0, %s290
      %s310 = sphi 0, %s312
      %s313 = sphi 0, %s310
      %s314 = sphi 0, %s313
      %s330 = sphi 0, %s314
    $region4: #{cifar10_forward.1} parent=1 // loop_header_branch
      %25 = sbr.rel (%p23) target = $region8
    $region5: #{cifar10_forward.1} parent=1 // loop_body
      %s27 = ssub.s32 %s22, 1
      %s28 = ssub.s32 %s22, 2
      %s29 = sadd.s32 %s22, 1
      %s30 = ssub.s32 %s22, %s29
      %p31 = scmp.eq.s32.totalorder %s30, 0
      %s33 = sadd.s32 %s32, 1
      %s34 = scalar_select %p31, %s32, %s33
      %p37 = pneg %p31
      %p38 = scmp.eq.s32.totalorder %s22, 1
      %p39 = por %p37, %p38
      %p40 = scmp.ne.s32.totalorder %s32, %s35
      %p41 = scmp.eq.s32.totalorder %s22, 0
      %p42 = por %p40, %p41
      %p43 = scmp.ne.s32.totalorder %s32, %s35
      %p44 = scmp.eq.s32.totalorder %s27, 1
      %p45 = por %p43, %p44
      %p46 = scmp.ne.s32.totalorder %s35, %s36
      %p47 = scmp.eq.s32.totalorder %s27, 0
      %p48 = por %p46, %p47
      %p49 = scmp.ne.s32.totalorder %s35, %s36
      %p50 = scmp.eq.s32.totalorder %s28, 1
      %p51 = por %p49, %p50
      %p53 = scmp.ne.s32.totalorder %s36, %s52
      %p54 = scmp.eq.s32.totalorder %s28, 0
      %p55 = por %p53, %p54
      %s57 = sadd.s32 %s56, 1
      %p60 = scmp.eq.s32.totalorder %s22, 1
      %p61 = scmp.ne.s32.totalorder %s56, %s58
      %p62 = scmp.eq.s32.totalorder %s22, 0
      %p63 = por %p61, %p62
      %p64 = scmp.ne.s32.totalorder %s56, %s58
      %p65 = scmp.eq.s32.totalorder %s27, 1
      %p66 = por %p64, %p65
      %p67 = scmp.ne.s32.totalorder %s58, %s59
      %p68 = scmp.eq.s32.totalorder %s27, 0
      %p69 = por %p67, %p68
      %p70 = scmp.ne.s32.totalorder %s58, %s59
      %p71 = scmp.eq.s32.totalorder %s28, 1
      %p72 = por %p70, %p71
      %p74 = scmp.ne.s32.totalorder %s59, %s73
      %p75 = scmp.eq.s32.totalorder %s28, 0
      %p76 = por %p74, %p75
      %s78 = sadd.s32 %s77, 1
      %p81 = scmp.eq.s32.totalorder %s22, 1
      %p82 = scmp.ne.s32.totalorder %s77, %s79
      %p83 = scmp.eq.s32.totalorder %s22, 0
      %p84 = por %p82, %p83
      %p85 = scmp.ne.s32.totalorder %s77, %s79
      %p86 = scmp.eq.s32.totalorder %s27, 1
      %p87 = por %p85, %p86
      %p88 = scmp.ne.s32.totalorder %s79, %s80
      %p89 = scmp.eq.s32.totalorder %s27, 0
      %p90 = por %p88, %p89
      %p91 = scmp.ne.s32.totalorder %s79, %s80
      %p92 = scmp.eq.s32.totalorder %s28, 1
      %p93 = por %p91, %p92
      %p95 = scmp.ne.s32.totalorder %s80, %s94
      %p96 = scmp.eq.s32.totalorder %s28, 0
      %p97 = por %p95, %p96
      %s99 = sadd.s32 %s98, 1
      %p102 = scmp.eq.s32.totalorder %s22, 1
      %p103 = scmp.ne.s32.totalorder %s98, %s100
      %p104 = scmp.eq.s32.totalorder %s22, 0
      %p105 = por %p103, %p104
      %p106 = scmp.ne.s32.totalorder %s98, %s100
      %p107 = scmp.eq.s32.totalorder %s27, 1
      %p108 = por %p106, %p107
      %p109 = scmp.ne.s32.totalorder %s100, %s101
      %p110 = scmp.eq.s32.totalorder %s27, 0
      %p111 = por %p109, %p110
      %p112 = scmp.ne.s32.totalorder %s100, %s101
      %p113 = scmp.eq.s32.totalorder %s28, 1
      %p114 = por %p112, %p113
      %p116 = scmp.ne.s32.totalorder %s101, %s115
      %p117 = scmp.eq.s32.totalorder %s28, 0
      %p118 = por %p116, %p117
      %s120 = sadd.s32 %s119, 1
      %p123 = scmp.eq.s32.totalorder %s22, 1
      %p124 = scmp.ne.s32.totalorder %s119, %s121
      %p125 = scmp.eq.s32.totalorder %s22, 0
      %p126 = por %p124, %p125
      %p127 = scmp.ne.s32.totalorder %s119, %s121
      %p128 = scmp.eq.s32.totalorder %s27, 1
      %p129 = por %p127, %p128
      %p130 = scmp.ne.s32.totalorder %s121, %s122
      %p131 = scmp.eq.s32.totalorder %s27, 0
      %p132 = por %p130, %p131
      %p133 = scmp.ne.s32.totalorder %s121, %s122
      %p134 = scmp.eq.s32.totalorder %s28, 1
      %p135 = por %p133, %p134
      %p137 = scmp.ne.s32.totalorder %s122, %s136
      %p138 = scmp.eq.s32.totalorder %s28, 0
      %p139 = por %p137, %p138
      %s141 = sadd.s32 %s140, 1
      %p144 = scmp.eq.s32.totalorder %s22, 1
      %p145 = scmp.ne.s32.totalorder %s140, %s142
      %p146 = scmp.eq.s32.totalorder %s22, 0
      %p147 = por %p145, %p146
      %p148 = scmp.ne.s32.totalorder %s140, %s142
      %p149 = scmp.eq.s32.totalorder %s27, 1
      %p150 = por %p148, %p149
      %p151 = scmp.ne.s32.totalorder %s142, %s143
      %p152 = scmp.eq.s32.totalorder %s27, 0
      %p153 = por %p151, %p152
      %p154 = scmp.ne.s32.totalorder %s142, %s143
      %p155 = scmp.eq.s32.totalorder %s28, 1
      %p156 = por %p154, %p155
      %p158 = scmp.ne.s32.totalorder %s143, %s157
      %p159 = scmp.eq.s32.totalorder %s28, 0
      %p160 = por %p158, %p159
      %s162 = sadd.s32 %s161, 1
      %p165 = scmp.eq.s32.totalorder %s22, 1
      %p166 = scmp.ne.s32.totalorder %s161, %s163
      %p167 = scmp.eq.s32.totalorder %s22, 0
      %p168 = por %p166, %p167
      %p169 = scmp.ne.s32.totalorder %s161, %s163
      %p170 = scmp.eq.s32.totalorder %s27, 1
      %p171 = por %p169, %p170
      %p172 = scmp.ne.s32.totalorder %s163, %s164
      %p173 = scmp.eq.s32.totalorder %s27, 0
      %p174 = por %p172, %p173
      %p175 = scmp.ne.s32.totalorder %s163, %s164
      %p176 = scmp.eq.s32.totalorder %s28, 1
      %p177 = por %p175, %p176
      %p179 = scmp.ne.s32.totalorder %s164, %s178
      %p180 = scmp.eq.s32.totalorder %s28, 0
      %p181 = por %p179, %p180
      %s183 = sadd.s32 %s182, 1
      %p186 = scmp.eq.s32.totalorder %s22, 1
      %p187 = scmp.ne.s32.totalorder %s182, %s184
      %p188 = scmp.eq.s32.totalorder %s22, 0
      %p189 = por %p187, %p188
      %p190 = scmp.ne.s32.totalorder %s182, %s184
      %p191 = scmp.eq.s32.totalorder %s27, 1
      %p192 = por %p190, %p191
      %p193 = scmp.ne.s32.totalorder %s184, %s185
      %p194 = scmp.eq.s32.totalorder %s27, 0
      %p195 = por %p193, %p194
      %p196 = scmp.ne.s32.totalorder %s184, %s185
      %p197 = scmp.eq.s32.totalorder %s28, 1
      %p198 = por %p196, %p197
      %p200 = scmp.ne.s32.totalorder %s185, %s199
      %p201 = scmp.eq.s32.totalorder %s28, 0
      %p202 = por %p200, %p201
      %s204 = sadd.s32 %s203, 1
      %p207 = scmp.eq.s32.totalorder %s22, 1
      %p208 = scmp.ne.s32.totalorder %s203, %s205
      %p209 = scmp.eq.s32.totalorder %s22, 0
      %p210 = por %p208, %p209
      %p211 = scmp.ne.s32.totalorder %s203, %s205
      %p212 = scmp.eq.s32.totalorder %s27, 1
      %p213 = por %p211, %p212
      %p214 = scmp.ne.s32.totalorder %s205, %s206
      %p215 = scmp.eq.s32.totalorder %s27, 0
      %p216 = por %p214, %p215
      %p217 = scmp.ne.s32.totalorder %s205, %s206
      %p218 = scmp.eq.s32.totalorder %s28, 1
      %p219 = por %p217, %p218
      %p221 = scmp.ne.s32.totalorder %s206, %s220
      %p222 = scmp.eq.s32.totalorder %s28, 0
      %p223 = por %p221, %p222
      %s225 = sadd.s32 %s224, 1
      %p228 = scmp.eq.s32.totalorder %s22, 1
      %p229 = scmp.ne.s32.totalorder %s224, %s226
      %p230 = scmp.eq.s32.totalorder %s22, 0
      %p231 = por %p229, %p230
      %p232 = scmp.ne.s32.totalorder %s224, %s226
      %p233 = scmp.eq.s32.totalorder %s27, 1
      %p234 = por %p232, %p233
      %p235 = scmp.ne.s32.totalorder %s226, %s227
      %p236 = scmp.eq.s32.totalorder %s27, 0
      %p237 = por %p235, %p236
      %p238 = scmp.ne.s32.totalorder %s226, %s227
      %p239 = scmp.eq.s32.totalorder %s28, 1
      %p240 = por %p238, %p239
      %p242 = scmp.ne.s32.totalorder %s227, %s241
      %p243 = scmp.eq.s32.totalorder %s28, 0
      %p244 = por %p242, %p243
      %s246 = sadd.s32 %s245, 1
      %p249 = scmp.eq.s32.totalorder %s22, 1
      %p250 = scmp.ne.s32.totalorder %s245, %s247
      %p251 = scmp.eq.s32.totalorder %s22, 0
      %p252 = por %p250, %p251
      %p253 = scmp.ne.s32.totalorder %s245, %s247
      %p254 = scmp.eq.s32.totalorder %s27, 1
      %p255 = por %p253, %p254
      %p256 = scmp.ne.s32.totalorder %s247, %s248
      %p257 = scmp.eq.s32.totalorder %s27, 0
      %p258 = por %p256, %p257
      %p259 = scmp.ne.s32.totalorder %s247, %s248
      %p260 = scmp.eq.s32.totalorder %s28, 1
      %p261 = por %p259, %p260
      %p263 = scmp.ne.s32.totalorder %s248, %s262
      %p264 = scmp.eq.s32.totalorder %s28, 0
      %p265 = por %p263, %p264
      %s267 = sadd.s32 %s266, 1
      %p270 = scmp.eq.s32.totalorder %s22, 1
      %p271 = scmp.ne.s32.totalorder %s266, %s268
      %p272 = scmp.eq.s32.totalorder %s22, 0
      %p273 = por %p271, %p272
      %p274 = scmp.ne.s32.totalorder %s266, %s268
      %p275 = scmp.eq.s32.totalorder %s27, 1
      %p276 = por %p274, %p275
      %p277 = scmp.ne.s32.totalorder %s268, %s269
      %p278 = scmp.eq.s32.totalorder %s27, 0
      %p279 = por %p277, %p278
      %p280 = scmp.ne.s32.totalorder %s268, %s269
      %p281 = scmp.eq.s32.totalorder %s28, 1
      %p282 = por %p280, %p281
      %p284 = scmp.ne.s32.totalorder %s269, %s283
      %p285 = scmp.eq.s32.totalorder %s28, 0
      %p286 = por %p284, %p285
      %s288 = sadd.s32 %s287, 1
      %p291 = scmp.eq.s32.totalorder %s22, 1
      %p292 = scmp.ne.s32.totalorder %s287, %s289
      %p293 = scmp.eq.s32.totalorder %s22, 0
      %p294 = por %p292, %p293
      %p295 = scmp.ne.s32.totalorder %s287, %s289
      %p296 = scmp.eq.s32.totalorder %s27, 1
      %p297 = por %p295, %p296
      %p298 = scmp.ne.s32.totalorder %s289, %s290
      %p299 = scmp.eq.s32.totalorder %s27, 0
      %p300 = por %p298, %p299
      %p301 = scmp.ne.s32.totalorder %s289, %s290
      %p302 = scmp.eq.s32.totalorder %s28, 1
      %p303 = por %p301, %p302
      %p305 = scmp.ne.s32.totalorder %s290, %s304
      %p306 = scmp.eq.s32.totalorder %s28, 0
      %p307 = por %p305, %p306
      %s308 = ssub.s32 %s22, %s29
      %p309 = scmp.eq.s32.totalorder %s308, 0
      %s311 = sadd.s32 %s310, 1
      %s312 = scalar_select %p309, %s310, %s311
      %p315 = pneg %p309
      %p316 = scmp.eq.s32.totalorder %s22, 1
      %p317 = por %p315, %p316
      %p318 = scmp.ne.s32.totalorder %s310, %s313
      %p319 = scmp.eq.s32.totalorder %s22, 0
      %p320 = por %p318, %p319
      %p321 = scmp.ne.s32.totalorder %s310, %s313
      %p322 = scmp.eq.s32.totalorder %s27, 1
      %p323 = por %p321, %p322
      %p324 = scmp.ne.s32.totalorder %s313, %s314
      %p325 = scmp.eq.s32.totalorder %s27, 0
      %p326 = por %p324, %p325
      %p327 = scmp.ne.s32.totalorder %s313, %s314
      %p328 = scmp.eq.s32.totalorder %s28, 1
      %p329 = por %p327, %p328
      %p331 = scmp.ne.s32.totalorder %s314, %s330
      %p332 = scmp.eq.s32.totalorder %s28, 0
      %p333 = por %p331, %p332
      %p334 = scmp.le.s32.totalorder 1, %s22
      %p335 = scmp.lt.s32.totalorder %s22, 3
      %p336 = pnand %p334, %p335
      %p337 = pneg %p336
      // Predicated region
      $region9: #{cifar10_forward.1} parent=5 // pred_check
        _
      $region10: #{cifar10_forward.1} parent=5 // pred_check_branch
        %339 = sbr.rel (%p336) target = $region12
      $region11: #{cifar10_forward.1} parent=5 // pred_region
        %s340 = ssub.s32 %s22, 1
        // Predicated region
        $region13: #{cifar10_forward.1} parent=11 // pred_check
          %p341 = pneg %p69
        $region14: #{cifar10_forward.1} parent=11 // pred_check_branch
          %343 = sbr.rel (%p341) target = $region16
        $region15: #{cifar10_forward.1} parent=11 // pred_region
          _
        $region16: #{cifar10_forward.1} parent=11 // pred_fallthru
          _
        // Predicated region
        $region17: #{cifar10_forward.1} parent=11 // pred_check
          %p344 = pneg %p90
        $region18: #{cifar10_forward.1} parent=11 // pred_check_branch
          %346 = sbr.rel (%p344) target = $region20
        $region19: #{cifar10_forward.1} parent=11 // pred_region
          _
        $region20: #{cifar10_forward.1} parent=11 // pred_fallthru
          _
        // Predicated region
        $region21: #{cifar10_forward.1} parent=11 // pred_check
          %p347 = pneg %p111
        $region22: #{cifar10_forward.1} parent=11 // pred_check_branch
          %349 = sbr.rel (%p347) target = $region24
        $region23: #{cifar10_forward.1} parent=11 // pred_region
          _
        $region24: #{cifar10_forward.1} parent=11 // pred_fallthru
          _
        // Predicated region
        $region25: #{cifar10_forward.1} parent=11 // pred_check
          %p350 = pneg %p132
        $region26: #{cifar10_forward.1} parent=11 // pred_check_branch
          %352 = sbr.rel (%p350) target = $region28
        $region27: #{cifar10_forward.1} parent=11 // pred_region
          _
        $region28: #{cifar10_forward.1} parent=11 // pred_fallthru
          _
        // Predicated region
        $region29: #{cifar10_forward.1} parent=11 // pred_check
          %p353 = pneg %p153
        $region30: #{cifar10_forward.1} parent=11 // pred_check_branch
          %355 = sbr.rel (%p353) target = $region32
        $region31: #{cifar10_forward.1} parent=11 // pred_region
          _
        $region32: #{cifar10_forward.1} parent=11 // pred_fallthru
          _
        // Predicated region
        $region33: #{cifar10_forward.1} parent=11 // pred_check
          %p356 = pneg %p174
        $region34: #{cifar10_forward.1} parent=11 // pred_check_branch
          %358 = sbr.rel (%p356) target = $region36
        $region35: #{cifar10_forward.1} parent=11 // pred_region
          _
        $region36: #{cifar10_forward.1} parent=11 // pred_fallthru
          _
        // Predicated region
        $region37: #{cifar10_forward.1} parent=11 // pred_check
          %p359 = pneg %p195
        $region38: #{cifar10_forward.1} parent=11 // pred_check_branch
          %361 = sbr.rel (%p359) target = $region40
        $region39: #{cifar10_forward.1} parent=11 // pred_region
          _
        $region40: #{cifar10_forward.1} parent=11 // pred_fallthru
          _
        // Predicated region
        $region41: #{cifar10_forward.1} parent=11 // pred_check
          %p362 = pneg %p216
        $region42: #{cifar10_forward.1} parent=11 // pred_check_branch
          %364 = sbr.rel (%p362) target = $region44
        $region43: #{cifar10_forward.1} parent=11 // pred_region
          _
        $region44: #{cifar10_forward.1} parent=11 // pred_fallthru
          _
        // Predicated region
        $region45: #{cifar10_forward.1} parent=11 // pred_check
          %p365 = pneg %p237
        $region46: #{cifar10_forward.1} parent=11 // pred_check_branch
          %367 = sbr.rel (%p365) target = $region48
        $region47: #{cifar10_forward.1} parent=11 // pred_region
          _
        $region48: #{cifar10_forward.1} parent=11 // pred_fallthru
          _
        // Predicated region
        $region49: #{cifar10_forward.1} parent=11 // pred_check
          %p368 = pneg %p258
        $region50: #{cifar10_forward.1} parent=11 // pred_check_branch
          %370 = sbr.rel (%p368) target = $region52
        $region51: #{cifar10_forward.1} parent=11 // pred_region
          _
        $region52: #{cifar10_forward.1} parent=11 // pred_fallthru
          _
        // Predicated region
        $region53: #{cifar10_forward.1} parent=11 // pred_check
          %p371 = pneg %p279
        $region54: #{cifar10_forward.1} parent=11 // pred_check_branch
          %373 = sbr.rel (%p371) target = $region56
        $region55: #{cifar10_forward.1} parent=11 // pred_region
          _
        $region56: #{cifar10_forward.1} parent=11 // pred_fallthru
          _
        // Predicated region
        $region57: #{cifar10_forward.1} parent=11 // pred_check
          %p374 = pneg %p300
        $region58: #{cifar10_forward.1} parent=11 // pred_check_branch
          %376 = sbr.rel (%p374) target = $region60
        $region59: #{cifar10_forward.1} parent=11 // pred_region
          _
        $region60: #{cifar10_forward.1} parent=11 // pred_fallthru
          _
      $region12: #{cifar10_forward.1} parent=5 // pred_fallthru
        _
      %p377 = scmp.lt.s32.totalorder %s22, 2
      // Predicated region
      $region61: #{cifar10_forward.1} parent=5 // pred_check
        %p378 = pneg %p377
      $region62: #{cifar10_forward.1} parent=5 // pred_check_branch
        %380 = sbr.rel (%p378) target = $region64
      $region63: #{cifar10_forward.1} parent=5 // pred_region
        // Predicated region
        $region65: #{cifar10_forward.1} parent=63 // pred_check
          %p381 = pneg %p42
        $region66: #{cifar10_forward.1} parent=63 // pred_check_branch
          %383 = sbr.rel (%p381) target = $region68
        $region67: #{cifar10_forward.1} parent=63 // pred_region
          %p384 = scmp.lt.s32.totalorder %s22, 1
          %s385 = scalar_select %p384, %s22, 1
          %s386 = smul.addr %s385, 4
          %s387 = smul.addr %s386, 8
          %s388 = scalar_lea.vmem %s0, %s387
        $region68: #{cifar10_forward.1} parent=63 // pred_fallthru
          _
      $region64: #{cifar10_forward.1} parent=5 // pred_fallthru
        _
      %p389 = scmp.le.s32.totalorder 1, %s22
      %p390 = scmp.lt.s32.totalorder %s22, 3
      %p391 = pnand %p389, %p390
      %p392 = pneg %p391
      // Predicated region
      $region69: #{cifar10_forward.1} parent=5 // pred_check
        _
      $region70: #{cifar10_forward.1} parent=5 // pred_check_branch
        %394 = sbr.rel (%p391) target = $region72
      $region71: #{cifar10_forward.1} parent=5 // pred_region
        %s395 = ssub.s32 %s22, 1
        %p396 = scmp.lt.s32.totalorder %s27, 1
        %s397 = scalar_select %p396, %s27, 1
        %s398 = smul.addr %s397, 4
        %s399 = smul.addr %s398, 8
        %s400 = scalar_lea.vmem %s0, %s399
        %p401 = pneg %p48
        %p402 = pneg %p45
        %p403 = pneg %p69
        %p404 = pneg %p66
        %p405 = pneg %p90
        %p406 = pneg %p87
        %p407 = pneg %p111
        %p408 = pneg %p108
        %p409 = pneg %p132
        %p410 = pneg %p129
        %p411 = pneg %p153
        %p412 = pneg %p150
        %p413 = pneg %p174
        %p414 = pneg %p171
        %p415 = pneg %p195
        %p416 = pneg %p192
        %p417 = pneg %p216
        %p418 = pneg %p213
        %p419 = pneg %p237
        %p420 = pneg %p234
        %p421 = pneg %p258
        %p422 = pneg %p255
        %p423 = pneg %p279
        %p424 = pneg %p276
        %p425 = pneg %p300
        %p426 = pneg %p297
        %p427 = pneg %p326
        %p428 = pneg %p323
        %s429 = sand.u32 %s313, 1
        %s430 = scalar_lea.sflag [#allocation3], %s429
        %s431 = sand.u32 %s313, 1
        %s432 = scalar_lea.vmem [#allocation2], %s431
        %p433 = scmp.lt.s32.totalorder %s27, 1
        %s434 = scalar_select %p433, %s27, 1
        %s435 = smul.addr %s434, 4
        %s436 = smul.addr %s435, 8
        %s437 = scalar_lea.vmem %s0, %s436
        %v439 = vld [vmem:[%s437] sm:$0xff]
        %v440 = vld [vmem:[%s437 + $0x8] sm:$0xff]
        %v441 = vld [vmem:[%s437 + $0x10] sm:$0xff]
        %v442 = vld [vmem:[%s437 + $0x18] sm:$0xff]
        %v443 = vpack.c.bf16 %v440, %v439
        %v444 = vpack.c.bf16 %v442, %v441
        %v445 = vld [vmem:[%s1] sm:$0xff]
        %v446 = vld [vmem:[%s1 + $0x8] sm:$0xff]
        %v447 = vld [vmem:[%s1 + $0x10] sm:$0xff]
        %v448 = vld [vmem:[%s1 + $0x18] sm:$0xff]
        %v449 = vld [vmem:[%s1 + $0x20] sm:$0xff]
        %v450 = vld [vmem:[%s1 + $0x28] sm:$0xff]
        %v451 = vld [vmem:[%s1 + $0x30] sm:$0xff]
        %v452 = vld [vmem:[%s1 + $0x38] sm:$0xff]
        %v453 = vld [vmem:[%s1 + $0x40] sm:$0xff]
        %v454 = vld [vmem:[%s1 + $0x48] sm:$0xff]
        %v455 = vld [vmem:[%s1 + $0x50] sm:$0xff]
        %v456 = vld [vmem:[%s1 + $0x58] sm:$0xff]
        %v469 = vunpack.c.l.b16 %v445
        %v470 = vunpack.c.h.b16 %v445
        %v471 = vunpack.c.l.b16 %v446
        %v472 = vunpack.c.h.b16 %v446
        %v473 = vunpack.c.l.b16 %v447
        %v474 = vunpack.c.h.b16 %v447
        %v475 = vunpack.c.l.b16 %v448
        %v476 = vunpack.c.h.b16 %v448
        %v477 = vunpack.c.l.b16 %v449
        %v478 = vunpack.c.h.b16 %v449
        %v479 = vunpack.c.l.b16 %v450
        %v480 = vunpack.c.h.b16 %v450
        %v481 = vunpack.c.l.b16 %v451
        %v482 = vunpack.c.h.b16 %v451
        %v483 = vunpack.c.l.b16 %v452
        %v484 = vunpack.c.h.b16 %v452
        %v485 = vunpack.c.l.b16 %v453
        %v486 = vunpack.c.h.b16 %v453
        %v487 = vunpack.c.l.b16 %v454
        %v488 = vunpack.c.h.b16 %v454
        %v489 = vunpack.c.l.b16 %v455
        %v490 = vunpack.c.h.b16 %v455
        %v491 = vunpack.c.l.b16 %v456
        %v492 = vunpack.c.h.b16 %v456
        %v493 = vpack.c.b16 %v471, %v469
        %v494 = vpack.c.b16 %v472, %v470
        %v495 = vpack.c.b16 %v475, %v473
        %v496 = vpack.c.b16 %v476, %v474
        %v497 = vpack.c.b16 %v479, %v477
        %v498 = vpack.c.b16 %v480, %v478
        %v499 = vpack.c.b16 %v483, %v481
        %v500 = vpack.c.b16 %v484, %v482
        %v501 = vpack.c.b16 %v487, %v485
        %v502 = vpack.c.b16 %v488, %v486
        %v503 = vpack.c.b16 %v491, %v489
        %v504 = vpack.c.b16 %v492, %v490
        %vm517 = vcmask 785408
        %v519 = vsel %vm517, %v443, 0
        %v522 = vsel %vm517, %v444, 0
        %524 = vmatprep.subr.bf16.mxu0 %v494
        %525 = vmatpush1.bf16.msra.mxu0 %v493
        %526 = vmatprep.subr.bf16.mxu0 %v496
        %527 = vmatpush1.bf16.msra.mxu0 %v495
        %528 = vmatprep.subr.bf16.mxu0 %v498
        %529 = vmatpush1.bf16.msra.mxu0 %v497
        %530 = vmatprep.subr.bf16.mxu0 %v500
        %531 = vmatpush1.bf16.msra.mxu0 %v499
        %532 = vmatprep.subr.bf16.mxu0 %v502
        %533 = vmatpush1.bf16.msra.mxu0 %v501
        %534 = vmatprep.subr.bf16.mxu0 %v504
        %535 = vmatpush1.bf16.msra.mxu0 %v503
        %536 = vmatprep.subr.bf16.mxu0 0
        %537 = vmatpush1.bf16.msra.mxu0 0
        %538 = vmatprep.subr.bf16.mxu0 0
        %539 = vmatpush1.bf16.msra.mxu0 0
        %540 = vmatprep.subr.bf16.mxu0 0
        %541 = vmatpush1.bf16.msra.mxu0 0
        %542 = vmatprep.subr.bf16.mxu0 0
        %543 = vmatpush1.bf16.msra.mxu0 0
        %544 = vmatprep.subr.bf16.mxu0 0
        %545 = vmatpush1.bf16.msra.mxu0 0
        %546 = vmatprep.subr.bf16.mxu0 0
        %547 = vmatpush1.bf16.msra.mxu0 0
        %548 = vmatprep.subr.bf16.mxu0 0
        %549 = vmatpush1.bf16.msra.mxu0 0
        %550 = vmatprep.subr.bf16.mxu0 0
        %551 = vmatpush1.bf16.msra.mxu0 0
        %552 = vmatprep.subr.bf16.mxu0 0
        %553 = vmatpush1.bf16.msra.mxu0 0
        %554 = vmatprep.subr.bf16.mxu0 0
        %555 = vmatpush1.bf16.msra.mxu0 0
        %556 = vmatprep.mubr.bf16.mxu0 0
        %557 = vmatmul.mubr.bf16.gmra.mrb[0].mxu0 %v519
        %v558 = vpop.f32.mrb[0].mxu0
        %v559 = vadd.f32 0.0, %v558
        %v560 = vpop.f32.mrb[0].mxu0
        %v561 = vadd.f32 0.0, %v560
        %v562 = vpop.f32.mrb[0].mxu0
        %v563 = vadd.f32 0.0, %v562
        %v564 = vpop.f32.mrb[0].mxu0
        %v565 = vadd.f32 0.0, %v564
        %566 = vmatprep.mubr.bf16.mxu0 0
        %567 = vmatmul.mubr.bf16.gmra.mrb[0].mxu0 %v522
        %v568 = vpop.f32.mrb[0].mxu0
        %v569 = vadd.f32 0.0, %v568
        %v570 = vpop.f32.mrb[0].mxu0
        %v571 = vadd.f32 0.0, %v570
        %v572 = vpop.f32.mrb[0].mxu0
        %v573 = vadd.f32 0.0, %v572
        %v574 = vpop.f32.mrb[0].mxu0
        %v575 = vadd.f32 0.0, %v574
        %576 = vdwg.mxu0
        %s577 = scalar_lea.vmem %s1, 96
        %v578 = vld [vmem:[%s577] sm:$0xff]
        %v579 = vld [vmem:[%s577 + $0x8] sm:$0xff]
        %v580 = vld [vmem:[%s577 + $0x10] sm:$0xff]
        %v581 = vld [vmem:[%s577 + $0x18] sm:$0xff]
        %v582 = vld [vmem:[%s577 + $0x20] sm:$0xff]
        %v583 = vld [vmem:[%s577 + $0x28] sm:$0xff]
        %v584 = vld [vmem:[%s577 + $0x30] sm:$0xff]
        %v585 = vld [vmem:[%s577 + $0x38] sm:$0xff]
        %v586 = vld [vmem:[%s577 + $0x40] sm:$0xff]
        %v587 = vld [vmem:[%s577 + $0x48] sm:$0xff]
        %v588 = vld [vmem:[%s577 + $0x50] sm:$0xff]
        %v589 = vld [vmem:[%s577 + $0x58] sm:$0xff]
        %v602 = vunpack.c.l.b16 %v578
        %v603 = vunpack.c.h.b16 %v578
        %v604 = vunpack.c.l.b16 %v579
        %v605 = vunpack.c.h.b16 %v579
        %v606 = vunpack.c.l.b16 %v580
        %v607 = vunpack.c.h.b16 %v580
        %v608 = vunpack.c.l.b16 %v581
        %v609 = vunpack.c.h.b16 %v581
        %v610 = vunpack.c.l.b16 %v582
        %v611 = vunpack.c.h.b16 %v582
        %v612 = vunpack.c.l.b16 %v583
        %v613 = vunpack.c.h.b16 %v583
        %v614 = vunpack.c.l.b16 %v584
        %v615 = vunpack.c.h.b16 %v584
        %v616 = vunpack.c.l.b16 %v585
        %v617 = vunpack.c.h.b16 %v585
        %v618 = vunpack.c.l.b16 %v586
        %v619 = vunpack.c.h.b16 %v586
        %v620 = vunpack.c.l.b16 %v587
        %v621 = vunpack.c.h.b16 %v587
        %v622 = vunpack.c.l.b16 %v588
        %v623 = vunpack.c.h.b16 %v588
        %v624 = vunpack.c.l.b16 %v589
        %v625 = vunpack.c.h.b16 %v589
        %v626 = vpack.c.b16 %v604, %v602
        %v627 = vpack.c.b16 %v605, %v603
        %v628 = vpack.c.b16 %v608, %v606
        %v629 = vpack.c.b16 %v609, %v607
        %v630 = vpack.c.b16 %v612, %v610
        %v631 = vpack.c.b16 %v613, %v611
        %v632 = vpack.c.b16 %v616, %v614
        %v633 = vpack.c.b16 %v617, %v615
        %v634 = vpack.c.b16 %v620, %v618
        %v635 = vpack.c.b16 %v621, %v619
        %v636 = vpack.c.b16 %v624, %v622
        %v637 = vpack.c.b16 %v625, %v623
        %650 = vmatprep.subr.bf16.mxu0 %v627
        %651 = vmatpush1.bf16.msra.mxu0 %v626
        %652 = vmatprep.subr.bf16.mxu0 %v629
        %653 = vmatpush1.bf16.msra.mxu0 %v628
        %654 = vmatprep.subr.bf16.mxu0 %v631
        %655 = vmatpush1.bf16.msra.mxu0 %v630
        %656 = vmatprep.subr.bf16.mxu0 %v633
        %657 = vmatpush1.bf16.msra.mxu0 %v632
        %658 = vmatprep.subr.bf16.mxu0 %v635
        %659 = vmatpush1.bf16.msra.mxu0 %v634
        %660 = vmatprep.subr.bf16.mxu0 %v637
        %661 = vmatpush1.bf16.msra.mxu0 %v636
        %662 = vmatprep.subr.bf16.mxu0 0
        %663 = vmatpush1.bf16.msra.mxu0 0
        %664 = vmatprep.subr.bf16.mxu0 0
        %665 = vmatpush1.bf16.msra.mxu0 0
        %666 = vmatprep.subr.bf16.mxu0 0
        %667 = vmatpush1.bf16.msra.mxu0 0
        %668 = vmatprep.subr.bf16.mxu0 0
        %669 = vmatpush1.bf16.msra.mxu0 0
        %670 = vmatprep.subr.bf16.mxu0 0
        %671 = vmatpush1.bf16.msra.mxu0 0
        %672 = vmatprep.subr.bf16.mxu0 0
        %673 = vmatpush1.bf16.msra.mxu0 0
        %674 = vmatprep.subr.bf16.mxu0 0
        %675 = vmatpush1.bf16.msra.mxu0 0
        %676 = vmatprep.subr.bf16.mxu0 0
        %677 = vmatpush1.bf16.msra.mxu0 0
        %678 = vmatprep.subr.bf16.mxu0 0
        %679 = vmatpush1.bf16.msra.mxu0 0
        %680 = vmatprep.subr.bf16.mxu0 0
        %681 = vmatpush1.bf16.msra.mxu0 0
        %682 = vmatprep.mubr.bf16.mxu0 0
        %683 = vmatmul.mubr.bf16.gmra.mrb[0].mxu0 %v519
        %v684 = vpop.f32.mrb[0].mxu0
        %v685 = vadd.f32 0.0, %v684
        %v686 = vpop.f32.mrb[0].mxu0
        %v687 = vadd.f32 0.0, %v686
        %v688 = vpop.f32.mrb[0].mxu0
        %v689 = vadd.f32 0.0, %v688
        %v690 = vpop.f32.mrb[0].mxu0
        %v691 = vadd.f32 0.0, %v690
        %692 = vmatprep.mubr.bf16.mxu0 0
        %693 = vmatmul.mubr.bf16.gmra.mrb[0].mxu0 %v522
        %v694 = vpop.f32.mrb[0].mxu0
        %v695 = vadd.f32 0.0, %v694
        %v696 = vpop.f32.mrb[0].mxu0
        %v697 = vadd.f32 0.0, %v696
        %v698 = vpop.f32.mrb[0].mxu0
        %v699 = vadd.f32 0.0, %v698
        %v700 = vpop.f32.mrb[0].mxu0
        %v701 = vadd.f32 0.0, %v700
        %702 = vdwg.mxu0
        %vm711 = vcmask 1046528
        %v712 = vrot.slane %v685, 1
        %v713 = vrot.slane %v689, 1
        %v714 = vsel %vm711, %v712, %v713
        %v715 = vrot.slane %v687, 1
        %v716 = vrot.slane %v691, 1
        %v717 = vsel %vm711, %v715, %v716
        %v718 = vrot.slane %v695, 1
        %v719 = vsel %vm711, %v713, %v718
        %v720 = vrot.slane %v697, 1
        %v721 = vsel %vm711, %v716, %v720
        %v722 = vrot.slane %v699, 1
        %v723 = vsel %vm711, %v718, %v722
        %v724 = vrot.slane %v701, 1
        %v725 = vsel %vm711, %v720, %v724
        %v734 = vadd.f32 %v559, %v714
        %v735 = vadd.f32 %v561, %v717
        %v736 = vadd.f32 %v563, %v719
        %v737 = vadd.f32 %v565, %v721
        %v738 = vadd.f32 %v569, %v723
        %v739 = vadd.f32 %v571, %v725
        %v740 = vadd.f32 %v573, %v722
        %v741 = vadd.f32 %v575, %v724
        %s742 = scalar_lea.vmem %s1, 192
        %v743 = vld [vmem:[%s742] sm:$0xff]
        %v744 = vld [vmem:[%s742 + $0x8] sm:$0xff]
        %v745 = vld [vmem:[%s742 + $0x10] sm:$0xff]
        %v746 = vld [vmem:[%s742 + $0x18] sm:$0xff]
        %v747 = vld [vmem:[%s742 + $0x20] sm:$0xff]
        %v748 = vld [vmem:[%s742 + $0x28] sm:$0xff]
        %v749 = vld [vmem:[%s742 + $0x30] sm:$0xff]
        %v750 = vld [vmem:[%s742 + $0x38] sm:$0xff]
        %v751 = vld [vmem:[%s742 + $0x40] sm:$0xff]
        %v752 = vld [vmem:[%s742 + $0x48] sm:$0xff]
        %v753 = vld [vmem:[%s742 + $0x50] sm:$0xff]
        %v754 = vld [vmem:[%s742 + $0x58] sm:$0xff]
        %v767 = vunpack.c.l.b16 %v743
        %v768 = vunpack.c.h.b16 %v743
        %v769 = vunpack.c.l.b16 %v744
        %v770 = vunpack.c.h.b16 %v744
        %v771 = vunpack.c.l.b16 %v745
        %v772 = vunpack.c.h.b16 %v745
        %v773 = vunpack.c.l.b16 %v746
        %v774 = vunpack.c.h.b16 %v746
        %v775 = vunpack.c.l.b16 %v747
        %v776 = vunpack.c.h.b16 %v747
        %v777 = vunpack.c.l.b16 %v748
        %v778 = vunpack.c.h.b16 %v748
        %v779 = vunpack.c.l.b16 %v749
        %v780 = vunpack.c.h.b16 %v749
        %v781 = vunpack.c.l.b16 %v750
        %v782 = vunpack.c.h.b16 %v750
        %v783 = vunpack.c.l.b16 %v751
        %v784 = vunpack.c.h.b16 %v751
        %v785 = vunpack.c.l.b16 %v752
        %v786 = vunpack.c.h.b16 %v752
        %v787 = vunpack.c.l.b16 %v753
        %v788 = vunpack.c.h.b16 %v753
        %v789 = vunpack.c.l.b16 %v754
        %v790 = vunpack.c.h.b16 %v754
        %v791 = vpack.c.b16 %v769, %v767
        %v792 = vpack.c.b16 %v770, %v768
        %v793 = vpack.c.b16 %v773, %v771
        %v794 = vpack.c.b16 %v774, %v772
        %v795 = vpack.c.b16 %v777, %v775
        %v796 = vpack.c.b16 %v778, %v776
        %v797 = vpack.c.b16 %v781, %v779
        %v798 = vpack.c.b16 %v782, %v780
        %v799 = vpack.c.b16 %v785, %v783
        %v800 = vpack.c.b16 %v786, %v784
        %v801 = vpack.c.b16 %v789, %v787
        %v802 = vpack.c.b16 %v790, %v788
        %815 = vmatprep.subr.bf16.mxu0 %v792
        %816 = vmatpush1.bf16.msra.mxu0 %v791
        %817 = vmatprep.subr.bf16.mxu0 %v794
        %818 = vmatpush1.bf16.msra.mxu0 %v793
        %819 = vmatprep.subr.bf16.mxu0 %v796
        %820 = vmatpush1.bf16.msra.mxu0 %v795
        %821 = vmatprep.subr.bf16.mxu0 %v798
        %822 = vmatpush1.bf16.msra.mxu0 %v797
        %823 = vmatprep.subr.bf16.mxu0 %v800
        %824 = vmatpush1.bf16.msra.mxu0 %v799
        %825 = vmatprep.subr.bf16.mxu0 %v802
        %826 = vmatpush1.bf16.msra.mxu0 %v801
        %827 = vmatprep.subr.bf16.mxu0 0
        %828 = vmatpush1.bf16.msra.mxu0 0
        %829 = vmatprep.subr.bf16.mxu0 0
        %830 = vmatpush1.bf16.msra.mxu0 0
        %831 = vmatprep.subr.bf16.mxu0 0
        %832 = vmatpush1.bf16.msra.mxu0 0
        %833 = vmatprep.subr.bf16.mxu0 0
        %834 = vmatpush1.bf16.msra.mxu0 0
        %835 = vmatprep.subr.bf16.mxu0 0
        %836 = vmatpush1.bf16.msra.mxu0 0
        %837 = vmatprep.subr.bf16.mxu0 0
        %838 = vmatpush1.bf16.msra.mxu0 0
        %839 = vmatprep.subr.bf16.mxu0 0
        %840 = vmatpush1.bf16.msra.mxu0 0
        %841 = vmatprep.subr.bf16.mxu0 0
        %842 = vmatpush1.bf16.msra.mxu0 0
        %843 = vmatprep.subr.bf16.mxu0 0
        %844 = vmatpush1.bf16.msra.mxu0 0
        %845 = vmatprep.subr.bf16.mxu0 0
        %846 = vmatpush1.bf16.msra.mxu0 0
        %847 = vmatprep.mubr.bf16.mxu0 0
        %848 = vmatmul.mubr.bf16.gmra.mrb[0].mxu0 %v519
        %v849 = vpop.f32.mrb[0].mxu0
        %v850 = vadd.f32 0.0, %v849
        %v851 = vpop.f32.mrb[0].mxu0
        %v852 = vadd.f32 0.0, %v851
        %v853 = vpop.f32.mrb[0].mxu0
        %v854 = vadd.f32 0.0, %v853
        %v855 = vpop.f32.mrb[0].mxu0
        %v856 = vadd.f32 0.0, %v855
        %857 = vmatprep.mubr.bf16.mxu0 0
        %858 = vmatmul.mubr.bf16.gmra.mrb[0].mxu0 %v522
        %v859 = vpop.f32.mrb[0].mxu0
        %v860 = vadd.f32 0.0, %v859
        %v861 = vpop.f32.mrb[0].mxu0
        %v862 = vadd.f32 0.0, %v861
        %v863 = vpop.f32.mrb[0].mxu0
        %v864 = vadd.f32 0.0, %v863
        %v865 = vpop.f32.mrb[0].mxu0
        %v866 = vadd.f32 0.0, %v865
        %867 = vdwg.mxu0
        %vm876 = vcmask 1045504
        %v877 = vrot.slane %v850, 2
        %v878 = vrot.slane %v854, 2
        %v879 = vsel %vm876, %v877, %v878
        %v880 = vrot.slane %v852, 2
        %v881 = vrot.slane %v856, 2
        %v882 = vsel %vm876, %v880, %v881
        %v883 = vrot.slane %v860, 2
        %v884 = vsel %vm876, %v878, %v883
        %v885 = vrot.slane %v862, 2
        %v886 = vsel %vm876, %v881, %v885
        %v887 = vrot.slane %v864, 2
        %v888 = vsel %vm876, %v883, %v887
        %v889 = vrot.slane %v866, 2
        %v890 = vsel %vm876, %v885, %v889
        %v899 = vadd.f32 %v734, %v879
        %v900 = vadd.f32 %v735, %v882
        %v901 = vadd.f32 %v736, %v884
        %v902 = vadd.f32 %v737, %v886
        %v903 = vadd.f32 %v738, %v888
        %v904 = vadd.f32 %v739, %v890
        %v905 = vadd.f32 %v740, %v887
        %v906 = vadd.f32 %v741, %v889
        %s907 = scalar_lea.vmem %s1, 288
        %v908 = vld [vmem:[%s907] sm:$0xff]
        %v909 = vld [vmem:[%s907 + $0x8] sm:$0xff]
        %v910 = vld [vmem:[%s907 + $0x10] sm:$0xff]
        %v911 = vld [vmem:[%s907 + $0x18] sm:$0xff]
        %v912 = vld [vmem:[%s907 + $0x20] sm:$0xff]
        %v913 = vld [vmem:[%s907 + $0x28] sm:$0xff]
        %v914 = vld [vmem:[%s907 + $0x30] sm:$0xff]
        %v915 = vld [vmem:[%s907 + $0x38] sm:$0xff]
        %v916 = vld [vmem:[%s907 + $0x40] sm:$0xff]
        %v917 = vld [vmem:[%s907 + $0x48] sm:$0xff]
        %v918 = vld [vmem:[%s907 + $0x50] sm:$0xff]
        %v919 = vld [vmem:[%s907 + $0x58] sm:$0xff]
        %v932 = vunpack.c.l.b16 %v908
        %v933 = vunpack.c.h.b16 %v908
        %v934 = vunpack.c.l.b16 %v909
        %v935 = vunpack.c.h.b16 %v909
        %v936 = vunpack.c.l.b16 %v910
        %v937 = vunpack.c.h.b16 %v910
        %v938 = vunpack.c.l.b16 %v911
        %v939 = vunpack.c.h.b16 %v911
        %v940 = vunpack.c.l.b16 %v912
        %v941 = vunpack.c.h.b16 %v912
        %v942 = vunpack.c.l.b16 %v913
        %v943 = vunpack.c.h.b16 %v913
        %v944 = vunpack.c.l.b16 %v914
        %v945 = vunpack.c.h.b16 %v914
        %v946 = vunpack.c.l.b16 %v915
        %v947 = vunpack.c.h.b16 %v915
        %v948 = vunpack.c.l.b16 %v916
        %v949 = vunpack.c.h.b16 %v916
        %v950 = vunpack.c.l.b16 %v917
        %v951 = vunpack.c.h.b16 %v917
        %v952 = vunpack.c.l.b16 %v918
        %v953 = vunpack.c.h.b16 %v918
        %v954 = vunpack.c.l.b16 %v919
        %v955 = vunpack.c.h.b16 %v919
        %v956 = vpack.c.b16 %v934, %v932
        %v957 = vpack.c.b16 %v935, %v933
        %v958 = vpack.c.b16 %v938, %v936
        %v959 = vpack.c.b16 %v939, %v937
        %v960 = vpack.c.b16 %v942, %v940
        %v961 = vpack.c.b16 %v943, %v941
        %v962 = vpack.c.b16 %v946, %v944
        %v963 = vpack.c.b16 %v947, %v945
        %v964 = vpack.c.b16 %v950, %v948
        %v965 = vpack.c.b16 %v951, %v949
        %v966 = vpack.c.b16 %v954, %v952
        %v967 = vpack.c.b16 %v955, %v953
        %980 = vmatprep.subr.bf16.mxu0 %v957
        %981 = vmatpush1.bf16.msra.mxu0 %v956
        %982 = vmatprep.subr.bf16.mxu0 %v959
        %983 = vmatpush1.bf16.msra.mxu0 %v958
        %984 = vmatprep.subr.bf16.mxu0 %v961
        %985 = vmatpush1.bf16.msra.mxu0 %v960
        %986 = vmatprep.subr.bf16.mxu0 %v963
        %987 = vmatpush1.bf16.msra.mxu0 %v962
        %988 = vmatprep.subr.bf16.mxu0 %v965
        %989 = vmatpush1.bf16.msra.mxu0 %v964
        %990 = vmatprep.subr.bf16.mxu0 %v967
        %991 = vmatpush1.bf16.msra.mxu0 %v966
        %992 = vmatprep.subr.bf16.mxu0 0
        %993 = vmatpush1.bf16.msra.mxu0 0
        %994 = vmatprep.subr.bf16.mxu0 0
        %995 = vmatpush1.bf16.msra.mxu0 0
        %996 = vmatprep.subr.bf16.mxu0 0
        %997 = vmatpush1.bf16.msra.mxu0 0
        %998 = vmatprep.subr.bf16.mxu0 0
        %999 = vmatpush1.bf16.msra.mxu0 0
        %1000 = vmatprep.subr.bf16.mxu0 0
        %1001 = vmatpush1.bf16.msra.mxu0 0
        %1002 = vmatprep.subr.bf16.mxu0 0
        %1003 = vmatpush1.bf16.msra.mxu0 0
        %1004 = vmatprep.subr.bf16.mxu0 0
        %1005 = vmatpush1.bf16.msra.mxu0 0
        %1006 = vmatprep.subr.bf16.mxu0 0
        %1007 = vmatpush1.bf16.msra.mxu0 0
        %1008 = vmatprep.subr.bf16.mxu0 0
        %1009 = vmatpush1.bf16.msra.mxu0 0
        %1010 = vmatprep.subr.bf16.mxu0 0
        %1011 = vmatpush1.bf16.msra.mxu0 0
        %1012 = vmatprep.mubr.bf16.mxu0 0
        %1013 = vmatmul.mubr.bf16.gmra.mrb[0].mxu0 %v519
        %v1014 = vpop.f32.mrb[0].mxu0
        %v1015 = vadd.f32 0.0, %v1014
        %v1016 = vpop.f32.mrb[0].mxu0
        %v1017 = vadd.f32 0.0, %v1016
        %v1018 = vpop.f32.mrb[0].mxu0
        %v1019 = vadd.f32 0.0, %v1018
        %v1020 = vpop.f32.mrb[0].mxu0
        %v1021 = vadd.f32 0.0, %v1020
        %1022 = vmatprep.mubr.bf16.mxu0 0
        %1023 = vmatmul.mubr.bf16.gmra.mrb[0].mxu0 %v522
        %v1024 = vpop.f32.mrb[0].mxu0
        %v1025 = vadd.f32 0.0, %v1024
        %v1026 = vpop.f32.mrb[0].mxu0
        %v1027 = vadd.f32 0.0, %v1026
        %v1028 = vpop.f32.mrb[0].mxu0
        %v1029 = vadd.f32 0.0, %v1028
        %v1030 = vpop.f32.mrb[0].mxu0
        %v1031 = vadd.f32 0.0, %v1030
        %1032 = vdwg.mxu0
        %vm1041 = vcmask 1044480
        %v1042 = vrot.slane %v1015, 3
        %v1043 = vrot.slane %v1019, 3
        %v1044 = vsel %vm1041, %v1042, %v1043
        %v1045 = vrot.slane %v1017, 3
        %v1046 = vrot.slane %v1021, 3
        %v1047 = vsel %vm1041, %v1045, %v1046
        %v1048 = vrot.slane %v1025, 3
        %v1049 = vsel %vm1041, %v1043, %v1048
        %v1050 = vrot.slane %v1027, 3
        %v1051 = vsel %vm1041, %v1046, %v1050
        %v1052 = vrot.slane %v1029, 3
        %v1053 = vsel %vm1041, %v1048, %v1052
        %v1054 = vrot.slane %v1031, 3
        %v1055 = vsel %vm1041, %v1050, %v1054
        %v1064 = vadd.f32 %v899, %v1044
        %v1065 = vadd.f32 %v900, %v1047
        %v1066 = vadd.f32 %v901, %v1049
        %v1067 = vadd.f32 %v902, %v1051
        %v1068 = vadd.f32 %v903, %v1053
        %v1069 = vadd.f32 %v904, %v1055
        %v1070 = vadd.f32 %v905, %v1052
        %v1071 = vadd.f32 %v906, %v1054
        %s1072 = scalar_lea.vmem %s1, 384
        %v1073 = vld [vmem:[%s1072] sm:$0xff]
        %v1074 = vld [vmem:[%s1072 + $0x8] sm:$0xff]
        %v1075 = vld [vmem:[%s1072 + $0x10] sm:$0xff]
        %v1076 = vld [vmem:[%s1072 + $0x18] sm:$0xff]
        %v1077 = vld [vmem:[%s1072 + $0x20] sm:$0xff]
        %v1078 = vld [vmem:[%s1072 + $0x28] sm:$0xff]
        %v1079 = vld [vmem:[%s1072 + $0x30] sm:$0xff]
        %v1080 = vld [vmem:[%s1072 + $0x38] sm:$0xff]
        %v1081 = vld [vmem:[%s1072 + $0x40] sm:$0xff]
        %v1082 = vld [vmem:[%s1072 + $0x48] sm:$0xff]
        %v1083 = vld [vmem:[%s1072 + $0x50] sm:$0xff]
        %v1084 = vld [vmem:[%s1072 + $0x58] sm:$0xff]
        %v1097 = vunpack.c.l.b16 %v1073
        %v1098 = vunpack.c.h.b16 %v1073
        %v1099 = vunpack.c.l.b16 %v1074
        %v1100 = vunpack.c.h.b16 %v1074
        %v1101 = vunpack.c.l.b16 %v1075
        %v1102 = vunpack.c.h.b16 %v1075
        %v1103 = vunpack.c.l.b16 %v1076
        %v1104 = vunpack.c.h.b16 %v1076
        %v1105 = vunpack.c.l.b16 %v1077
        %v1106 = vunpack.c.h.b16 %v1077
        %v1107 = vunpack.c.l.b16 %v1078
        %v1108 = vunpack.c.h.b16 %v1078
        %v1109 = vunpack.c.l.b16 %v1079
        %v1110 = vunpack.c.h.b16 %v1079
        %v1111 = vunpack.c.l.b16 %v1080
        %v1112 = vunpack.c.h.b16 %v1080
        %v1113 = vunpack.c.l.b16 %v1081
        %v1114 = vunpack.c.h.b16 %v1081
        %v1115 = vunpack.c.l.b16 %v1082
        %v1116 = vunpack.c.h.b16 %v1082
        %v1117 = vunpack.c.l.b16 %v1083
        %v1118 = vunpack.c.h.b16 %v1083
        %v1119 = vunpack.c.l.b16 %v1084
        %v1120 = vunpack.c.h.b16 %v1084
        %v1121 = vpack.c.b16 %v1099, %v1097
        %v1122 = vpack.c.b16 %v1100, %v1098
        %v1123 = vpack.c.b16 %v1103, %v1101
        %v1124 = vpack.c.b16 %v1104, %v1102
        %v1125 = vpack.c.b16 %v1107, %v1105
        %v1126 = vpack.c.b16 %v1108, %v1106
        %v1127 = vpack.c.b16 %v1111, %v1109
        %v1128 = vpack.c.b16 %v1112, %v1110
        %v1129 = vpack.c.b16 %v1115, %v1113
        %v1130 = vpack.c.b16 %v1116, %v1114
        %v1131 = vpack.c.b16 %v1119, %v1117
        %v1132 = vpack.c.b16 %v1120, %v1118
        %1145 = vmatprep.subr.bf16.mxu0 %v1122
        %1146 = vmatpush1.bf16.msra.mxu0 %v1121
        %1147 = vmatprep.subr.bf16.mxu0 %v1124
        %1148 = vmatpush1.bf16.msra.mxu0 %v1123
        %1149 = vmatprep.subr.bf16.mxu0 %v1126
        %1150 = vmatpush1.bf16.msra.mxu0 %v1125
        %1151 = vmatprep.subr.bf16.mxu0 %v1128
        %1152 = vmatpush1.bf16.msra.mxu0 %v1127
        %1153 = vmatprep.subr.bf16.mxu0 %v1130
        %1154 = vmatpush1.bf16.msra.mxu0 %v1129
        %1155 = vmatprep.subr.bf16.mxu0 %v1132
        %1156 = vmatpush1.bf16.msra.mxu0 %v1131
        %1157 = vmatprep.subr.bf16.mxu0 0
        %1158 = vmatpush1.bf16.msra.mxu0 0
        %1159 = vmatprep.subr.bf16.mxu0 0
        %1160 = vmatpush1.bf16.msra.mxu0 0
        %1161 = vmatprep.subr.bf16.mxu0 0
        %1162 = vmatpush1.bf16.msra.mxu0 0
        %1163 = vmatprep.subr.bf16.mxu0 0
        %1164 = vmatpush1.bf16.msra.mxu0 0
        %1165 = vmatprep.subr.bf16.mxu0 0
        %1166 = vmatpush1.bf16.msra.mxu0 0
        %1167 = vmatprep.subr.bf16.mxu0 0
        %1168 = vmatpush1.bf16.msra.mxu0 0
        %1169 = vmatprep.subr.bf16.mxu0 0
        %1170 = vmatpush1.bf16.msra.mxu0 0
        %1171 = vmatprep.subr.bf16.mxu0 0
        %1172 = vmatpush1.bf16.msra.mxu0 0
        %1173 = vmatprep.subr.bf16.mxu0 0
        %1174 = vmatpush1.bf16.msra.mxu0 0
        %1175 = vmatprep.subr.bf16.mxu0 0
        %1176 = vmatpush1.bf16.msra.mxu0 0
        %1177 = vmatprep.mubr.bf16.mxu0 0
        %1178 = vmatmul.mubr.bf16.gmra.mrb[0].mxu0 %v519
        %v1179 = vpop.f32.mrb[0].mxu0
        %v1180 = vadd.f32 0.0, %v1179
        %v1181 = vpop.f32.mrb[0].mxu0
        %v1182 = vadd.f32 0.0, %v1181
        %v1183 = vpop.f32.mrb[0].mxu0
        %v1184 = vadd.f32 0.0, %v1183
        %v1185 = vpop.f32.mrb[0].mxu0
        %v1186 = vadd.f32 0.0, %v1185
        %1187 = vmatprep.mubr.bf16.mxu0 0
        %1188 = vmatmul.mubr.bf16.gmra.mrb[0].mxu0 %v522
        %v1189 = vpop.f32.mrb[0].mxu0
        %v1190 = vadd.f32 0.0, %v1189
        %v1191 = vpop.f32.mrb[0].mxu0
        %v1192 = vadd.f32 0.0, %v1191
        %v1193 = vpop.f32.mrb[0].mxu0
        %v1194 = vadd.f32 0.0, %v1193
        %v1195 = vpop.f32.mrb[0].mxu0
        %v1196 = vadd.f32 0.0, %v1195
        %1197 = vdwg.mxu0
        %vm1206 = vcmask 1043456
        %v1207 = vrot.slane %v1180, 4
        %v1208 = vrot.slane %v1184, 4
        %v1209 = vsel %vm1206, %v1207, %v1208
        %v1210 = vrot.slane %v1182, 4
        %v1211 = vrot.slane %v1186, 4
        %v1212 = vsel %vm1206, %v1210, %v1211
        %v1213 = vrot.slane %v1190, 4
        %v1214 = vsel %vm1206, %v1208, %v1213
        %v1215 = vrot.slane %v1192, 4
        %v1216 = vsel %vm1206, %v1211, %v1215
        %v1217 = vrot.slane %v1194, 4
        %v1218 = vsel %vm1206, %v1213, %v1217
        %v1219 = vrot.slane %v1196, 4
        %v1220 = vsel %vm1206, %v1215, %v1219
        %v1229 = vadd.f32 %v1064, %v1209
        %v1230 = vadd.f32 %v1065, %v1212
        %v1231 = vadd.f32 %v1066, %v1214
        %v1232 = vadd.f32 %v1067, %v1216
        %v1233 = vadd.f32 %v1068, %v1218
        %v1234 = vadd.f32 %v1069, %v1220
        %v1235 = vadd.f32 %v1070, %v1217
        %v1236 = vadd.f32 %v1071, %v1219
        %v1237 = vld [vmem:[%s2] sm:$0x3]
        %v1239 = vlaneseq
        %v1240 = vshrl.u32 %v1239, 7
        %v1241 = vsub.s32 0, %v1240
        %v1242 = vrot.slane %v1237, %v1241
        %v1243 = vlaneseq
        %v1244 = vshrl.u32 %v1243, 7
        %v1245 = vsub.s32 1, %v1244
        %v1246 = vrot.slane %v1237, %v1245
        %v1249 = vadd.f32 %v1229, %v1242
        %v1250 = vadd.f32 %v1230, %v1246
        %v1251 = vadd.f32 %v1231, %v1242
        %v1252 = vadd.f32 %v1232, %v1246
        %v1253 = vadd.f32 %v1233, %v1242
        %v1254 = vadd.f32 %v1234, %v1246
        %v1255 = vadd.f32 %v1235, %v1242
        %v1256 = vadd.f32 %v1236, %v1246
        %v1257 = vmax.f32 %v1249, 0.0
        %v1258 = vmax.f32 %v1250, 0.0
        %v1259 = vmax.f32 %v1251, 0.0
        %v1260 = vmax.f32 %v1252, 0.0
        %v1261 = vmax.f32 %v1253, 0.0
        %v1262 = vmax.f32 %v1254, 0.0
        %v1263 = vmax.f32 %v1255, 0.0
        %v1264 = vmax.f32 %v1256, 0.0
        %v1273 = vrot.slane %v1257, 1
        %v1274 = vrot.slane %v1259, 1
        %v1275 = vsel %vm711, %v1273, %v1274
        %v1276 = vrot.slane %v1258, 1
        %v1277 = vrot.slane %v1260, 1
        %v1278 = vsel %vm711, %v1276, %v1277
        %v1279 = vrot.slane %v1261, 1
        %v1280 = vsel %vm711, %v1274, %v1279
        %v1281 = vrot.slane %v1262, 1
        %v1282 = vsel %vm711, %v1277, %v1281
        %v1283 = vrot.slane %v1263, 1
        %v1284 = vsel %vm711, %v1279, %v1283
        %v1285 = vrot.slane %v1264, 1
        %v1286 = vsel %vm711, %v1281, %v1285
        %v1295 = vmax.f32 %v1257, %v1275
        %v1296 = vmax.f32 %v1258, %v1278
        %v1297 = vmax.f32 %v1259, %v1280
        %v1298 = vmax.f32 %v1260, %v1282
        %v1299 = vmax.f32 %v1261, %v1284
        %v1300 = vmax.f32 %v1262, %v1286
        %v1301 = vmax.f32 %v1263, %v1283
        %v1302 = vmax.f32 %v1264, %v1285
        %1311 = vrot.lane.b32.xlu0 %v1295, 122
        %v1312 = vpop.permute.xlu0 %1311
        %1313 = vrot.lane.b32.xlu0 %v1296, 122
        %v1314 = vpop.permute.xlu0 %1313
        %1315 = vrot.lane.b32.xlu0 %v1297, 122
        %v1316 = vpop.permute.xlu0 %1315
        %1317 = vrot.lane.b32.xlu0 %v1298, 122
        %v1318 = vpop.permute.xlu0 %1317
        %1319 = vrot.lane.b32.xlu0 %v1299, 122
        %v1320 = vpop.permute.xlu0 %1319
        %1321 = vrot.lane.b32.xlu0 %v1300, 122
        %v1322 = vpop.permute.xlu0 %1321
        %1323 = vrot.lane.b32.xlu0 %v1301, 122
        %v1324 = vpop.permute.xlu0 %1323
        %1325 = vrot.lane.b32.xlu0 %v1302, 122
        %v1326 = vpop.permute.xlu0 %1325
        %vm1327 = vcmask 998400
        %v1328 = vsel %vm1327, %v1312, %v1314
        %v1329 = vsel %vm1327, %v1316, %v1318
        %v1330 = vsel %vm1327, %v1320, %v1322
        %v1331 = vsel %vm1327, %v1324, %v1326
        %v1340 = vmax.f32 %v1295, %v1328
        %v1341 = vmax.f32 %v1296, %v1314
        %v1342 = vmax.f32 %v1297, %v1329
        %v1343 = vmax.f32 %v1298, %v1318
        %v1344 = vmax.f32 %v1299, %v1330
        %v1345 = vmax.f32 %v1300, %v1322
        %v1346 = vmax.f32 %v1301, %v1331
        %v1347 = vmax.f32 %v1302, %v1326
        %v1348 = vpack.c.bf16 %v1342, %v1340
        %v1349 = vpack.c.bf16 %v1343, %v1341
        %v1350 = vpack.c.bf16 %v1344, %v1344
        %v1351 = vpack.c.bf16 %v1345, %v1345
        %v1352 = vld [vmem:[%s3] sm:$0xff]
        %v1353 = vld [vmem:[%s3 + $0x8] sm:$0xff]
        %v1354 = vld [vmem:[%s3 + $0x10] sm:$0xff]
        %v1355 = vld [vmem:[%s3 + $0x18] sm:$0xff]
        %v1356 = vld [vmem:[%s3 + $0x20] sm:$0xff]
        %v1357 = vld [vmem:[%s3 + $0x28] sm:$0xff]
        %v1358 = vld [vmem:[%s3 + $0x30] sm:$0xff]
        %v1359 = vld [vmem:[%s3 + $0x38] sm:$0xff]
        %v1360 = vld [vmem:[%s3 + $0x40] sm:$0xff]
        %v1361 = vld [vmem:[%s3 + $0x48] sm:$0xff]
        %v1362 = vld [vmem:[%s3 + $0x50] sm:$0xff]
        %v1363 = vld [vmem:[%s3 + $0x58] sm:$0xff]
        %v1364 = vld [vmem:[%s3 + $0x60] sm:$0xff]
        %v1365 = vld [vmem:[%s3 + $0x68] sm:$0xff]
        %v1366 = vld [vmem:[%s3 + $0x70] sm:$0xff]
        %v1367 = vld [vmem:[%s3 + $0x78] sm:$0xff]
        %v1368 = vld [vmem:[%s3 + $0x80] sm:$0xff]
        %v1369 = vld [vmem:[%s3 + $0x88] sm:$0xff]
        %v1370 = vld [vmem:[%s3 + $0x90] sm:$0xff]
        %v1371 = vld [vmem:[%s3 + $0x98] sm:$0xff]
        %v1372 = vld [vmem:[%s3 + $0xa0] sm:$0x11]
        %s1373 = scalar_lea.vmem %s3, 168
        %v1374 = vld [vmem:[%s1373] sm:$0xff]
        %v1375 = vld [vmem:[%s1373 + $0x8] sm:$0xff]
        %v1376 = vld [vmem:[%s1373 + $0x10] sm:$0xff]
        %v1377 = vld [vmem:[%s1373 + $0x18] sm:$0xff]
        %v1378 = vld [vmem:[%s1373 + $0x20] sm:$0xff]
        %v1379 = vld [vmem:[%s1373 + $0x28] sm:$0xff]
        %v1380 = vld [vmem:[%s1373 + $0x30] sm:$0xff]
        %v1381 = vld [vmem:[%s1373 + $0x38] sm:$0xff]
        %v1382 = vld [vmem:[%s1373 + $0x40] sm:$0xff]
        %v1383 = vld [vmem:[%s1373 + $0x48] sm:$0xff]
        %v1384 = vld [vmem:[%s1373 + $0x50] sm:$0xff]
        %v1385 = vld [vmem:[%s1373 + $0x58] sm:$0xff]
        %v1386 = vld [vmem:[%s1373 + $0x60] sm:$0xff]
        %v1387 = vld [vmem:[%s1373 + $0x68] sm:$0xff]
        %v1388 = vld [vmem:[%s1373 + $0x70] sm:$0xff]
        %v1389 = vld [vmem:[%s1373 + $0x78] sm:$0xff]
        %v1390 = vld [vmem:[%s1373 + $0x80] sm:$0xff]
        %v1391 = vld [vmem:[%s1373 + $0x88] sm:$0xff]
        %v1392 = vld [vmem:[%s1373 + $0x90] sm:$0xff]
        %v1393 = vld [vmem:[%s1373 + $0x98] sm:$0xff]
        %v1394 = vld [vmem:[%s1373 + $0xa0] sm:$0x11]
        %vm1399 = vcmask 1046528
        %v1400 = vrot.slane %v1348, 1
        %v1401 = vrot.slane %v1350, 1
        %v1402 = vsel %vm1399, %v1400, %v1401
        %v1403 = vrot.slane %v1349, 1
        %v1404 = vrot.slane %v1351, 1
        %v1405 = vsel %vm1399, %v1403, %v1404
        %v1429 = vunpack.c.l.b16 %v1374
        %v1430 = vunpack.c.h.b16 %v1374
        %v1431 = vunpack.c.l.b16 %v1375
        %v1432 = vunpack.c.h.b16 %v1375
        %v1433 = vunpack.c.l.b16 %v1376
        %v1434 = vunpack.c.h.b16 %v1376
        %v1435 = vunpack.c.l.b16 %v1377
        %v1436 = vunpack.c.h.b16 %v1377
        %v1437 = vunpack.c.l.b16 %v1378
        %v1438 = vunpack.c.h.b16 %v1378
        %v1439 = vunpack.c.l.b16 %v1379
        %v1440 = vunpack.c.h.b16 %v1379
        %v1441 = vunpack.c.l.b16 %v1380
        %v1442 = vunpack.c.h.b16 %v1380
        %v1443 = vunpack.c.l.b16 %v1381
        %v1444 = vunpack.c.h.b16 %v1381
        %v1445 = vunpack.c.l.b16 %v1382
        %v1446 = vunpack.c.h.b16 %v1382
        %v1447 = vunpack.c.l.b16 %v1383
        %v1448 = vunpack.c.h.b16 %v1383
        %v1449 = vunpack.c.l.b16 %v1384
        %v1450 = vunpack.c.h.b16 %v1384
        %v1451 = vunpack.c.l.b16 %v1385
        %v1452 = vunpack.c.h.b16 %v1385
        %v1453 = vunpack.c.l.b16 %v1386
        %v1454 = vunpack.c.h.b16 %v1386
        %v1455 = vunpack.c.l.b16 %v1387
        %v1456 = vunpack.c.h.b16 %v1387
        %v1457 = vunpack.c.l.b16 %v1388
        %v1458 = vunpack.c.h.b16 %v1388
        %v1459 = vunpack.c.l.b16 %v1389
        %v1460 = vunpack.c.h.b16 %v1389
        %v1461 = vunpack.c.l.b16 %v1390
        %v1462 = vunpack.c.h.b16 %v1390
        %v1463 = vunpack.c.l.b16 %v1391
        %v1464 = vunpack.c.h.b16 %v1391
        %v1465 = vunpack.c.l.b16 %v1392
        %v1466 = vunpack.c.h.b16 %v1392
        %v1467 = vunpack.c.l.b16 %v1393
        %v1468 = vunpack.c.h.b16 %v1393
        %v1469 = vunpack.c.l.b16 %v1394
        %v1470 = vunpack.c.h.b16 %v1394
        %v1471 = vpack.c.b16 %v1431, %v1429
        %v1472 = vpack.c.b16 %v1432, %v1430
        %v1473 = vpack.c.b16 %v1435, %v1433
        %v1474 = vpack.c.b16 %v1436, %v1434
        %v1475 = vpack.c.b16 %v1439, %v1437
        %v1476 = vpack.c.b16 %v1440, %v1438
        %v1477 = vpack.c.b16 %v1443, %v1441
        %v1478 = vpack.c.b16 %v1444, %v1442
        %v1479 = vpack.c.b16 %v1447, %v1445
        %v1480 = vpack.c.b16 %v1448, %v1446
        %v1481 = vpack.c.b16 %v1451, %v1449
        %v1482 = vpack.c.b16 %v1452, %v1450
        %v1483 = vpack.c.b16 %v1455, %v1453
        %v1484 = vpack.c.b16 %v1456, %v1454
        %v1485 = vpack.c.b16 %v1459, %v1457
        %v1486 = vpack.c.b16 %v1460, %v1458
        %v1487 = vpack.c.b16 %v1463, %v1461
        %v1488 = vpack.c.b16 %v1464, %v1462
        %v1489 = vpack.c.b16 %v1467, %v1465
        %v1490 = vpack.c.b16 %v1468, %v1466
        %v1491 = vpack.c.b16 %v1469, %v1469
        %v1492 = vpack.c.b16 %v1470, %v1470
        %vm1513 = vcmask 277504
        %v1515 = vsel %vm1513, %v1405, 0
        %v1518 = vsel %vm1513, %v1404, 0
        %vm1520 = vcmask 1040384
        %v1522 = vsel %vm1520, %v1491, 0
        %v1525 = vsel %vm1520, %v1492, 0
        %1527 = vmatprep.subr.bf16.mxu0 %v1472
        %1528 = vmatpush1.bf16.msra.mxu0 %v1471
        %1529 = vmatprep.subr.bf16.mxu0 %v1474
        %1530 = vmatpush1.bf16.msra.mxu0 %v1473
        %1531 = vmatprep.subr.bf16.mxu0 %v1476
        %1532 = vmatpush1.bf16.msra.mxu0 %v1475
        %1533 = vmatprep.subr.bf16.mxu0 %v1478
        %1534 = vmatpush1.bf16.msra.mxu0 %v1477
        %1535 = vmatprep.subr.bf16.mxu0 %v1480
        %1536 = vmatpush1.bf16.msra.mxu0 %v1479
        %1537 = vmatprep.subr.bf16.mxu0 %v1482
        %1538 = vmatpush1.bf16.msra.mxu0 %v1481
        %1539 = vmatprep.subr.bf16.mxu0 %v1484
        %1540 = vmatpush1.bf16.msra.mxu0 %v1483
        %1541 = vmatprep.subr.bf16.mxu0 %v1486
        %1542 = vmatpush1.bf16.msra.mxu0 %v1485
        %1543 = vmatprep.subr.bf16.mxu0 %v1488
        %1544 = vmatpush1.bf16.msra.mxu0 %v1487
        %1545 = vmatprep.subr.bf16.mxu0 %v1490
        %1546 = vmatpush1.bf16.msra.mxu0 %v1489
        %1547 = vmatprep.subr.bf16.mxu0 %v1525
        %1548 = vmatpush1.bf16.msra.mxu0 %v1522
        %1549 = vmatprep.subr.bf16.mxu0 0
        %1550 = vmatpush1.bf16.msra.mxu0 0
        %1551 = vmatprep.subr.bf16.mxu0 0
        %1552 = vmatpush1.bf16.msra.mxu0 0
        %1553 = vmatprep.subr.bf16.mxu0 0
        %1554 = vmatpush1.bf16.msra.mxu0 0
        %1555 = vmatprep.subr.bf16.mxu0 0
        %1556 = vmatpush1.bf16.msra.mxu0 0
        %1557 = vmatprep.subr.bf16.mxu0 0
        %1558 = vmatpush1.bf16.msra.mxu0 0
        %1559 = vmatprep.mubr.bf16.mxu0 %v1515
        %1560 = vmatmul.mubr.bf16.gmra.mrb[0].mxu0 %v1402
        %v1561 = vpop.f32.mrb[0].mxu0
        %v1562 = vadd.f32 0.0, %v1561
        %v1563 = vpop.f32.mrb[0].mxu0
        %v1564 = vadd.f32 0.0, %v1563
        %v1565 = vpop.f32.mrb[0].mxu0
        %v1566 = vadd.f32 0.0, %v1565
        %v1567 = vpop.f32.mrb[0].mxu0
        %v1568 = vadd.f32 0.0, %v1567
        %1569 = vmatprep.mubr.bf16.mxu0 %v1518
        %1570 = vmatmul.mubr.bf16.gmra.mrb[0].mxu0 %v1401
        %v1571 = vpop.f32.mrb[0].mxu0
        %v1572 = vadd.f32 0.0, %v1571
        %v1573 = vpop.f32.mrb[0].mxu0
        %v1574 = vadd.f32 0.0, %v1573
        %v1575 = vpop.f32.mrb[0].mxu0
        %v1576 = vpop.f32.mrb[0].mxu0
        %1577 = vdwg.mxu0
        %v1599 = vunpack.c.l.b16 %v1352
        %v1600 = vunpack.c.h.b16 %v1352
        %v1601 = vunpack.c.l.b16 %v1353
        %v1602 = vunpack.c.h.b16 %v1353
        %v1603 = vunpack.c.l.b16 %v1354
        %v1604 = vunpack.c.h.b16 %v1354
        %v1605 = vunpack.c.l.b16 %v1355
        %v1606 = vunpack.c.h.b16 %v1355
        %v1607 = vunpack.c.l.b16 %v1356
        %v1608 = vunpack.c.h.b16 %v1356
        %v1609 = vunpack.c.l.b16 %v1357
        %v1610 = vunpack.c.h.b16 %v1357
        %v1611 = vunpack.c.l.b16 %v1358
        %v1612 = vunpack.c.h.b16 %v1358
        %v1613 = vunpack.c.l.b16 %v1359
        %v1614 = vunpack.c.h.b16 %v1359
        %v1615 = vunpack.c.l.b16 %v1360
        %v1616 = vunpack.c.h.b16 %v1360
        %v1617 = vunpack.c.l.b16 %v1361
        %v1618 = vunpack.c.h.b16 %v1361
        %v1619 = vunpack.c.l.b16 %v1362
        %v1620 = vunpack.c.h.b16 %v1362
        %v1621 = vunpack.c.l.b16 %v1363
        %v1622 = vunpack.c.h.b16 %v1363
        %v1623 = vunpack.c.l.b16 %v1364
        %v1624 = vunpack.c.h.b16 %v1364
        %v1625 = vunpack.c.l.b16 %v1365
        %v1626 = vunpack.c.h.b16 %v1365
        %v1627 = vunpack.c.l.b16 %v1366
        %v1628 = vunpack.c.h.b16 %v1366
        %v1629 = vunpack.c.l.b16 %v1367
        %v1630 = vunpack.c.h.b16 %v1367
        %v1631 = vunpack.c.l.b16 %v1368
        %v1632 = vunpack.c.h.b16 %v1368
        %v1633 = vunpack.c.l.b16 %v1369
        %v1634 = vunpack.c.h.b16 %v1369
        %v1635 = vunpack.c.l.b16 %v1370
        %v1636 = vunpack.c.h.b16 %v1370
        %v1637 = vunpack.c.l.b16 %v1371
        %v1638 = vunpack.c.h.b16 %v1371
        %v1639 = vunpack.c.l.b16 %v1372
        %v1640 = vunpack.c.h.b16 %v1372
        %v1641 = vpack.c.b16 %v1601, %v1599
        %v1642 = vpack.c.b16 %v1602, %v1600
        %v1643 = vpack.c.b16 %v1605, %v1603
        %v1644 = vpack.c.b16 %v1606, %v1604
        %v1645 = vpack.c.b16 %v1609, %v1607
        %v1646 = vpack.c.b16 %v1610, %v1608
        %v1647 = vpack.c.b16 %v1613, %v1611
        %v1648 = vpack.c.b16 %v1614, %v1612
        %v1649 = vpack.c.b16 %v1617, %v1615
        %v1650 = vpack.c.b16 %v1618, %v1616
        %v1651 = vpack.c.b16 %v1621, %v1619
        %v1652 = vpack.c.b16 %v1622, %v1620
        %v1653 = vpack.c.b16 %v1625, %v1623
        %v1654 = vpack.c.b16 %v1626, %v1624
        %v1655 = vpack.c.b16 %v1629, %v1627
        %v1656 = vpack.c.b16 %v1630, %v1628
        %v1657 = vpack.c.b16 %v1633, %v1631
        %v1658 = vpack.c.b16 %v1634, %v1632
        %v1659 = vpack.c.b16 %v1637, %v1635
        %v1660 = vpack.c.b16 %v1638, %v1636
        %v1661 = vpack.c.b16 %v1639, %v1639
        %v1662 = vpack.c.b16 %v1640, %v1640
        %v1684 = vsel %vm1513, %v1349, 0
        %v1687 = vsel %vm1513, %v1351, 0
        %v1690 = vsel %vm1520, %v1661, 0
        %v1693 = vsel %vm1520, %v1662, 0
        %1695 = vmatprep.subr.bf16.mxu0 %v1642
        %1696 = vmatpush1.bf16.msra.mxu0 %v1641
        %1697 = vmatprep.subr.bf16.mxu0 %v1644
        %1698 = vmatpush1.bf16.msra.mxu0 %v1643
        %1699 = vmatprep.subr.bf16.mxu0 %v1646
        %1700 = vmatpush1.bf16.msra.mxu0 %v1645
        %1701 = vmatprep.subr.bf16.mxu0 %v1648
        %1702 = vmatpush1.bf16.msra.mxu0 %v1647
        %1703 = vmatprep.subr.bf16.mxu0 %v1650
        %1704 = vmatpush1.bf16.msra.mxu0 %v1649
        %1705 = vmatprep.subr.bf16.mxu0 %v1652
        %1706 = vmatpush1.bf16.msra.mxu0 %v1651
        %1707 = vmatprep.subr.bf16.mxu0 %v1654
        %1708 = vmatpush1.bf16.msra.mxu0 %v1653
        %1709 = vmatprep.subr.bf16.mxu0 %v1656
        %1710 = vmatpush1.bf16.msra.mxu0 %v1655
        %1711 = vmatprep.subr.bf16.mxu0 %v1658
        %1712 = vmatpush1.bf16.msra.mxu0 %v1657
        %1713 = vmatprep.subr.bf16.mxu0 %v1660
        %1714 = vmatpush1.bf16.msra.mxu0 %v1659
        %1715 = vmatprep.subr.bf16.mxu0 %v1693
        %1716 = vmatpush1.bf16.msra.mxu0 %v1690
        %1717 = vmatprep.subr.bf16.mxu0 0
        %1718 = vmatpush1.bf16.msra.mxu0 0
        %1719 = vmatprep.subr.bf16.mxu0 0
        %1720 = vmatpush1.bf16.msra.mxu0 0
        %1721 = vmatprep.subr.bf16.mxu0 0
        %1722 = vmatpush1.bf16.msra.mxu0 0
        %1723 = vmatprep.subr.bf16.mxu0 0
        %1724 = vmatpush1.bf16.msra.mxu0 0
        %1725 = vmatprep.subr.bf16.mxu0 0
        %1726 = vmatpush1.bf16.msra.mxu0 0
        %1727 = vmatprep.mubr.bf16.mxu0 %v1684
        %1728 = vmatmul.mubr.bf16.gmra.mrb[0].mxu0 %v1348
        %v1729 = vpop.f32.mrb[0].mxu0
        %v1730 = vadd.f32 %v1562, %v1729
        %v1731 = vpop.f32.mrb[0].mxu0
        %v1732 = vadd.f32 %v1564, %v1731
        %v1733 = vpop.f32.mrb[0].mxu0
        %v1734 = vadd.f32 %v1566, %v1733
        %v1735 = vpop.f32.mrb[0].mxu0
        %v1736 = vadd.f32 %v1568, %v1735
        %1737 = vmatprep.mubr.bf16.mxu0 %v1687
        %1738 = vmatmul.mubr.bf16.gmra.mrb[0].mxu0 %v1350
        %v1739 = vpop.f32.mrb[0].mxu0
        %v1740 = vadd.f32 %v1572, %v1739
        %v1741 = vpop.f32.mrb[0].mxu0
        %v1742 = vadd.f32 %v1574, %v1741
        %v1743 = vpop.f32.mrb[0].mxu0
        %v1744 = vpop.f32.mrb[0].mxu0
        %1745 = vdwg.mxu0
        %s1746 = scalar_lea.vmem %s3, 336
        %v1747 = vld [vmem:[%s1746] sm:$0xff]
        %v1748 = vld [vmem:[%s1746 + $0x8] sm:$0xff]
        %v1749 = vld [vmem:[%s1746 + $0x10] sm:$0xff]
        %v1750 = vld [vmem:[%s1746 + $0x18] sm:$0xff]
        %v1751 = vld [vmem:[%s1746 + $0x20] sm:$0xff]
        %v1752 = vld [vmem:[%s1746 + $0x28] sm:$0xff]
        %v1753 = vld [vmem:[%s1746 + $0x30] sm:$0xff]
        %v1754 = vld [vmem:[%s1746 + $0x38] sm:$0xff]
        %v1755 = vld [vmem:[%s1746 + $0x40] sm:$0xff]
        %v1756 = vld [vmem:[%s1746 + $0x48] sm:$0xff]
        %v1757 = vld [vmem:[%s1746 + $0x50] sm:$0xff]
        %v1758 = vld [vmem:[%s1746 + $0x58] sm:$0xff]
        %v1759 = vld [vmem:[%s1746 + $0x60] sm:$0xff]
        %v1760 = vld [vmem:[%s1746 + $0x68] sm:$0xff]
        %v1761 = vld [vmem:[%s1746 + $0x70] sm:$0xff]
        %v1762 = vld [vmem:[%s1746 + $0x78] sm:$0xff]
        %v1763 = vld [vmem:[%s1746 + $0x80] sm:$0xff]
        %v1764 = vld [vmem:[%s1746 + $0x88] sm:$0xff]
        %v1765 = vld [vmem:[%s1746 + $0x90] sm:$0xff]
        %v1766 = vld [vmem:[%s1746 + $0x98] sm:$0xff]
        %v1767 = vld [vmem:[%s1746 + $0xa0] sm:$0x11]
        %vm1768 = vcmask 1045504
        %v1769 = vrot.slane %v1348, 2
        %v1770 = vrot.slane %v1350, 2
        %v1771 = vsel %vm1768, %v1769, %v1770
        %v1772 = vrot.slane %v1349, 2
        %v1773 = vrot.slane %v1351, 2
        %v1774 = vsel %vm1768, %v1772, %v1773
        %v1798 = vunpack.c.l.b16 %v1747
        %v1799 = vunpack.c.h.b16 %v1747
        %v1800 = vunpack.c.l.b16 %v1748
        %v1801 = vunpack.c.h.b16 %v1748
        %v1802 = vunpack.c.l.b16 %v1749
        %v1803 = vunpack.c.h.b16 %v1749
        %v1804 = vunpack.c.l.b16 %v1750
        %v1805 = vunpack.c.h.b16 %v1750
        %v1806 = vunpack.c.l.b16 %v1751
        %v1807 = vunpack.c.h.b16 %v1751
        %v1808 = vunpack.c.l.b16 %v1752
        %v1809 = vunpack.c.h.b16 %v1752
        %v1810 = vunpack.c.l.b16 %v1753
        %v1811 = vunpack.c.h.b16 %v1753
        %v1812 = vunpack.c.l.b16 %v1754
        %v1813 = vunpack.c.h.b16 %v1754
        %v1814 = vunpack.c.l.b16 %v1755
        %v1815 = vunpack.c.h.b16 %v1755
        %v1816 = vunpack.c.l.b16 %v1756
        %v1817 = vunpack.c.h.b16 %v1756
        %v1818 = vunpack.c.l.b16 %v1757
        %v1819 = vunpack.c.h.b16 %v1757
        %v1820 = vunpack.c.l.b16 %v1758
        %v1821 = vunpack.c.h.b16 %v1758
        %v1822 = vunpack.c.l.b16 %v1759
        %v1823 = vunpack.c.h.b16 %v1759
        %v1824 = vunpack.c.l.b16 %v1760
        %v1825 = vunpack.c.h.b16 %v1760
        %v1826 = vunpack.c.l.b16 %v1761
        %v1827 = vunpack.c.h.b16 %v1761
        %v1828 = vunpack.c.l.b16 %v1762
        %v1829 = vunpack.c.h.b16 %v1762
        %v1830 = vunpack.c.l.b16 %v1763
        %v1831 = vunpack.c.h.b16 %v1763
        %v1832 = vunpack.c.l.b16 %v1764
        %v1833 = vunpack.c.h.b16 %v1764
        %v1834 = vunpack.c.l.b16 %v1765
        %v1835 = vunpack.c.h.b16 %v1765
        %v1836 = vunpack.c.l.b16 %v1766
        %v1837 = vunpack.c.h.b16 %v1766
        %v1838 = vunpack.c.l.b16 %v1767
        %v1839 = vunpack.c.h.b16 %v1767
        %v1840 = vpack.c.b16 %v1800, %v1798
        %v1841 = vpack.c.b16 %v1801, %v1799
        %v1842 = vpack.c.b16 %v1804, %v1802
        %v1843 = vpack.c.b16 %v1805, %v1803
        %v1844 = vpack.c.b16 %v1808, %v1806
        %v1845 = vpack.c.b16 %v1809, %v1807
        %v1846 = vpack.c.b16 %v1812, %v1810
        %v1847 = vpack.c.b16 %v1813, %v1811
        %v1848 = vpack.c.b16 %v1816, %v1814
        %v1849 = vpack.c.b16 %v1817, %v1815
        %v1850 = vpack.c.b16 %v1820, %v1818
        %v1851 = vpack.c.b16 %v1821, %v1819
        %v1852 = vpack.c.b16 %v1824, %v1822
        %v1853 = vpack.c.b16 %v1825, %v1823
        %v1854 = vpack.c.b16 %v1828, %v1826
        %v1855 = vpack.c.b16 %v1829, %v1827
        %v1856 = vpack.c.b16 %v1832, %v1830
        %v1857 = vpack.c.b16 %v1833, %v1831
        %v1858 = vpack.c.b16 %v1836, %v1834
        %v1859 = vpack.c.b16 %v1837, %v1835
        %v1860 = vpack.c.b16 %v1838, %v1838
        %v1861 = vpack.c.b16 %v1839, %v1839
        %v1883 = vsel %vm1513, %v1774, 0
        %v1886 = vsel %vm1513, %v1773, 0
        %v1889 = vsel %vm1520, %v1860, 0
        %v1892 = vsel %vm1520, %v1861, 0
        %1894 = vmatprep.subr.bf16.mxu0 %v1841
        %1895 = vmatpush1.bf16.msra.mxu0 %v1840
        %1896 = vmatprep.subr.bf16.mxu0 %v1843
        %1897 = vmatpush1.bf16.msra.mxu0 %v1842
        %1898 = vmatprep.subr.bf16.mxu0 %v1845
        %1899 = vmatpush1.bf16.msra.mxu0 %v1844
        %1900 = vmatprep.subr.bf16.mxu0 %v1847
        %1901 = vmatpush1.bf16.msra.mxu0 %v1846
        %1902 = vmatprep.subr.bf16.mxu0 %v1849
        %1903 = vmatpush1.bf16.msra.mxu0 %v1848
        %1904 = vmatprep.subr.bf16.mxu0 %v1851
        %1905 = vmatpush1.bf16.msra.mxu0 %v1850
        %1906 = vmatprep.subr.bf16.mxu0 %v1853
        %1907 = vmatpush1.bf16.msra.mxu0 %v1852
        %1908 = vmatprep.subr.bf16.mxu0 %v1855
        %1909 = vmatpush1.bf16.msra.mxu0 %v1854
        %1910 = vmatprep.subr.bf16.mxu0 %v1857
        %1911 = vmatpush1.bf16.msra.mxu0 %v1856
        %1912 = vmatprep.subr.bf16.mxu0 %v1859
        %1913 = vmatpush1.bf16.msra.mxu0 %v1858
        %1914 = vmatprep.subr.bf16.mxu0 %v1892
        %1915 = vmatpush1.bf16.msra.mxu0 %v1889
        %1916 = vmatprep.subr.bf16.mxu0 0
        %1917 = vmatpush1.bf16.msra.mxu0 0
        %1918 = vmatprep.subr.bf16.mxu0 0
        %1919 = vmatpush1.bf16.msra.mxu0 0
        %1920 = vmatprep.subr.bf16.mxu0 0
        %1921 = vmatpush1.bf16.msra.mxu0 0
        %1922 = vmatprep.subr.bf16.mxu0 0
        %1923 = vmatpush1.bf16.msra.mxu0 0
        %1924 = vmatprep.subr.bf16.mxu0 0
        %1925 = vmatpush1.bf16.msra.mxu0 0
        %1926 = vmatprep.mubr.bf16.mxu0 %v1883
        %1927 = vmatmul.mubr.bf16.gmra.mrb[0].mxu0 %v1771
        %v1928 = vpop.f32.mrb[0].mxu0
        %v1929 = vadd.f32 0.0, %v1928
        %v1930 = vpop.f32.mrb[0].mxu0
        %v1931 = vadd.f32 0.0, %v1930
        %v1932 = vpop.f32.mrb[0].mxu0
        %v1933 = vadd.f32 0.0, %v1932
        %v1934 = vpop.f32.mrb[0].mxu0
        %v1935 = vadd.f32 0.0, %v1934
        %1936 = vmatprep.mubr.bf16.mxu0 %v1886
        %1937 = vmatmul.mubr.bf16.gmra.mrb[0].mxu0 %v1770
        %v1938 = vpop.f32.mrb[0].mxu0
        %v1939 = vadd.f32 0.0, %v1938
        %v1940 = vpop.f32.mrb[0].mxu0
        %v1941 = vadd.f32 0.0, %v1940
        %v1942 = vpop.f32.mrb[0].mxu0
        %v1943 = vpop.f32.mrb[0].mxu0
        %1944 = vdwg.mxu0
        %v1945 = vadd.f32 %v1730, %v1929
        %v1946 = vadd.f32 %v1732, %v1931
        %v1947 = vadd.f32 %v1734, %v1933
        %v1948 = vadd.f32 %v1736, %v1935
        %v1949 = vadd.f32 %v1740, %v1939
        %v1950 = vadd.f32 %v1742, %v1941
        %v1951 = vpack.c.bf16 %v1346, %v1344
        %v1952 = vpack.c.bf16 %v1347, %v1345
        %s1953 = scalar_lea.vmem %s3, 504
        %v1954 = vld [vmem:[%s1953] sm:$0xff]
        %v1955 = vld [vmem:[%s1953 + $0x8] sm:$0xff]
        %v1956 = vld [vmem:[%s1953 + $0x10] sm:$0xff]
        %v1957 = vld [vmem:[%s1953 + $0x18] sm:$0xff]
        %v1958 = vld [vmem:[%s1953 + $0x20] sm:$0xff]
        %v1959 = vld [vmem:[%s1953 + $0x28] sm:$0xff]
        %v1960 = vld [vmem:[%s1953 + $0x30] sm:$0xff]
        %v1961 = vld [vmem:[%s1953 + $0x38] sm:$0xff]
        %v1962 = vld [vmem:[%s1953 + $0x40] sm:$0xff]
        %v1963 = vld [vmem:[%s1953 + $0x48] sm:$0xff]
        %v1964 = vld [vmem:[%s1953 + $0x50] sm:$0xff]
        %v1965 = vld [vmem:[%s1953 + $0x58] sm:$0xff]
        %v1966 = vld [vmem:[%s1953 + $0x60] sm:$0xff]
        %v1967 = vld [vmem:[%s1953 + $0x68] sm:$0xff]
        %v1968 = vld [vmem:[%s1953 + $0x70] sm:$0xff]
        %v1969 = vld [vmem:[%s1953 + $0x78] sm:$0xff]
        %v1970 = vld [vmem:[%s1953 + $0x80] sm:$0xff]
        %v1971 = vld [vmem:[%s1953 + $0x88] sm:$0xff]
        %v1972 = vld [vmem:[%s1953 + $0x90] sm:$0xff]
        %v1973 = vld [vmem:[%s1953 + $0x98] sm:$0xff]
        %v1974 = vld [vmem:[%s1953 + $0xa0] sm:$0x11]
        %vm1977 = vcmask 1044480
        %v1978 = vrot.slane %v1348, 3
        %v1979 = vrot.slane %v1951, 3
        %v1980 = vsel %vm1977, %v1978, %v1979
        %v1981 = vrot.slane %v1349, 3
        %v1982 = vrot.slane %v1952, 3
        %v1983 = vsel %vm1977, %v1981, %v1982
        %v2007 = vunpack.c.l.b16 %v1954
        %v2008 = vunpack.c.h.b16 %v1954
        %v2009 = vunpack.c.l.b16 %v1955
        %v2010 = vunpack.c.h.b16 %v1955
        %v2011 = vunpack.c.l.b16 %v1956
        %v2012 = vunpack.c.h.b16 %v1956
        %v2013 = vunpack.c.l.b16 %v1957
        %v2014 = vunpack.c.h.b16 %v1957
        %v2015 = vunpack.c.l.b16 %v1958
        %v2016 = vunpack.c.h.b16 %v1958
        %v2017 = vunpack.c.l.b16 %v1959
        %v2018 = vunpack.c.h.b16 %v1959
        %v2019 = vunpack.c.l.b16 %v1960
        %v2020 = vunpack.c.h.b16 %v1960
        %v2021 = vunpack.c.l.b16 %v1961
        %v2022 = vunpack.c.h.b16 %v1961
        %v2023 = vunpack.c.l.b16 %v1962
        %v2024 = vunpack.c.h.b16 %v1962
        %v2025 = vunpack.c.l.b16 %v1963
        %v2026 = vunpack.c.h.b16 %v1963
        %v2027 = vunpack.c.l.b16 %v1964
        %v2028 = vunpack.c.h.b16 %v1964
        %v2029 = vunpack.c.l.b16 %v1965
        %v2030 = vunpack.c.h.b16 %v1965
        %v2031 = vunpack.c.l.b16 %v1966
        %v2032 = vunpack.c.h.b16 %v1966
        %v2033 = vunpack.c.l.b16 %v1967
        %v2034 = vunpack.c.h.b16 %v1967
        %v2035 = vunpack.c.l.b16 %v1968
        %v2036 = vunpack.c.h.b16 %v1968
        %v2037 = vunpack.c.l.b16 %v1969
        %v2038 = vunpack.c.h.b16 %v1969
        %v2039 = vunpack.c.l.b16 %v1970
        %v2040 = vunpack.c.h.b16 %v1970
        %v2041 = vunpack.c.l.b16 %v1971
        %v2042 = vunpack.c.h.b16 %v1971
        %v2043 = vunpack.c.l.b16 %v1972
        %v2044 = vunpack.c.h.b16 %v1972
        %v2045 = vunpack.c.l.b16 %v1973
        %v2046 = vunpack.c.h.b16 %v1973
        %v2047 = vunpack.c.l.b16 %v1974
        %v2048 = vunpack.c.h.b16 %v1974
        %v2049 = vpack.c.b16 %v2009, %v2007
        %v2050 = vpack.c.b16 %v2010, %v2008
        %v2051 = vpack.c.b16 %v2013, %v2011
        %v2052 = vpack.c.b16 %v2014, %v2012
        %v2053 = vpack.c.b16 %v2017, %v2015
        %v2054 = vpack.c.b16 %v2018, %v2016
        %v2055 = vpack.c.b16 %v2021, %v2019
        %v2056 = vpack.c.b16 %v2022, %v2020
        %v2057 = vpack.c.b16 %v2025, %v2023
        %v2058 = vpack.c.b16 %v2026, %v2024
        %v2059 = vpack.c.b16 %v2029, %v2027
        %v2060 = vpack.c.b16 %v2030, %v2028
        %v2061 = vpack.c.b16 %v2033, %v2031
        %v2062 = vpack.c.b16 %v2034, %v2032
        %v2063 = vpack.c.b16 %v2037, %v2035
        %v2064 = vpack.c.b16 %v2038, %v2036
        %v2065 = vpack.c.b16 %v2041, %v2039
        %v2066 = vpack.c.b16 %v2042, %v2040
        %v2067 = vpack.c.b16 %v2045, %v2043
        %v2068 = vpack.c.b16 %v2046, %v2044
        %v2069 = vpack.c.b16 %v2047, %v2047
        %v2070 = vpack.c.b16 %v2048, %v2048
        %v2092 = vsel %vm1513, %v1983, 0
        %v2095 = vsel %vm1513, %v1982, 0
        %v2098 = vsel %vm1520, %v2069, 0
        %v2101 = vsel %vm1520, %v2070, 0
        %2103 = vmatprep.subr.bf16.mxu0 %v2050
        %2104 = vmatpush1.bf16.msra.mxu0 %v2049
        %2105 = vmatprep.subr.bf16.mxu0 %v2052
        %2106 = vmatpush1.bf16.msra.mxu0 %v2051
        %2107 = vmatprep.subr.bf16.mxu0 %v2054
        %2108 = vmatpush1.bf16.msra.mxu0 %v2053
        %2109 = vmatprep.subr.bf16.mxu0 %v2056
        %2110 = vmatpush1.bf16.msra.mxu0 %v2055
        %2111 = vmatprep.subr.bf16.mxu0 %v2058
        %2112 = vmatpush1.bf16.msra.mxu0 %v2057
        %2113 = vmatprep.subr.bf16.mxu0 %v2060
        %2114 = vmatpush1.bf16.msra.mxu0 %v2059
        %2115 = vmatprep.subr.bf16.mxu0 %v2062
        %2116 = vmatpush1.bf16.msra.mxu0 %v2061
        %2117 = vmatprep.subr.bf16.mxu0 %v2064
        %2118 = vmatpush1.bf16.msra.mxu0 %v2063
        %2119 = vmatprep.subr.bf16.mxu0 %v2066
        %2120 = vmatpush1.bf16.msra.mxu0 %v2065
        %2121 = vmatprep.subr.bf16.mxu0 %v2068
        %2122 = vmatpush1.bf16.msra.mxu0 %v2067
        %2123 = vmatprep.subr.bf16.mxu0 %v2101
        %2124 = vmatpush1.bf16.msra.mxu0 %v2098
        %2125 = vmatprep.subr.bf16.mxu0 0
        %2126 = vmatpush1.bf16.msra.mxu0 0
        %2127 = vmatprep.subr.bf16.mxu0 0
        %2128 = vmatpush1.bf16.msra.mxu0 0
        %2129 = vmatprep.subr.bf16.mxu0 0
        %2130 = vmatpush1.bf16.msra.mxu0 0
        %2131 = vmatprep.subr.bf16.mxu0 0
        %2132 = vmatpush1.bf16.msra.mxu0 0
        %2133 = vmatprep.subr.bf16.mxu0 0
        %2134 = vmatpush1.bf16.msra.mxu0 0
        %2135 = vmatprep.mubr.bf16.mxu0 %v2092
        %2136 = vmatmul.mubr.bf16.gmra.mrb[0].mxu0 %v1980
        %v2137 = vpop.f32.mrb[0].mxu0
        %v2138 = vadd.f32 0.0, %v2137
        %v2139 = vpop.f32.mrb[0].mxu0
        %v2140 = vadd.f32 0.0, %v2139
        %v2141 = vpop.f32.mrb[0].mxu0
        %v2142 = vadd.f32 0.0, %v2141
        %v2143 = vpop.f32.mrb[0].mxu0
        %v2144 = vadd.f32 0.0, %v2143
        %2145 = vmatprep.mubr.bf16.mxu0 %v2095
        %2146 = vmatmul.mubr.bf16.gmra.mrb[0].mxu0 %v1979
        %v2147 = vpop.f32.mrb[0].mxu0
        %v2148 = vadd.f32 0.0, %v2147
        %v2149 = vpop.f32.mrb[0].mxu0
        %v2150 = vadd.f32 0.0, %v2149
        %v2151 = vpop.f32.mrb[0].mxu0
        %v2152 = vpop.f32.mrb[0].mxu0
        %2153 = vdwg.mxu0
        %v2154 = vadd.f32 %v1945, %v2138
        %v2155 = vadd.f32 %v1946, %v2140
        %v2156 = vadd.f32 %v1947, %v2142
        %v2157 = vadd.f32 %v1948, %v2144
        %v2158 = vadd.f32 %v1949, %v2148
        %v2159 = vadd.f32 %v1950, %v2150
        %v2160 = vpack.c.bf16 %v1344, %v1342
        %v2161 = vpack.c.bf16 %v1345, %v1343
        %v2162 = vpack.c.bf16 %v1346, %v1346
        %v2163 = vpack.c.bf16 %v1347, %v1347
        %s2164 = scalar_lea.vmem %s3, 672
        %v2165 = vld [vmem:[%s2164] sm:$0xff]
        %v2166 = vld [vmem:[%s2164 + $0x8] sm:$0xff]
        %v2167 = vld [vmem:[%s2164 + $0x10] sm:$0xff]
        %v2168 = vld [vmem:[%s2164 + $0x18] sm:$0xff]
        %v2169 = vld [vmem:[%s2164 + $0x20] sm:$0xff]
        %v2170 = vld [vmem:[%s2164 + $0x28] sm:$0xff]
        %v2171 = vld [vmem:[%s2164 + $0x30] sm:$0xff]
        %v2172 = vld [vmem:[%s2164 + $0x38] sm:$0xff]
        %v2173 = vld [vmem:[%s2164 + $0x40] sm:$0xff]
        %v2174 = vld [vmem:[%s2164 + $0x48] sm:$0xff]
        %v2175 = vld [vmem:[%s2164 + $0x50] sm:$0xff]
        %v2176 = vld [vmem:[%s2164 + $0x58] sm:$0xff]
        %v2177 = vld [vmem:[%s2164 + $0x60] sm:$0xff]
        %v2178 = vld [vmem:[%s2164 + $0x68] sm:$0xff]
        %v2179 = vld [vmem:[%s2164 + $0x70] sm:$0xff]
        %v2180 = vld [vmem:[%s2164 + $0x78] sm:$0xff]
        %v2181 = vld [vmem:[%s2164 + $0x80] sm:$0xff]
        %v2182 = vld [vmem:[%s2164 + $0x88] sm:$0xff]
        %v2183 = vld [vmem:[%s2164 + $0x90] sm:$0xff]
        %v2184 = vld [vmem:[%s2164 + $0x98] sm:$0xff]
        %v2185 = vld [vmem:[%s2164 + $0xa0] sm:$0x11]
        %v2207 = vunpack.c.l.b16 %v2165
        %v2208 = vunpack.c.h.b16 %v2165
        %v2209 = vunpack.c.l.b16 %v2166
        %v2210 = vunpack.c.h.b16 %v2166
        %v2211 = vunpack.c.l.b16 %v2167
        %v2212 = vunpack.c.h.b16 %v2167
        %v2213 = vunpack.c.l.b16 %v2168
        %v2214 = vunpack.c.h.b16 %v2168
        %v2215 = vunpack.c.l.b16 %v2169
        %v2216 = vunpack.c.h.b16 %v2169
        %v2217 = vunpack.c.l.b16 %v2170
        %v2218 = vunpack.c.h.b16 %v2170
        %v2219 = vunpack.c.l.b16 %v2171
        %v2220 = vunpack.c.h.b16 %v2171
        %v2221 = vunpack.c.l.b16 %v2172
        %v2222 = vunpack.c.h.b16 %v2172
        %v2223 = vunpack.c.l.b16 %v2173
        %v2224 = vunpack.c.h.b16 %v2173
        %v2225 = vunpack.c.l.b16 %v2174
        %v2226 = vunpack.c.h.b16 %v2174
        %v2227 = vunpack.c.l.b16 %v2175
        %v2228 = vunpack.c.h.b16 %v2175
        %v2229 = vunpack.c.l.b16 %v2176
        %v2230 = vunpack.c.h.b16 %v2176
        %v2231 = vunpack.c.l.b16 %v2177
        %v2232 = vunpack.c.h.b16 %v2177
        %v2233 = vunpack.c.l.b16 %v2178
        %v2234 = vunpack.c.h.b16 %v2178
        %v2235 = vunpack.c.l.b16 %v2179
        %v2236 = vunpack.c.h.b16 %v2179
        %v2237 = vunpack.c.l.b16 %v2180
        %v2238 = vunpack.c.h.b16 %v2180
        %v2239 = vunpack.c.l.b16 %v2181
        %v2240 = vunpack.c.h.b16 %v2181
        %v2241 = vunpack.c.l.b16 %v2182
        %v2242 = vunpack.c.h.b16 %v2182
        %v2243 = vunpack.c.l.b16 %v2183
        %v2244 = vunpack.c.h.b16 %v2183
        %v2245 = vunpack.c.l.b16 %v2184
        %v2246 = vunpack.c.h.b16 %v2184
        %v2247 = vunpack.c.l.b16 %v2185
        %v2248 = vunpack.c.h.b16 %v2185
        %v2249 = vpack.c.b16 %v2209, %v2207
        %v2250 = vpack.c.b16 %v2210, %v2208
        %v2251 = vpack.c.b16 %v2213, %v2211
        %v2252 = vpack.c.b16 %v2214, %v2212
        %v2253 = vpack.c.b16 %v2217, %v2215
        %v2254 = vpack.c.b16 %v2218, %v2216
        %v2255 = vpack.c.b16 %v2221, %v2219
        %v2256 = vpack.c.b16 %v2222, %v2220
        %v2257 = vpack.c.b16 %v2225, %v2223
        %v2258 = vpack.c.b16 %v2226, %v2224
        %v2259 = vpack.c.b16 %v2229, %v2227
        %v2260 = vpack.c.b16 %v2230, %v2228
        %v2261 = vpack.c.b16 %v2233, %v2231
        %v2262 = vpack.c.b16 %v2234, %v2232
        %v2263 = vpack.c.b16 %v2237, %v2235
        %v2264 = vpack.c.b16 %v2238, %v2236
        %v2265 = vpack.c.b16 %v2241, %v2239
        %v2266 = vpack.c.b16 %v2242, %v2240
        %v2267 = vpack.c.b16 %v2245, %v2243
        %v2268 = vpack.c.b16 %v2246, %v2244
        %v2269 = vpack.c.b16 %v2247, %v2247
        %v2270 = vpack.c.b16 %v2248, %v2248
        %v2292 = vsel %vm1513, %v2161, 0
        %v2295 = vsel %vm1513, %v2163, 0
        %v2298 = vsel %vm1520, %v2269, 0
        %v2301 = vsel %vm1520, %v2270, 0
        %2303 = vmatprep.subr.bf16.mxu0 %v2250
        %2304 = vmatpush1.bf16.msra.mxu0 %v2249
        %2305 = vmatprep.subr.bf16.mxu0 %v2252
        %2306 = vmatpush1.bf16.msra.mxu0 %v2251
        %2307 = vmatprep.subr.bf16.mxu0 %v2254
        %2308 = vmatpush1.bf16.msra.mxu0 %v2253
        %2309 = vmatprep.subr.bf16.mxu0 %v2256
        %2310 = vmatpush1.bf16.msra.mxu0 %v2255
        %2311 = vmatprep.subr.bf16.mxu0 %v2258
        %2312 = vmatpush1.bf16.msra.mxu0 %v2257
        %2313 = vmatprep.subr.bf16.mxu0 %v2260
        %2314 = vmatpush1.bf16.msra.mxu0 %v2259
        %2315 = vmatprep.subr.bf16.mxu0 %v2262
        %2316 = vmatpush1.bf16.msra.mxu0 %v2261
        %2317 = vmatprep.subr.bf16.mxu0 %v2264
        %2318 = vmatpush1.bf16.msra.mxu0 %v2263
        %2319 = vmatprep.subr.bf16.mxu0 %v2266
        %2320 = vmatpush1.bf16.msra.mxu0 %v2265
        %2321 = vmatprep.subr.bf16.mxu0 %v2268
        %2322 = vmatpush1.bf16.msra.mxu0 %v2267
        %2323 = vmatprep.subr.bf16.mxu0 %v2301
        %2324 = vmatpush1.bf16.msra.mxu0 %v2298
        %2325 = vmatprep.subr.bf16.mxu0 0
        %2326 = vmatpush1.bf16.msra.mxu0 0
        %2327 = vmatprep.subr.bf16.mxu0 0
        %2328 = vmatpush1.bf16.msra.mxu0 0
        %2329 = vmatprep.subr.bf16.mxu0 0
        %2330 = vmatpush1.bf16.msra.mxu0 0
        %2331 = vmatprep.subr.bf16.mxu0 0
        %2332 = vmatpush1.bf16.msra.mxu0 0
        %2333 = vmatprep.subr.bf16.mxu0 0
        %2334 = vmatpush1.bf16.msra.mxu0 0
        %2335 = vmatprep.mubr.bf16.mxu0 %v2292
        %2336 = vmatmul.mubr.bf16.gmra.mrb[0].mxu0 %v2160
        %v2337 = vpop.f32.mrb[0].mxu0
        %v2338 = vadd.f32 0.0, %v2337
        %v2339 = vpop.f32.mrb[0].mxu0
        %v2340 = vadd.f32 0.0, %v2339
        %v2341 = vpop.f32.mrb[0].mxu0
        %v2342 = vadd.f32 0.0, %v2341
        %v2343 = vpop.f32.mrb[0].mxu0
        %v2344 = vadd.f32 0.0, %v2343
        %2345 = vmatprep.mubr.bf16.mxu0 %v2295
        %2346 = vmatmul.mubr.bf16.gmra.mrb[0].mxu0 %v2162
        %v2347 = vpop.f32.mrb[0].mxu0
        %v2348 = vadd.f32 0.0, %v2347
        %v2349 = vpop.f32.mrb[0].mxu0
        %v2350 = vadd.f32 0.0, %v2349
        %v2351 = vpop.f32.mrb[0].mxu0
        %v2352 = vpop.f32.mrb[0].mxu0
        %2353 = vdwg.mxu0
        %v2354 = vadd.f32 %v2154, %v2338
        %v2355 = vadd.f32 %v2155, %v2340
        %v2356 = vadd.f32 %v2156, %v2342
        %v2357 = vadd.f32 %v2157, %v2344
        %v2358 = vadd.f32 %v2158, %v2348
        %v2359 = vadd.f32 %v2159, %v2350
        %v2360 = vld [vmem:[%s4] sm:$0x3]
        %v2362 = vlaneseq
        %v2363 = vshrl.u32 %v2362, 7
        %v2364 = vsub.s32 0, %v2363
        %v2365 = vrot.slane %v2360, %v2364
        %v2366 = vlaneseq
        %v2367 = vshrl.u32 %v2366, 7
        %v2368 = vsub.s32 1, %v2367
        %v2369 = vrot.slane %v2360, %v2368
        %v2372 = vadd.f32 %v2354, %v2365
        %v2373 = vadd.f32 %v2355, %v2369
        %v2374 = vadd.f32 %v2356, %v2365
        %v2375 = vadd.f32 %v2357, %v2369
        %v2376 = vadd.f32 %v2358, %v2365
        %v2377 = vadd.f32 %v2359, %v2369
        %v2378 = vmax.f32 %v2372, 0.0
        %v2379 = vmax.f32 %v2373, 0.0
        %v2380 = vmax.f32 %v2374, 0.0
        %v2381 = vmax.f32 %v2375, 0.0
        %v2382 = vmax.f32 %v2376, 0.0
        %v2383 = vmax.f32 %v2377, 0.0
        %v2390 = vrot.slane %v2378, 2
        %v2391 = vrot.slane %v2380, 2
        %v2392 = vsel %vm876, %v2390, %v2391
        %v2393 = vrot.slane %v2379, 2
        %v2394 = vrot.slane %v2381, 2
        %v2395 = vsel %vm876, %v2393, %v2394
        %v2396 = vrot.slane %v2382, 2
        %v2397 = vsel %vm876, %v2391, %v2396
        %v2398 = vrot.slane %v2383, 2
        %v2399 = vsel %vm876, %v2394, %v2398
        %v2406 = vmax.f32 %v2378, %v2392
        %v2407 = vmax.f32 %v2379, %v2395
        %v2408 = vmax.f32 %v2380, %v2397
        %v2409 = vmax.f32 %v2381, %v2399
        %v2410 = vmax.f32 %v2382, %v2396
        %v2411 = vmax.f32 %v2383, %v2398
        %2418 = vrot.lane.b32.xlu0 %v2406, 112
        %v2419 = vpop.permute.xlu0 %2418
        %2420 = vrot.lane.b32.xlu0 %v2407, 112
        %v2421 = vpop.permute.xlu0 %2420
        %2422 = vrot.lane.b32.xlu0 %v2408, 112
        %v2423 = vpop.permute.xlu0 %2422
        %2424 = vrot.lane.b32.xlu0 %v2409, 112
        %v2425 = vpop.permute.xlu0 %2424
        %2426 = vrot.lane.b32.xlu0 %v2410, 112
        %v2427 = vpop.permute.xlu0 %2426
        %2428 = vrot.lane.b32.xlu0 %v2411, 112
        %v2429 = vpop.permute.xlu0 %2428
        %vm2430 = vcmask 916480
        %v2431 = vsel %vm2430, %v2419, %v2421
        %v2432 = vsel %vm2430, %v2423, %v2425
        %v2433 = vsel %vm2430, %v2427, %v2429
        %v2440 = vmax.f32 %v2406, %v2431
        %v2441 = vmax.f32 %v2407, %v2421
        %v2442 = vmax.f32 %v2408, %v2432
        %v2443 = vmax.f32 %v2409, %v2425
        %v2444 = vmax.f32 %v2410, %v2433
        %v2445 = vmax.f32 %v2411, %v2429
        %v2446 = vpack.c.bf16 %v2440, %v2440
        %v2447 = vpack.c.bf16 %v2441, %v2441
        %v2448 = vld [vmem:[%s5] sm:$0xf]
        %v2449 = vld [vmem:[%s5 + $0x4] sm:$0xf]
        %v2450 = vld [vmem:[%s5 + $0x8] sm:$0xf]
        %v2451 = vld [vmem:[%s5 + $0xc] sm:$0xf]
        %v2452 = vld [vmem:[%s5 + $0x10] sm:$0xf]
        %v2453 = vld [vmem:[%s5 + $0x14] sm:$0xf]
        %v2454 = vld [vmem:[%s5 + $0x18] sm:$0xf]
        %v2455 = vld [vmem:[%s5 + $0x1c] sm:$0xf]
        %v2456 = vld [vmem:[%s5 + $0x20] sm:$0xf]
        %v2457 = vld [vmem:[%s5 + $0x24] sm:$0xf]
        %v2458 = vld [vmem:[%s5 + $0x28] sm:$0xf]
        %v2459 = vld [vmem:[%s5 + $0x2c] sm:$0xf]
        %v2460 = vld [vmem:[%s5 + $0x30] sm:$0xf]
        %v2461 = vld [vmem:[%s5 + $0x34] sm:$0xf]
        %v2462 = vld [vmem:[%s5 + $0x38] sm:$0xf]
        %v2463 = vld [vmem:[%s5 + $0x3c] sm:$0xf]
        %v2464 = vld [vmem:[%s5 + $0x40] sm:$0xf]
        %v2465 = vld [vmem:[%s5 + $0x44] sm:$0xf]
        %s2466 = scalar_lea.vmem %s5, 72
        %v2467 = vld [vmem:[%s2466] sm:$0xf]
        %v2468 = vld [vmem:[%s2466 + $0x4] sm:$0xf]
        %v2469 = vld [vmem:[%s2466 + $0x8] sm:$0xf]
        %v2470 = vld [vmem:[%s2466 + $0xc] sm:$0xf]
        %v2471 = vld [vmem:[%s2466 + $0x10] sm:$0xf]
        %v2472 = vld [vmem:[%s2466 + $0x14] sm:$0xf]
        %v2473 = vld [vmem:[%s2466 + $0x18] sm:$0xf]
        %v2474 = vld [vmem:[%s2466 + $0x1c] sm:$0xf]
        %v2475 = vld [vmem:[%s2466 + $0x20] sm:$0xf]
        %v2476 = vld [vmem:[%s2466 + $0x24] sm:$0xf]
        %v2477 = vld [vmem:[%s2466 + $0x28] sm:$0xf]
        %v2478 = vld [vmem:[%s2466 + $0x2c] sm:$0xf]
        %v2479 = vld [vmem:[%s2466 + $0x30] sm:$0xf]
        %v2480 = vld [vmem:[%s2466 + $0x34] sm:$0xf]
        %v2481 = vld [vmem:[%s2466 + $0x38] sm:$0xf]
        %v2482 = vld [vmem:[%s2466 + $0x3c] sm:$0xf]
        %v2483 = vld [vmem:[%s2466 + $0x40] sm:$0xf]
        %v2484 = vld [vmem:[%s2466 + $0x44] sm:$0xf]
        %v2487 = vrot.slane %v2446, 2
        %v2488 = vrot.slane %v2447, 2
        %v2508 = vunpack.c.l.b16 %v2467
        %v2509 = vunpack.c.l.b16 %v2468
        %v2510 = vunpack.c.l.b16 %v2469
        %v2511 = vunpack.c.l.b16 %v2470
        %v2512 = vunpack.c.l.b16 %v2471
        %v2513 = vunpack.c.l.b16 %v2472
        %v2514 = vunpack.c.l.b16 %v2473
        %v2515 = vunpack.c.l.b16 %v2474
        %v2516 = vunpack.c.l.b16 %v2475
        %v2517 = vunpack.c.l.b16 %v2476
        %v2518 = vunpack.c.l.b16 %v2477
        %v2519 = vunpack.c.l.b16 %v2478
        %v2520 = vunpack.c.l.b16 %v2479
        %v2521 = vunpack.c.l.b16 %v2480
        %v2522 = vunpack.c.l.b16 %v2481
        %v2523 = vunpack.c.l.b16 %v2482
        %v2524 = vunpack.c.l.b16 %v2483
        %v2525 = vunpack.c.l.b16 %v2484
        %v2526 = vpack.c.b16 %v2509, %v2508
        %v2527 = vpack.c.b16 %v2511, %v2510
        %v2528 = vpack.c.b16 %v2513, %v2512
        %v2529 = vpack.c.b16 %v2515, %v2514
        %v2530 = vpack.c.b16 %v2517, %v2516
        %v2531 = vpack.c.b16 %v2519, %v2518
        %v2532 = vpack.c.b16 %v2521, %v2520
        %v2533 = vpack.c.b16 %v2523, %v2522
        %v2534 = vpack.c.b16 %v2525, %v2524
        %vm2544 = vcmask 130048
        %v2546 = vsel %vm2544, %v2488, 0
        %2548 = vmatprep.subr.bf16.mxu0 0
        %2549 = vmatpush1.bf16.msra.mxu0 %v2526
        %2550 = vmatprep.subr.bf16.mxu0 0
        %2551 = vmatpush1.bf16.msra.mxu0 %v2527
        %2552 = vmatprep.subr.bf16.mxu0 0
        %2553 = vmatpush1.bf16.msra.mxu0 %v2528
        %2554 = vmatprep.subr.bf16.mxu0 0
        %2555 = vmatpush1.bf16.msra.mxu0 %v2529
        %2556 = vmatprep.subr.bf16.mxu0 0
        %2557 = vmatpush1.bf16.msra.mxu0 %v2530
        %2558 = vmatprep.subr.bf16.mxu0 0
        %2559 = vmatpush1.bf16.msra.mxu0 %v2531
        %2560 = vmatprep.subr.bf16.mxu0 0
        %2561 = vmatpush1.bf16.msra.mxu0 %v2532
        %2562 = vmatprep.subr.bf16.mxu0 0
        %2563 = vmatpush1.bf16.msra.mxu0 %v2533
        %2564 = vmatprep.subr.bf16.mxu0 0
        %2565 = vmatpush1.bf16.msra.mxu0 %v2534
        %2566 = vmatprep.subr.bf16.mxu0 0
        %2567 = vmatpush1.bf16.msra.mxu0 0
        %2568 = vmatprep.subr.bf16.mxu0 0
        %2569 = vmatpush1.bf16.msra.mxu0 0
        %2570 = vmatprep.subr.bf16.mxu0 0
        %2571 = vmatpush1.bf16.msra.mxu0 0
        %2572 = vmatprep.subr.bf16.mxu0 0
        %2573 = vmatpush1.bf16.msra.mxu0 0
        %2574 = vmatprep.subr.bf16.mxu0 0
        %2575 = vmatpush1.bf16.msra.mxu0 0
        %2576 = vmatprep.subr.bf16.mxu0 0
        %2577 = vmatpush1.bf16.msra.mxu0 0
        %2578 = vmatprep.subr.bf16.mxu0 0
        %2579 = vmatpush1.bf16.msra.mxu0 0
        %2580 = vmatprep.mubr.bf16.mxu0 %v2546
        %2581 = vmatmul.mubr.bf16.gmra.mrb[0].mxu0 %v2487
        %v2582 = vpop.f32.mrb[0].mxu0
        %v2583 = vadd.f32 0.0, %v2582
        %v2584 = vpop.f32.mrb[0].mxu0
        %v2585 = vpop.f32.mrb[0].mxu0
        %v2586 = vpop.f32.mrb[0].mxu0
        %2587 = vdwg.mxu0
        %v2606 = vunpack.c.l.b16 %v2448
        %v2607 = vunpack.c.l.b16 %v2449
        %v2608 = vunpack.c.l.b16 %v2450
        %v2609 = vunpack.c.l.b16 %v2451
        %v2610 = vunpack.c.l.b16 %v2452
        %v2611 = vunpack.c.l.b16 %v2453
        %v2612 = vunpack.c.l.b16 %v2454
        %v2613 = vunpack.c.l.b16 %v2455
        %v2614 = vunpack.c.l.b16 %v2456
        %v2615 = vunpack.c.l.b16 %v2457
        %v2616 = vunpack.c.l.b16 %v2458
        %v2617 = vunpack.c.l.b16 %v2459
        %v2618 = vunpack.c.l.b16 %v2460
        %v2619 = vunpack.c.l.b16 %v2461
        %v2620 = vunpack.c.l.b16 %v2462
        %v2621 = vunpack.c.l.b16 %v2463
        %v2622 = vunpack.c.l.b16 %v2464
        %v2623 = vunpack.c.l.b16 %v2465
        %v2624 = vpack.c.b16 %v2607, %v2606
        %v2625 = vpack.c.b16 %v2609, %v2608
        %v2626 = vpack.c.b16 %v2611, %v2610
        %v2627 = vpack.c.b16 %v2613, %v2612
        %v2628 = vpack.c.b16 %v2615, %v2614
        %v2629 = vpack.c.b16 %v2617, %v2616
        %v2630 = vpack.c.b16 %v2619, %v2618
        %v2631 = vpack.c.b16 %v2621, %v2620
        %v2632 = vpack.c.b16 %v2623, %v2622
        %v2643 = vsel %vm2544, %v2447, 0
        %2645 = vmatprep.subr.bf16.mxu0 0
        %2646 = vmatpush1.bf16.msra.mxu0 %v2624
        %2647 = vmatprep.subr.bf16.mxu0 0
        %2648 = vmatpush1.bf16.msra.mxu0 %v2625
        %2649 = vmatprep.subr.bf16.mxu0 0
        %2650 = vmatpush1.bf16.msra.mxu0 %v2626
        %2651 = vmatprep.subr.bf16.mxu0 0
        %2652 = vmatpush1.bf16.msra.mxu0 %v2627
        %2653 = vmatprep.subr.bf16.mxu0 0
        %2654 = vmatpush1.bf16.msra.mxu0 %v2628
        %2655 = vmatprep.subr.bf16.mxu0 0
        %2656 = vmatpush1.bf16.msra.mxu0 %v2629
        %2657 = vmatprep.subr.bf16.mxu0 0
        %2658 = vmatpush1.bf16.msra.mxu0 %v2630
        %2659 = vmatprep.subr.bf16.mxu0 0
        %2660 = vmatpush1.bf16.msra.mxu0 %v2631
        %2661 = vmatprep.subr.bf16.mxu0 0
        %2662 = vmatpush1.bf16.msra.mxu0 %v2632
        %2663 = vmatprep.subr.bf16.mxu0 0
        %2664 = vmatpush1.bf16.msra.mxu0 0
        %2665 = vmatprep.subr.bf16.mxu0 0
        %2666 = vmatpush1.bf16.msra.mxu0 0
        %2667 = vmatprep.subr.bf16.mxu0 0
        %2668 = vmatpush1.bf16.msra.mxu0 0
        %2669 = vmatprep.subr.bf16.mxu0 0
        %2670 = vmatpush1.bf16.msra.mxu0 0
        %2671 = vmatprep.subr.bf16.mxu0 0
        %2672 = vmatpush1.bf16.msra.mxu0 0
        %2673 = vmatprep.subr.bf16.mxu0 0
        %2674 = vmatpush1.bf16.msra.mxu0 0
        %2675 = vmatprep.subr.bf16.mxu0 0
        %2676 = vmatpush1.bf16.msra.mxu0 0
        %2677 = vmatprep.mubr.bf16.mxu0 %v2643
        %2678 = vmatmul.mubr.bf16.gmra.mrb[0].mxu0 %v2446
        %v2679 = vpop.f32.mrb[0].mxu0
        %v2680 = vadd.f32 %v2583, %v2679
        %v2681 = vpop.f32.mrb[0].mxu0
        %v2682 = vpop.f32.mrb[0].mxu0
        %v2683 = vpop.f32.mrb[0].mxu0
        %2684 = vdwg.mxu0
        %v2685 = vpack.c.bf16 %v2442, %v2442
        %v2686 = vpack.c.bf16 %v2443, %v2443
        %s2687 = scalar_lea.vmem %s5, 144
        %v2688 = vld [vmem:[%s2687] sm:$0xf]
        %v2689 = vld [vmem:[%s2687 + $0x4] sm:$0xf]
        %v2690 = vld [vmem:[%s2687 + $0x8] sm:$0xf]
        %v2691 = vld [vmem:[%s2687 + $0xc] sm:$0xf]
        %v2692 = vld [vmem:[%s2687 + $0x10] sm:$0xf]
        %v2693 = vld [vmem:[%s2687 + $0x14] sm:$0xf]
        %v2694 = vld [vmem:[%s2687 + $0x18] sm:$0xf]
        %v2695 = vld [vmem:[%s2687 + $0x1c] sm:$0xf]
        %v2696 = vld [vmem:[%s2687 + $0x20] sm:$0xf]
        %v2697 = vld [vmem:[%s2687 + $0x24] sm:$0xf]
        %v2698 = vld [vmem:[%s2687 + $0x28] sm:$0xf]
        %v2699 = vld [vmem:[%s2687 + $0x2c] sm:$0xf]
        %v2700 = vld [vmem:[%s2687 + $0x30] sm:$0xf]
        %v2701 = vld [vmem:[%s2687 + $0x34] sm:$0xf]
        %v2702 = vld [vmem:[%s2687 + $0x38] sm:$0xf]
        %v2703 = vld [vmem:[%s2687 + $0x3c] sm:$0xf]
        %v2704 = vld [vmem:[%s2687 + $0x40] sm:$0xf]
        %v2705 = vld [vmem:[%s2687 + $0x44] sm:$0xf]
        %v2724 = vunpack.c.l.b16 %v2688
        %v2725 = vunpack.c.l.b16 %v2689
        %v2726 = vunpack.c.l.b16 %v2690
        %v2727 = vunpack.c.l.b16 %v2691
        %v2728 = vunpack.c.l.b16 %v2692
        %v2729 = vunpack.c.l.b16 %v2693
        %v2730 = vunpack.c.l.b16 %v2694
        %v2731 = vunpack.c.l.b16 %v2695
        %v2732 = vunpack.c.l.b16 %v2696
        %v2733 = vunpack.c.l.b16 %v2697
        %v2734 = vunpack.c.l.b16 %v2698
        %v2735 = vunpack.c.l.b16 %v2699
        %v2736 = vunpack.c.l.b16 %v2700
        %v2737 = vunpack.c.l.b16 %v2701
        %v2738 = vunpack.c.l.b16 %v2702
        %v2739 = vunpack.c.l.b16 %v2703
        %v2740 = vunpack.c.l.b16 %v2704
        %v2741 = vunpack.c.l.b16 %v2705
        %v2742 = vpack.c.b16 %v2725, %v2724
        %v2743 = vpack.c.b16 %v2727, %v2726
        %v2744 = vpack.c.b16 %v2729, %v2728
        %v2745 = vpack.c.b16 %v2731, %v2730
        %v2746 = vpack.c.b16 %v2733, %v2732
        %v2747 = vpack.c.b16 %v2735, %v2734
        %v2748 = vpack.c.b16 %v2737, %v2736
        %v2749 = vpack.c.b16 %v2739, %v2738
        %v2750 = vpack.c.b16 %v2741, %v2740
        %v2761 = vsel %vm2544, %v2686, 0
        %2763 = vmatprep.subr.bf16.mxu0 0
        %2764 = vmatpush1.bf16.msra.mxu0 %v2742
        %2765 = vmatprep.subr.bf16.mxu0 0
        %2766 = vmatpush1.bf16.msra.mxu0 %v2743
        %2767 = vmatprep.subr.bf16.mxu0 0
        %2768 = vmatpush1.bf16.msra.mxu0 %v2744
        %2769 = vmatprep.subr.bf16.mxu0 0
        %2770 = vmatpush1.bf16.msra.mxu0 %v2745
        %2771 = vmatprep.subr.bf16.mxu0 0
        %2772 = vmatpush1.bf16.msra.mxu0 %v2746
        %2773 = vmatprep.subr.bf16.mxu0 0
        %2774 = vmatpush1.bf16.msra.mxu0 %v2747
        %2775 = vmatprep.subr.bf16.mxu0 0
        %2776 = vmatpush1.bf16.msra.mxu0 %v2748
        %2777 = vmatprep.subr.bf16.mxu0 0
        %2778 = vmatpush1.bf16.msra.mxu0 %v2749
        %2779 = vmatprep.subr.bf16.mxu0 0
        %2780 = vmatpush1.bf16.msra.mxu0 %v2750
        %2781 = vmatprep.subr.bf16.mxu0 0
        %2782 = vmatpush1.bf16.msra.mxu0 0
        %2783 = vmatprep.subr.bf16.mxu0 0
        %2784 = vmatpush1.bf16.msra.mxu0 0
        %2785 = vmatprep.subr.bf16.mxu0 0
        %2786 = vmatpush1.bf16.msra.mxu0 0
        %2787 = vmatprep.subr.bf16.mxu0 0
        %2788 = vmatpush1.bf16.msra.mxu0 0
        %2789 = vmatprep.subr.bf16.mxu0 0
        %2790 = vmatpush1.bf16.msra.mxu0 0
        %2791 = vmatprep.subr.bf16.mxu0 0
        %2792 = vmatpush1.bf16.msra.mxu0 0
        %2793 = vmatprep.subr.bf16.mxu0 0
        %2794 = vmatpush1.bf16.msra.mxu0 0
        %2795 = vmatprep.mubr.bf16.mxu0 %v2761
        %2796 = vmatmul.mubr.bf16.gmra.mrb[0].mxu0 %v2685
        %v2797 = vpop.f32.mrb[0].mxu0
        %v2798 = vadd.f32 0.0, %v2797
        %v2799 = vpop.f32.mrb[0].mxu0
        %v2800 = vpop.f32.mrb[0].mxu0
        %v2801 = vpop.f32.mrb[0].mxu0
        %2802 = vdwg.mxu0
        %v2803 = vadd.f32 %v2680, %v2798
        %s2804 = scalar_lea.vmem %s5, 216
        %v2805 = vld [vmem:[%s2804] sm:$0xf]
        %v2806 = vld [vmem:[%s2804 + $0x4] sm:$0xf]
        %v2807 = vld [vmem:[%s2804 + $0x8] sm:$0xf]
        %v2808 = vld [vmem:[%s2804 + $0xc] sm:$0xf]
        %v2809 = vld [vmem:[%s2804 + $0x10] sm:$0xf]
        %v2810 = vld [vmem:[%s2804 + $0x14] sm:$0xf]
        %v2811 = vld [vmem:[%s2804 + $0x18] sm:$0xf]
        %v2812 = vld [vmem:[%s2804 + $0x1c] sm:$0xf]
        %v2813 = vld [vmem:[%s2804 + $0x20] sm:$0xf]
        %v2814 = vld [vmem:[%s2804 + $0x24] sm:$0xf]
        %v2815 = vld [vmem:[%s2804 + $0x28] sm:$0xf]
        %v2816 = vld [vmem:[%s2804 + $0x2c] sm:$0xf]
        %v2817 = vld [vmem:[%s2804 + $0x30] sm:$0xf]
        %v2818 = vld [vmem:[%s2804 + $0x34] sm:$0xf]
        %v2819 = vld [vmem:[%s2804 + $0x38] sm:$0xf]
        %v2820 = vld [vmem:[%s2804 + $0x3c] sm:$0xf]
        %v2821 = vld [vmem:[%s2804 + $0x40] sm:$0xf]
        %v2822 = vld [vmem:[%s2804 + $0x44] sm:$0xf]
        %v2825 = vrot.slane %v2685, 2
        %v2826 = vrot.slane %v2686, 2
        %v2846 = vunpack.c.l.b16 %v2805
        %v2847 = vunpack.c.l.b16 %v2806
        %v2848 = vunpack.c.l.b16 %v2807
        %v2849 = vunpack.c.l.b16 %v2808
        %v2850 = vunpack.c.l.b16 %v2809
        %v2851 = vunpack.c.l.b16 %v2810
        %v2852 = vunpack.c.l.b16 %v2811
        %v2853 = vunpack.c.l.b16 %v2812
        %v2854 = vunpack.c.l.b16 %v2813
        %v2855 = vunpack.c.l.b16 %v2814
        %v2856 = vunpack.c.l.b16 %v2815
        %v2857 = vunpack.c.l.b16 %v2816
        %v2858 = vunpack.c.l.b16 %v2817
        %v2859 = vunpack.c.l.b16 %v2818
        %v2860 = vunpack.c.l.b16 %v2819
        %v2861 = vunpack.c.l.b16 %v2820
        %v2862 = vunpack.c.l.b16 %v2821
        %v2863 = vunpack.c.l.b16 %v2822
        %v2864 = vpack.c.b16 %v2847, %v2846
        %v2865 = vpack.c.b16 %v2849, %v2848
        %v2866 = vpack.c.b16 %v2851, %v2850
        %v2867 = vpack.c.b16 %v2853, %v2852
        %v2868 = vpack.c.b16 %v2855, %v2854
        %v2869 = vpack.c.b16 %v2857, %v2856
        %v2870 = vpack.c.b16 %v2859, %v2858
        %v2871 = vpack.c.b16 %v2861, %v2860
        %v2872 = vpack.c.b16 %v2863, %v2862
        %v2883 = vsel %vm2544, %v2826, 0
        %2885 = vmatprep.subr.bf16.mxu0 0
        %2886 = vmatpush1.bf16.msra.mxu0 %v2864
        %2887 = vmatprep.subr.bf16.mxu0 0
        %2888 = vmatpush1.bf16.msra.mxu0 %v2865
        %2889 = vmatprep.subr.bf16.mxu0 0
        %2890 = vmatpush1.bf16.msra.mxu0 %v2866
        %2891 = vmatprep.subr.bf16.mxu0 0
        %2892 = vmatpush1.bf16.msra.mxu0 %v2867
        %2893 = vmatprep.subr.bf16.mxu0 0
        %2894 = vmatpush1.bf16.msra.mxu0 %v2868
        %2895 = vmatprep.subr.bf16.mxu0 0
        %2896 = vmatpush1.bf16.msra.mxu0 %v2869
        %2897 = vmatprep.subr.bf16.mxu0 0
        %2898 = vmatpush1.bf16.msra.mxu0 %v2870
        %2899 = vmatprep.subr.bf16.mxu0 0
        %2900 = vmatpush1.bf16.msra.mxu0 %v2871
        %2901 = vmatprep.subr.bf16.mxu0 0
        %2902 = vmatpush1.bf16.msra.mxu0 %v2872
        %2903 = vmatprep.subr.bf16.mxu0 0
        %2904 = vmatpush1.bf16.msra.mxu0 0
        %2905 = vmatprep.subr.bf16.mxu0 0
        %2906 = vmatpush1.bf16.msra.mxu0 0
        %2907 = vmatprep.subr.bf16.mxu0 0
        %2908 = vmatpush1.bf16.msra.mxu0 0
        %2909 = vmatprep.subr.bf16.mxu0 0
        %2910 = vmatpush1.bf16.msra.mxu0 0
        %2911 = vmatprep.subr.bf16.mxu0 0
        %2912 = vmatpush1.bf16.msra.mxu0 0
        %2913 = vmatprep.subr.bf16.mxu0 0
        %2914 = vmatpush1.bf16.msra.mxu0 0
        %2915 = vmatprep.subr.bf16.mxu0 0
        %2916 = vmatpush1.bf16.msra.mxu0 0
        %2917 = vmatprep.mubr.bf16.mxu0 %v2883
        %2918 = vmatmul.mubr.bf16.gmra.mrb[0].mxu0 %v2825
        %v2919 = vpop.f32.mrb[0].mxu0
        %v2920 = vadd.f32 0.0, %v2919
        %v2921 = vpop.f32.mrb[0].mxu0
        %v2922 = vpop.f32.mrb[0].mxu0
        %v2923 = vpop.f32.mrb[0].mxu0
        %2924 = vdwg.mxu0
        %v2925 = vadd.f32 %v2803, %v2920
        %v2926 = vpack.c.bf16 %v2444, %v2444
        %v2927 = vpack.c.bf16 %v2445, %v2445
        %s2928 = scalar_lea.vmem %s5, 288
        %v2929 = vld [vmem:[%s2928] sm:$0xf]
        %v2930 = vld [vmem:[%s2928 + $0x4] sm:$0xf]
        %v2931 = vld [vmem:[%s2928 + $0x8] sm:$0xf]
        %v2932 = vld [vmem:[%s2928 + $0xc] sm:$0xf]
        %v2933 = vld [vmem:[%s2928 + $0x10] sm:$0xf]
        %v2934 = vld [vmem:[%s2928 + $0x14] sm:$0xf]
        %v2935 = vld [vmem:[%s2928 + $0x18] sm:$0xf]
        %v2936 = vld [vmem:[%s2928 + $0x1c] sm:$0xf]
        %v2937 = vld [vmem:[%s2928 + $0x20] sm:$0xf]
        %v2938 = vld [vmem:[%s2928 + $0x24] sm:$0xf]
        %v2939 = vld [vmem:[%s2928 + $0x28] sm:$0xf]
        %v2940 = vld [vmem:[%s2928 + $0x2c] sm:$0xf]
        %v2941 = vld [vmem:[%s2928 + $0x30] sm:$0xf]
        %v2942 = vld [vmem:[%s2928 + $0x34] sm:$0xf]
        %v2943 = vld [vmem:[%s2928 + $0x38] sm:$0xf]
        %v2944 = vld [vmem:[%s2928 + $0x3c] sm:$0xf]
        %v2945 = vld [vmem:[%s2928 + $0x40] sm:$0xf]
        %v2946 = vld [vmem:[%s2928 + $0x44] sm:$0xf]
        %v2965 = vunpack.c.l.b16 %v2929
        %v2966 = vunpack.c.l.b16 %v2930
        %v2967 = vunpack.c.l.b16 %v2931
        %v2968 = vunpack.c.l.b16 %v2932
        %v2969 = vunpack.c.l.b16 %v2933
        %v2970 = vunpack.c.l.b16 %v2934
        %v2971 = vunpack.c.l.b16 %v2935
        %v2972 = vunpack.c.l.b16 %v2936
        %v2973 = vunpack.c.l.b16 %v2937
        %v2974 = vunpack.c.l.b16 %v2938
        %v2975 = vunpack.c.l.b16 %v2939
        %v2976 = vunpack.c.l.b16 %v2940
        %v2977 = vunpack.c.l.b16 %v2941
        %v2978 = vunpack.c.l.b16 %v2942
        %v2979 = vunpack.c.l.b16 %v2943
        %v2980 = vunpack.c.l.b16 %v2944
        %v2981 = vunpack.c.l.b16 %v2945
        %v2982 = vunpack.c.l.b16 %v2946
        %v2983 = vpack.c.b16 %v2966, %v2965
        %v2984 = vpack.c.b16 %v2968, %v2967
        %v2985 = vpack.c.b16 %v2970, %v2969
        %v2986 = vpack.c.b16 %v2972, %v2971
        %v2987 = vpack.c.b16 %v2974, %v2973
        %v2988 = vpack.c.b16 %v2976, %v2975
        %v2989 = vpack.c.b16 %v2978, %v2977
        %v2990 = vpack.c.b16 %v2980, %v2979
        %v2991 = vpack.c.b16 %v2982, %v2981
        %v3002 = vsel %vm2544, %v2927, 0
        %3004 = vmatprep.subr.bf16.mxu0 0
        %3005 = vmatpush1.bf16.msra.mxu0 %v2983
        %3006 = vmatprep.subr.bf16.mxu0 0
        %3007 = vmatpush1.bf16.msra.mxu0 %v2984
        %3008 = vmatprep.subr.bf16.mxu0 0
        %3009 = vmatpush1.bf16.msra.mxu0 %v2985
        %3010 = vmatprep.subr.bf16.mxu0 0
        %3011 = vmatpush1.bf16.msra.mxu0 %v2986
        %3012 = vmatprep.subr.bf16.mxu0 0
        %3013 = vmatpush1.bf16.msra.mxu0 %v2987
        %3014 = vmatprep.subr.bf16.mxu0 0
        %3015 = vmatpush1.bf16.msra.mxu0 %v2988
        %3016 = vmatprep.subr.bf16.mxu0 0
        %3017 = vmatpush1.bf16.msra.mxu0 %v2989
        %3018 = vmatprep.subr.bf16.mxu0 0
        %3019 = vmatpush1.bf16.msra.mxu0 %v2990
        %3020 = vmatprep.subr.bf16.mxu0 0
        %3021 = vmatpush1.bf16.msra.mxu0 %v2991
        %3022 = vmatprep.subr.bf16.mxu0 0
        %3023 = vmatpush1.bf16.msra.mxu0 0
        %3024 = vmatprep.subr.bf16.mxu0 0
        %3025 = vmatpush1.bf16.msra.mxu0 0
        %3026 = vmatprep.subr.bf16.mxu0 0
        %3027 = vmatpush1.bf16.msra.mxu0 0
        %3028 = vmatprep.subr.bf16.mxu0 0
        %3029 = vmatpush1.bf16.msra.mxu0 0
        %3030 = vmatprep.subr.bf16.mxu0 0
        %3031 = vmatpush1.bf16.msra.mxu0 0
        %3032 = vmatprep.subr.bf16.mxu0 0
        %3033 = vmatpush1.bf16.msra.mxu0 0
        %3034 = vmatprep.subr.bf16.mxu0 0
        %3035 = vmatpush1.bf16.msra.mxu0 0
        %3036 = vmatprep.mubr.bf16.mxu0 %v3002
        %3037 = vmatmul.mubr.bf16.gmra.mrb[0].mxu0 %v2926
        %v3038 = vpop.f32.mrb[0].mxu0
        %v3039 = vadd.f32 0.0, %v3038
        %v3040 = vpop.f32.mrb[0].mxu0
        %v3041 = vpop.f32.mrb[0].mxu0
        %v3042 = vpop.f32.mrb[0].mxu0
        %3043 = vdwg.mxu0
        %v3044 = vadd.f32 %v2925, %v3039
        %v3045 = vld [vmem:[%s6] sm:$0x1]
        %v3046 = vadd.f32 %v3044, %v3045
        %v3047 = vmax.f32 %v3046, 0.0
        %v3048 = vpack.c.bf16 %v3047, %v3047
        %v3049 = vld [vmem:[%s7] sm:$0xf]
        %v3050 = vld [vmem:[%s7 + $0x4] sm:$0xf]
        %v3051 = vld [vmem:[%s7 + $0x8] sm:$0xf]
        %v3052 = vld [vmem:[%s7 + $0xc] sm:$0xf]
        %v3053 = vld [vmem:[%s7 + $0x10] sm:$0xf]
        %v3054 = vld [vmem:[%s7 + $0x14] sm:$0xf]
        %v3055 = vld [vmem:[%s7 + $0x18] sm:$0xf]
        %v3056 = vld [vmem:[%s7 + $0x1c] sm:$0xf]
        %v3057 = vld [vmem:[%s7 + $0x20] sm:$0xf]
        %v3058 = vld [vmem:[%s7 + $0x24] sm:$0xf]
        %v3059 = vld [vmem:[%s7 + $0x28] sm:$0xf]
        %v3060 = vld [vmem:[%s7 + $0x2c] sm:$0xf]
        %v3061 = vld [vmem:[%s7 + $0x30] sm:$0xf]
        %v3062 = vld [vmem:[%s7 + $0x34] sm:$0xf]
        %v3063 = vld [vmem:[%s7 + $0x38] sm:$0xf]
        %v3064 = vld [vmem:[%s8] sm:$0x1]
        %v3080 = vunpack.c.l.b16 %v3049
        %v3081 = vunpack.c.l.b16 %v3050
        %v3082 = vunpack.c.l.b16 %v3051
        %v3083 = vunpack.c.l.b16 %v3052
        %v3084 = vunpack.c.l.b16 %v3053
        %v3085 = vunpack.c.l.b16 %v3054
        %v3086 = vunpack.c.l.b16 %v3055
        %v3087 = vunpack.c.l.b16 %v3056
        %v3088 = vunpack.c.l.b16 %v3057
        %v3089 = vunpack.c.l.b16 %v3058
        %v3090 = vunpack.c.l.b16 %v3059
        %v3091 = vunpack.c.l.b16 %v3060
        %v3092 = vunpack.c.l.b16 %v3061
        %v3093 = vunpack.c.l.b16 %v3062
        %v3094 = vunpack.c.l.b16 %v3063
        %v3095 = vpack.c.b16 %v3081, %v3080
        %v3096 = vpack.c.b16 %v3083, %v3082
        %v3097 = vpack.c.b16 %v3085, %v3084
        %v3098 = vpack.c.b16 %v3087, %v3086
        %v3099 = vpack.c.b16 %v3089, %v3088
        %v3100 = vpack.c.b16 %v3091, %v3090
        %v3101 = vpack.c.b16 %v3093, %v3092
        %v3102 = vpack.c.b16 %v3094, %v3094
        %vm3110 = vcmask 982016
        %v3112 = vsel %vm3110, %v3048, 0
        %v3115 = vsel %vm1206, %v3102, 0
        %3117 = vmatprep.subr.bf16.mxu0 0
        %3118 = vmatpush1.bf16.msra.mxu0 %v3095
        %3119 = vmatprep.subr.bf16.mxu0 0
        %3120 = vmatpush1.bf16.msra.mxu0 %v3096
        %3121 = vmatprep.subr.bf16.mxu0 0
        %3122 = vmatpush1.bf16.msra.mxu0 %v3097
        %3123 = vmatprep.subr.bf16.mxu0 0
        %3124 = vmatpush1.bf16.msra.mxu0 %v3098
        %3125 = vmatprep.subr.bf16.mxu0 0
        %3126 = vmatpush1.bf16.msra.mxu0 %v3099
        %3127 = vmatprep.subr.bf16.mxu0 0
        %3128 = vmatpush1.bf16.msra.mxu0 %v3100
        %3129 = vmatprep.subr.bf16.mxu0 0
        %3130 = vmatpush1.bf16.msra.mxu0 %v3101
        %3131 = vmatprep.subr.bf16.mxu0 0
        %3132 = vmatpush1.bf16.msra.mxu0 %v3115
        %3133 = vmatprep.subr.bf16.mxu0 0
        %3134 = vmatpush1.bf16.msra.mxu0 0
        %3135 = vmatprep.subr.bf16.mxu0 0
        %3136 = vmatpush1.bf16.msra.mxu0 0
        %3137 = vmatprep.subr.bf16.mxu0 0
        %3138 = vmatpush1.bf16.msra.mxu0 0
        %3139 = vmatprep.subr.bf16.mxu0 0
        %3140 = vmatpush1.bf16.msra.mxu0 0
        %3141 = vmatprep.subr.bf16.mxu0 0
        %3142 = vmatpush1.bf16.msra.mxu0 0
        %3143 = vmatprep.subr.bf16.mxu0 0
        %3144 = vmatpush1.bf16.msra.mxu0 0
        %3145 = vmatprep.subr.bf16.mxu0 0
        %3146 = vmatpush1.bf16.msra.mxu0 0
        %3147 = vmatprep.subr.bf16.mxu0 0
        %3148 = vmatpush1.bf16.msra.mxu0 0
        %3149 = vmatprep.mubr.bf16.mxu0 0
        %3150 = vmatmul.mubr.bf16.gmra.mrb[0].mxu0 %v3112
        %v3151 = vpop.f32.mrb[0].mxu0
        %v3152 = vadd.f32 %v3064, %v3151
        %v3153 = vpop.f32.mrb[0].mxu0
        %v3154 = vpop.f32.mrb[0].mxu0
        %v3155 = vpop.f32.mrb[0].mxu0
        %3156 = vdwg.mxu0
        %v3157 = vmax.f32 %v3152, 0.0
        %v3158 = vpack.c.bf16 %v3157, %v3157
        %v3159 = vld [vmem:[%s9] sm:$0xf]
        %v3160 = vld [vmem:[%s9 + $0x4] sm:$0xf]
        %v3161 = vld [vmem:[%s9 + $0x8] sm:$0xf]
        %v3162 = vld [vmem:[%s9 + $0xc] sm:$0xf]
        %v3163 = vld [vmem:[%s9 + $0x10] sm:$0xf]
        %v3164 = vld [vmem:[%s9 + $0x14] sm:$0xf]
        %v3165 = vld [vmem:[%s9 + $0x18] sm:$0xf]
        %v3166 = vld [vmem:[%s9 + $0x1c] sm:$0xf]
        %v3167 = vld [vmem:[%s9 + $0x20] sm:$0xf]
        %v3168 = vld [vmem:[%s9 + $0x24] sm:$0xf]
        %v3169 = vld [vmem:[%s9 + $0x28] sm:$0x3]
        %v3170 = vld [vmem:[%s10] sm:$0x1]
        %v3182 = vunpack.c.l.b16 %v3159
        %v3183 = vunpack.c.l.b16 %v3160
        %v3184 = vunpack.c.l.b16 %v3161
        %v3185 = vunpack.c.l.b16 %v3162
        %v3186 = vunpack.c.l.b16 %v3163
        %v3187 = vunpack.c.l.b16 %v3164
        %v3188 = vunpack.c.l.b16 %v3165
        %v3189 = vunpack.c.l.b16 %v3166
        %v3190 = vunpack.c.l.b16 %v3167
        %v3191 = vunpack.c.l.b16 %v3168
        %v3192 = vunpack.c.l.b16 %v3169
        %v3193 = vpack.c.b16 %v3183, %v3182
        %v3194 = vpack.c.b16 %v3185, %v3184
        %v3195 = vpack.c.b16 %v3187, %v3186
        %v3196 = vpack.c.b16 %v3189, %v3188
        %v3197 = vpack.c.b16 %v3191, %v3190
        %v3198 = vpack.c.b16 %v3192, %v3192
        %vm3204 = vcmask 687104
        %v3206 = vsel %vm3204, %v3158, 0
        %vm3208 = vcmask 1041408
        %v3210 = vsel %vm3208, %v3198, 0
        %3212 = vmatprep.subr.bf16.mxu0 0
        %3213 = vmatpush1.bf16.msra.mxu0 %v3193
        %3214 = vmatprep.subr.bf16.mxu0 0
        %3215 = vmatpush1.bf16.msra.mxu0 %v3194
        %3216 = vmatprep.subr.bf16.mxu0 0
        %3217 = vmatpush1.bf16.msra.mxu0 %v3195
        %3218 = vmatprep.subr.bf16.mxu0 0
        %3219 = vmatpush1.bf16.msra.mxu0 %v3196
        %3220 = vmatprep.subr.bf16.mxu0 0
        %3221 = vmatpush1.bf16.msra.mxu0 %v3197
        %3222 = vmatprep.subr.bf16.mxu0 0
        %3223 = vmatpush1.bf16.msra.mxu0 %v3210
        %3224 = vmatprep.subr.bf16.mxu0 0
        %3225 = vmatpush1.bf16.msra.mxu0 0
        %3226 = vmatprep.subr.bf16.mxu0 0
        %3227 = vmatpush1.bf16.msra.mxu0 0
        %3228 = vmatprep.subr.bf16.mxu0 0
        %3229 = vmatpush1.bf16.msra.mxu0 0
        %3230 = vmatprep.subr.bf16.mxu0 0
        %3231 = vmatpush1.bf16.msra.mxu0 0
        %3232 = vmatprep.subr.bf16.mxu0 0
        %3233 = vmatpush1.bf16.msra.mxu0 0
        %3234 = vmatprep.subr.bf16.mxu0 0
        %3235 = vmatpush1.bf16.msra.mxu0 0
        %3236 = vmatprep.subr.bf16.mxu0 0
        %3237 = vmatpush1.bf16.msra.mxu0 0
        %3238 = vmatprep.subr.bf16.mxu0 0
        %3239 = vmatpush1.bf16.msra.mxu0 0
        %3240 = vmatprep.subr.bf16.mxu0 0
        %3241 = vmatpush1.bf16.msra.mxu0 0
        %3242 = vmatprep.subr.bf16.mxu0 0
        %3243 = vmatpush1.bf16.msra.mxu0 0
        %3244 = vmatprep.mubr.bf16.mxu0 0
        %3245 = vmatmul.mubr.bf16.gmra.mrb[0].mxu0 %v3206
        %v3246 = vpop.f32.mrb[0].mxu0
        %v3247 = vadd.f32 %v3170, %v3246
        %v3248 = vpop.f32.mrb[0].mxu0
        %v3249 = vpop.f32.mrb[0].mxu0
        %v3250 = vpop.f32.mrb[0].mxu0
        %3251 = vdwg.mxu0
        %v3252 = vmax.f32 %v3247, 0.0
        %v3253 = vpack.c.bf16 %v3252, %v3252
        %v3254 = vld [vmem:[%s11] sm:$0xf]
        %v3255 = vld [vmem:[%s11 + $0x4] sm:$0xf]
        %v3256 = vld [vmem:[%s11 + $0x8] sm:$0x3]
        %v3257 = vld [vmem:[%s12] sm:$0x1]
        %v3261 = vunpack.c.l.b16 %v3254
        %v3262 = vunpack.c.l.b16 %v3255
        %v3263 = vunpack.c.l.b16 %v3256
        %v3264 = vpack.c.b16 %v3262, %v3261
        %v3265 = vpack.c.b16 %v3263, %v3263
        %vm3267 = vcmask 162816
        %v3269 = vsel %vm3267, %v3253, 0
        %v3272 = vsel %vm3208, %v3265, 0
        %3274 = vmatprep.subr.bf16.mxu0 0
        %3275 = vmatpush1.bf16.msra.mxu0 %v3264
        %3276 = vmatprep.subr.bf16.mxu0 0
        %3277 = vmatpush1.bf16.msra.mxu0 %v3272
        %3278 = vmatprep.subr.bf16.mxu0 0
        %3279 = vmatpush1.bf16.msra.mxu0 0
        %3280 = vmatprep.subr.bf16.mxu0 0
        %3281 = vmatpush1.bf16.msra.mxu0 0
        %3282 = vmatprep.subr.bf16.mxu0 0
        %3283 = vmatpush1.bf16.msra.mxu0 0
        %3284 = vmatprep.subr.bf16.mxu0 0
        %3285 = vmatpush1.bf16.msra.mxu0 0
        %3286 = vmatprep.subr.bf16.mxu0 0
        %3287 = vmatpush1.bf16.msra.mxu0 0
        %3288 = vmatprep.subr.bf16.mxu0 0
        %3289 = vmatpush1.bf16.msra.mxu0 0
        %3290 = vmatprep.subr.bf16.mxu0 0
        %3291 = vmatpush1.bf16.msra.mxu0 0
        %3292 = vmatprep.subr.bf16.mxu0 0
        %3293 = vmatpush1.bf16.msra.mxu0 0
        %3294 = vmatprep.subr.bf16.mxu0 0
        %3295 = vmatpush1.bf16.msra.mxu0 0
        %3296 = vmatprep.subr.bf16.mxu0 0
        %3297 = vmatpush1.bf16.msra.mxu0 0
        %3298 = vmatprep.subr.bf16.mxu0 0
        %3299 = vmatpush1.bf16.msra.mxu0 0
        %3300 = vmatprep.subr.bf16.mxu0 0
        %3301 = vmatpush1.bf16.msra.mxu0 0
        %3302 = vmatprep.subr.bf16.mxu0 0
        %3303 = vmatpush1.bf16.msra.mxu0 0
        %3304 = vmatprep.subr.bf16.mxu0 0
        %3305 = vmatpush1.bf16.msra.mxu0 0
        %3306 = vmatprep.mubr.bf16.mxu0 0
        %3307 = vmatmul.mubr.bf16.gmra.mrb[0].mxu0 %v3269
        %v3308 = vpop.f32.mrb[0].mxu0
        %v3309 = vadd.f32 %v3257, %v3308
        %v3310 = vpop.f32.mrb[0].mxu0
        %v3311 = vpop.f32.mrb[0].mxu0
        %v3312 = vpop.f32.mrb[0].mxu0
        %3313 = vdwg.mxu0
        %vm3314 = vcmask 73728
        %v3315 = vsel %vm3314, %v3309, -inf
        %3316 = vmax.xlane.f32.xlu0 %v3315
        %v3317 = vpop.xlane.xlu0 %3316
        %v3318 = vsub.f32 %v3309, %v3317
        %v3319 = vmul.f32 %v3318, 1.442695
        %v3320 = vpow.pop %v3319
        %v3321 = vsel %vm3314, %v3320, 0.0
        %3322 = vadd.xlane.f32.xlu0 %v3321
        %v3323 = vpop.xlane.xlu0 %3322
        %v3324 = vlog2.pop %v3323
        %v3325 = vmul.f32 %v3324, 0.6931472
        %v3326 = vsub.f32 %v3318, %v3325
        %3327 = vst.msk [vmem:[%s432] sm:$0x1] %vm3314, %v3326
        %s3328 = sand.u32 %s313, 1
        %s3329 = scalar_lea.sflag [#allocation3], %s3328
        %s3330 = sand.u32 %s313, 1
        %s3331 = scalar_lea.vmem [#allocation2], %s3330
        // Predicated region
        $region73: #{cifar10_forward.1} parent=71 // pred_check
          %p3332 = pneg %p323
        $region74: #{cifar10_forward.1} parent=71 // pred_check_branch
          %3334 = sbr.rel (%p3332) target = $region76
        $region75: #{cifar10_forward.1} parent=71 // pred_region
          %s3336 = ssub.s32 16, 16
          %3337 = vsyncadd %s3329, %s3336
          %s3338 = smul.addr %s27, 16
          %s3339 = scalar_lea.hbm %s13, %s3338
          %s3341 = sshll.u32 %s3331, 4
          %s3342 = int_to_ptr.vmem [resolvable:$true] %s3341
          %3344 = dma.vmem_to_hbm [thread:$0]  %s3342, 16, %s3339, %s3329
        $region76: #{cifar10_forward.1} parent=71 // pred_fallthru
          _
      $region72: #{cifar10_forward.1} parent=5 // pred_fallthru
        _
      %p3345 = scmp.le.s32.totalorder 2, %s22
      // Predicated region
      $region77: #{cifar10_forward.1} parent=5 // pred_check
        %p3346 = pneg %p3345
      $region78: #{cifar10_forward.1} parent=5 // pred_check_branch
        %3348 = sbr.rel (%p3346) target = $region80
      $region79: #{cifar10_forward.1} parent=5 // pred_region
        %s3349 = ssub.s32 %s22, 2
        // Predicated region
        $region81: #{cifar10_forward.1} parent=79 // pred_check
          %p3350 = pneg %p329
        $region82: #{cifar10_forward.1} parent=79 // pred_check_branch
          %3352 = sbr.rel (%p3350) target = $region84
        $region83: #{cifar10_forward.1} parent=79 // pred_region
          %s3353 = sand.u32 %s314, 1
          %s3354 = scalar_lea.sflag [#allocation3], %s3353
          %s3355 = sand.u32 %s314, 1
          %s3356 = scalar_lea.vmem [#allocation2], %s3355
          %3357 = dma.done %s3354, 16
        $region84: #{cifar10_forward.1} parent=79 // pred_fallthru
          _
      $region80: #{cifar10_forward.1} parent=5 // pred_fallthru
        _
    $region6: #{cifar10_forward.1} parent=1 // loop_footer
      %s26 = sadd.s32 1, %s22
    $region7: #{cifar10_forward.1} parent=1 // loop_footer_branch
      %21 = sbr.rel target = $region3
    $region8: #{cifar10_forward.1} parent=1 // loop_exit
      _
    %3358 = vsyncpa [#allocation3], 1
    %s3359 = scalar_lea.sflag [#allocation3], 1
    %3360 = vsyncpa %s3359, 1

</llo_original>
